<compile_context>
chip_gen: v7x
topology: tpu7x:2x2x1
jax: 0.10.0
libtpu: 0.0.40
codegen_flags: <defaults>
</compile_context>

<pallas_src>
import functools
import math

import jax
import jax.numpy as jnp
from jax import lax
from jax.experimental import pallas as pl
from jax.experimental.pallas import tpu as pltpu

EPS = float(jnp.finfo(jnp.float32).eps)  # torch.finfo(torch.float32).eps (module default)


def _round_up(n, m):
    return ((n + m - 1) // m) * m


# ----------------------------------------------------------------------------
# Fused BSNet kernel
# ----------------------------------------------------------------------------
def bsnet_kernel(x1_ref,
                 g1_ref, b1_ref, wih1_ref, whh1_ref, bias1_ref, wp1_ref, bp1_ref,
                 g2_ref, b2_ref, wih2_ref, whh2_ref, bias2_ref, wp2_ref, bp2_ref,
                 o_ref, *, B, nb, T, C, P1, P2):
    f32 = jnp.float32
    H = 2 * C
    S1, S2 = T, nb

    # ================= stage 1: band_rnn (uni-directional ResRNN over time) ==
    x1 = x1_ref[...]                                        # (S1, P1, C)

    # GroupNorm(1): per sample p1 over (S1, C) (biased variance)
    m1 = jnp.mean(x1, axis=2, keepdims=True)                # (S1, P1, 1)
    m1 = jnp.mean(m1, axis=0, keepdims=True)                # (1,  P1, 1)
    v1 = jnp.mean((x1 - m1) ** 2, axis=2, keepdims=True)
    v1 = jnp.mean(v1, axis=0, keepdims=True)
    xn1 = (x1 - m1) * lax.rsqrt(v1 + EPS)
    xn1 = xn1 * g1_ref[...][None] + b1_ref[...][None]       # (S1, P1, C)

    # Hoisted input-to-hidden projection: one matmul for all timesteps.
    xn1_2d = xn1.reshape(S1 * P1, C)
    gates1 = jnp.dot(xn1_2d, wih1_ref[...],
                     preferred_element_type=f32) + bias1_ref[...]   # (S1*P1, 4H)

    whh1 = whh1_ref[...]                                    # (H, 4H)
    h = jnp.zeros((P1, H), f32)
    c = jnp.zeros((P1, H), f32)
    hs1 = []
    for t in range(S1):
        g_all = gates1[t * P1:(t + 1) * P1, :] + jnp.dot(
            h, whh1, preferred_element_type=f32)            # (P1, 4H)
        sg = jax.nn.sigmoid(g_all)                          # full-width activations
        tg = jnp.tanh(g_all)
        i = sg[:, 0:H]
        f = sg[:, H:2 * H]
        gg = tg[:, 2 * H:3 * H]
        o = sg[:, 3 * H:4 * H]
        c = f * c + i * gg
        h = o * jnp.tanh(c)
        hs1.append(h)

    HS1 = jnp.concatenate(hs1, axis=0)                      # (S1*P1, H)
    proj1 = jnp.dot(HS1, wp1_ref[...],
                    preferred_element_type=f32) + bp1_ref[...]      # (S1*P1, C)
    y1 = x1 + proj1.reshape(S1, P1, C)                      # residual, (S1, P1, C)

    # ============== layout shuffle: (t, b*nb+n, c) -> (n, b*T+t, c) ==========
    pieces = []
    for n in range(nb):
        for b in range(B):
            pieces.append(y1[:, b * nb + n, :])             # (T, C)
        if P2 > B * T:
            pieces.append(jnp.zeros((P2 - B * T, C), f32))  # per-band padding
    x2_2d = jnp.concatenate(pieces, axis=0)                 # (S2*P2, C)

    # ============== stage 2: band_comm (bi-directional ResRNN over bands) ====
    x2 = x2_2d.reshape(S2, P2, C)
    m2 = jnp.mean(x2, axis=2, keepdims=True)
    m2 = jnp.mean(m2, axis=0, keepdims=True)                # (1, P2, 1)
    v2 = jnp.mean((x2 - m2) ** 2, axis=2, keepdims=True)
    v2 = jnp.mean(v2, axis=0, keepdims=True)
    xn2 = (x2 - m2) * lax.rsqrt(v2 + EPS)
    xn2 = xn2 * g2_ref[...][None] + b2_ref[...][None]
    xn2_2d = xn2.reshape(S2 * P2, C)

    # Band-reversed copy of the (small, C-wide) normalized input; row blocks are
    # P2-aligned (multiple of 8) so these are tile-aligned copies.
    xn2_rev = jnp.concatenate(
        [xn2_2d[(S2 - 1 - s) * P2:(S2 - s) * P2, :] for s in range(S2)], axis=0)
    xcat = jnp.concatenate([xn2_2d, xn2_rev], axis=1)       # (S2*P2, 2C)

    # One hoisted input-gate matmul for BOTH directions.  wih2 is pre-packed
    # (2C, 8H): rows 0:C feed the fwd gate slots (from band s), rows C:2C feed the
    # bwd gate slots (from band S2-1-s), with gate blocks already interleaved
    # [i_f,i_b,f_f,f_b,g_f,g_b,o_f,o_b]; bias2 matches that ordering.
    GX = jnp.dot(xcat, wih2_ref[...],
                 preferred_element_type=f32) + bias2_ref[...]       # (S2*P2, 8H)

    whh2 = whh2_ref[...]                                    # (2H, 8H) packed block-diag
    h2 = jnp.zeros((P2, 2 * H), f32)                        # [h_f | h_b]
    c2 = jnp.zeros((P2, 2 * H), f32)
    hs2 = []
    for s in range(S2):
        g_all = GX[s * P2:(s + 1) * P2, :] + jnp.dot(
            h2, whh2, preferred_element_type=f32)           # (P2, 8H)
        sg = jax.nn.sigmoid(g_all)
        tg = jnp.tanh(g_all)
        i = sg[:, 0:2 * H]
        f = sg[:, 2 * H:4 * H]
        gg = tg[:, 4 * H:6 * H]
        o = sg[:, 6 * H:8 * H]
        c2 = f * c2 + i * gg
        h2 = o * jnp.tanh(c2)
        hs2.append(h2)                                      # full state, no per-step slicing

    H2 = jnp.concatenate(hs2, axis=0)                       # (S2*P2, 2H)
    # Packed projection (2H, 2C): cols 0:C = fwd proj of h_f (band order s),
    # cols C:2C = bwd proj of h_b (band order S2-1-s, reversed below).
    PB = jnp.dot(H2, wp2_ref[...], preferred_element_type=f32)      # (S2*P2, 2C)
    proj_b = jnp.concatenate(
        [PB[(S2 - 1 - s) * P2:(S2 - s) * P2, C:2 * C] for s in range(S2)], axis=0)
    proj2 = PB[:, 0:C] + proj_b + bp2_ref[...]              # (S2*P2, C)

    o_ref[...] = x2_2d + proj2                              # residual, (S2*P2, C)


# ----------------------------------------------------------------------------
# Wrapper: layout prep in XLA, one pallas_call, layout restore in XLA
# ----------------------------------------------------------------------------
def bsnet_forward(x, k1, k2, nb, C):
    B, N, T = x.shape
    assert N == nb * C
    P1 = _round_up(B * nb, 8)
    P2 = _round_up(B * T, 8)

    # stage-1 time-major layout (T, B*nb, C), zero-padded samples -> (T, P1, C)
    x1 = jnp.transpose(x.reshape(B, nb, C, T), (3, 0, 1, 2)).reshape(T, B * nb, C)
    if P1 > B * nb:
        x1 = jnp.pad(x1, ((0, 0), (0, P1 - B * nb), (0, 0)))

    kernel = functools.partial(bsnet_kernel, B=B, nb=nb, T=T, C=C, P1=P1, P2=P2)

    full2 = lambda i: (0, 0)
    full3 = lambda i: (0, 0, 0)

    in_specs = [pl.BlockSpec((T, P1, C), full3)]
    args = [x1]
    for kd in (k1, k2):
        for name in ('g', 'b', 'wih', 'whh', 'bias', 'wp', 'bp'):
            a = kd[name]
            in_specs.append(pl.BlockSpec(a.shape, full2))
            args.append(a)

    out = pl.pallas_call(
        kernel,
        out_shape=jax.ShapeDtypeStruct((nb * P2, C), jnp.float32),
        grid_spec=pltpu.PrefetchScalarGridSpec(
            num_scalar_prefetch=0,
            grid=(1,),                       # whole problem in one block / one step
            in_specs=in_specs,
            out_specs=pl.BlockSpec((nb * P2, C), full2)),
        compiler_params=pltpu.CompilerParams(
            dimension_semantics=("arbitrary",)),
    )(*args)

    # out rows are ordered [band n][sample b*T+t (padded to P2)][channel c]
    y = out.reshape(nb, P2, C)[:, :B * T, :].reshape(nb, B, T, C)
    return jnp.transpose(y, (1, 0, 3, 2)).reshape(B, N, T)


# ----------------------------------------------------------------------------
# Parameter init (deterministic, PyTorch-convention shapes)
# ----------------------------------------------------------------------------
def init_resrnn_params(key, C, bidirectional):
    H = 2 * C
    ndir = 2 if bidirectional else 1
    ks = jax.random.split(key, 10)
    s_rnn = 1.0 / math.sqrt(H)
    s_proj = 1.0 / math.sqrt(H * ndir)

    def u(k, shape, scale):
        return jax.random.uniform(k, shape, jnp.float32, -scale, scale)

    p = {
        'gamma': jnp.ones((C,), jnp.float32),
        'beta': jnp.zeros((C,), jnp.float32),
        'w_ih': u(ks[0], (4 * H, C), s_rnn),
        'w_hh': u(ks[1], (4 * H, H), s_rnn),
        'b_ih': u(ks[2], (4 * H,), s_rnn),
        'b_hh': u(ks[3], (4 * H,), s_rnn),
        'w_proj': u(ks[4], (C, H * ndir), s_proj),
        'b_proj': u(ks[5], (C,), s_proj),
    }
    if bidirectional:
        p['w_ih_rev'] = u(ks[6], (4 * H, C), s_rnn)
        p['w_hh_rev'] = u(ks[7], (4 * H, H), s_rnn)
        p['b_ih_rev'] = u(ks[8], (4 * H,), s_rnn)
        p['b_hh_rev'] = u(ks[9], (4 * H,), s_rnn)
    return p


class BSNetPallas:
    def __init__(self, in_channel, nband=7, key=jax.random.PRNGKey(42)):
        assert in_channel % nband == 0
        self.nband = nband
        self.feature_dim = in_channel // nband
        C = self.feature_dim
        H = 2 * C
        k1, k2 = jax.random.split(key)
        self.p_rnn = init_resrnn_params(k1, C, bidirectional=False)
        self.p_comm = init_resrnn_params(k2, C, bidirectional=True)

        # ---- pre-packed kernel parameters (built once at init) -------------
        p1 = self.p_rnn
        self.k1 = dict(
            g=p1['gamma'].reshape(1, C),
            b=p1['beta'].reshape(1, C),
            wih=p1['w_ih'].T,                                   # (C, 4H)
            whh=p1['w_hh'].T,                                   # (H, 4H)
            bias=(p1['b_ih'] + p1['b_hh']).reshape(1, 4 * H),
            wp=p1['w_proj'].T,                                  # (H, C)
            bp=p1['b_proj'].reshape(1, C))

        p2 = self.p_comm
        wf_hh = p2['w_hh'].T                                    # (H, 4H)
        wb_hh = p2['w_hh_rev'].T                                # (H, 4H)
        wf_ih = p2['w_ih'].T                                    # (C, 4H)
        wb_ih = p2['w_ih_rev'].T                                # (C, 4H)
        bf = p2['b_ih'] + p2['b_hh']                            # (4H,)
        bb = p2['b_ih_rev'] + p2['b_hh_rev']                    # (4H,)

        # Packed recurrent / input weights with interleaved gate slots
        # [i_f,i_b,f_f,f_b,g_f,g_b,o_f,o_b].  W_hh is block-diagonal over the
        # fused hidden state [h_f | h_b]; W_ih is block-diagonal over the doubled
        # input [xn | band-reversed xn] so no in-kernel gate interleave is needed.
        whh2 = jnp.zeros((2 * H, 8 * H), jnp.float32)
        wih2 = jnp.zeros((2 * C, 8 * H), jnp.float32)
        bias2 = jnp.zeros((8 * H,), jnp.float32)
        for k in range(4):
            lo_f, hi_f = (2 * k) * H, (2 * k + 1) * H
            lo_b, hi_b = (2 * k + 1) * H, (2 * k + 2) * H
            whh2 = whh2.at[0:H, lo_f:hi_f].set(wf_hh[:, k * H:(k + 1) * H])
            whh2 = whh2.at[H:2 * H, lo_b:hi_b].set(wb_hh[:, k * H:(k + 1) * H])
            wih2 = wih2.at[0:C, lo_f:hi_f].set(wf_ih[:, k * H:(k + 1) * H])
            wih2 = wih2.at[C:2 * C, lo_b:hi_b].set(wb_ih[:, k * H:(k + 1) * H])
            bias2 = bias2.at[lo_f:hi_f].set(bf[k * H:(k + 1) * H])
            bias2 = bias2.at[lo_b:hi_b].set(bb[k * H:(k + 1) * H])

        # Packed output projection: cols 0:C <- fwd hidden, cols C:2C <- bwd hidden.
        wp = p2['w_proj'].T                                     # (2H, C)
        wp2 = jnp.zeros((2 * H, 2 * C), jnp.float32)
        wp2 = wp2.at[0:H, 0:C].set(wp[0:H, :])
        wp2 = wp2.at[H:2 * H, C:2 * C].set(wp[H:2 * H, :])

        self.k2 = dict(
            g=p2['gamma'].reshape(1, C),
            b=p2['beta'].reshape(1, C),
            wih=wih2,                                           # (2C, 8H)
            whh=whh2,                                           # (2H, 8H)
            bias=bias2.reshape(1, 8 * H),
            wp=wp2,                                             # (2H, 2C)
            bp=p2['b_proj'].reshape(1, C))

        self._fwd = jax.jit(functools.partial(
            bsnet_forward, nb=self.nband, C=self.feature_dim))

    def __call__(self, x):
        return self._fwd(x, self.k1, self.k2)


# ----------------------------------------------------------------------------
# Pure-JAX reference (matches the PyTorch semantics) for verification
# ----------------------------------------------------------------------------
def ref_resrnn(x_bcs, p, bidirectional):
    Bp, C, S = x_bcs.shape
    H = 2 * C
    mean = x_bcs.mean(axis=(1, 2), keepdims=True)
    var = ((x_bcs - mean) ** 2).mean(axis=(1, 2), keepdims=True)
    xn = (x_bcs - mean) / jnp.sqrt(var + EPS)
    xn = xn * p['gamma'][None, :, None] + p['beta'][None, :, None]
    seq = jnp.transpose(xn, (0, 2, 1))                             # (Bp, S, C)

    def run(wih, whh, bih, bhh, reverse):
        h = jnp.zeros((Bp, H), jnp.float32)
        c = jnp.zeros((Bp, H), jnp.float32)
        store = [None] * S
        order = range(S - 1, -1, -1) if reverse else range(S)
        for t in order:
            g = seq[:, t, :] @ wih.T + h @ whh.T + bih + bhh
            i = jax.nn.sigmoid(g[:, :H])
            f = jax.nn.sigmoid(g[:, H:2 * H])
            gg = jnp.tanh(g[:, 2 * H:3 * H])
            o = jax.nn.sigmoid(g[:, 3 * H:])
            c = f * c + i * gg
            h = o * jnp.tanh(c)
            store[t] = h
        return jnp.stack(store, axis=1)                            # (Bp, S, H)

    out = run(p['w_ih'], p['w_hh'], p['b_ih'], p['b_hh'], False)
    if bidirectional:
        outb = run(p['w_ih_rev'], p['w_hh_rev'], p['b_ih_rev'], p['b_hh_rev'], True)
        out = jnp.concatenate([out, outb], axis=-1)
    proj = out @ p['w_proj'].T + p['b_proj']
    return x_bcs + jnp.transpose(proj, (0, 2, 1))


def ref_bsnet(x, model):
    B, N, T = x.shape
    nb, C = model.nband, model.feature_dim
    y1 = ref_resrnn(x.reshape(B * nb, C, T), model.p_rnn, False).reshape(B, nb, C, T)
    x2 = jnp.transpose(y1, (0, 3, 2, 1)).reshape(B * T, C, nb)
    y2 = ref_resrnn(x2, model.p_comm, True).reshape(B, T, C, nb)
    return jnp.transpose(y2, (0, 3, 2, 1)).reshape(B, N, T)


if __name__ == "__main__":
    B, nband, C, T = 2, 7, 8, 12
    N = nband * C                     # in_channel = 56
    key = jax.random.PRNGKey(0)
    kx, kp = jax.random.split(key)
    x = jax.random.normal(kx, (B, N, T), jnp.float32)

    model = BSNetPallas(N, nband=nband, key=kp)
    y = model(x)
    y = jax.block_until_ready(y)

    assert y.shape == (B, N, T)
    assert bool(jnp.all(jnp.isfinite(y)))
    ref = ref_bsnet(x, model)
    max_err = float(jnp.max(jnp.abs(y - ref)))
    assert max_err < 5e-4, f"max abs err {max_err}"
    print("KERNEL_OK")
</pallas_src>

<mosaic_0001>
module attributes {stable_mosaic.version = 11 : i64} {
  func.func @bsnet_kernel(%arg0: i32, %arg1: memref<12x16x8xf32, #tpu.memory_space<vmem>>, %arg2: memref<1x8xf32, #tpu.memory_space<vmem>>, %arg3: memref<1x8xf32, #tpu.memory_space<vmem>>, %arg4: memref<8x64xf32, #tpu.memory_space<vmem>>, %arg5: memref<16x64xf32, #tpu.memory_space<vmem>>, %arg6: memref<1x64xf32, #tpu.memory_space<vmem>>, %arg7: memref<16x8xf32, #tpu.memory_space<vmem>>, %arg8: memref<1x8xf32, #tpu.memory_space<vmem>>, %arg9: memref<1x8xf32, #tpu.memory_space<vmem>>, %arg10: memref<1x8xf32, #tpu.memory_space<vmem>>, %arg11: memref<16x128xf32, #tpu.memory_space<vmem>>, %arg12: memref<32x128xf32, #tpu.memory_space<vmem>>, %arg13: memref<1x128xf32, #tpu.memory_space<vmem>>, %arg14: memref<32x16xf32, #tpu.memory_space<vmem>>, %arg15: memref<1x8xf32, #tpu.memory_space<vmem>>, %arg16: memref<168x8xf32, #tpu.memory_space<vmem>>) attributes {dimension_semantics = [#tpu.dimension_semantics<arbitrary>], iteration_bounds = array<i64: 1>, scalar_prefetch = 0 : i64, scratch_operands = 0 : i64, tpu.core_type = #tpu.core_type<tc>, window_params = [{pipeline_mode = #tpu.pipeline_mode<synchronous>, transform_indices = @transform_0, window_bounds = array<i64: 12, 16, 8>}, {pipeline_mode = #tpu.pipeline_mode<synchronous>, transform_indices = @transform_1, window_bounds = array<i64: 1, 8>}, {pipeline_mode = #tpu.pipeline_mode<synchronous>, transform_indices = @transform_2, window_bounds = array<i64: 1, 8>}, {pipeline_mode = #tpu.pipeline_mode<synchronous>, transform_indices = @transform_3, window_bounds = array<i64: 8, 64>}, {pipeline_mode = #tpu.pipeline_mode<synchronous>, transform_indices = @transform_4, window_bounds = array<i64: 16, 64>}, {pipeline_mode = #tpu.pipeline_mode<synchronous>, transform_indices = @transform_5, window_bounds = array<i64: 1, 64>}, {pipeline_mode = #tpu.pipeline_mode<synchronous>, transform_indices = @transform_6, window_bounds = array<i64: 16, 8>}, {pipeline_mode = #tpu.pipeline_mode<synchronous>, transform_indices = @transform_7, window_bounds = array<i64: 1, 8>}, {pipeline_mode = #tpu.pipeline_mode<synchronous>, transform_indices = @transform_8, window_bounds = array<i64: 1, 8>}, {pipeline_mode = #tpu.pipeline_mode<synchronous>, transform_indices = @transform_9, window_bounds = array<i64: 1, 8>}, {pipeline_mode = #tpu.pipeline_mode<synchronous>, transform_indices = @transform_10, window_bounds = array<i64: 16, 128>}, {pipeline_mode = #tpu.pipeline_mode<synchronous>, transform_indices = @transform_11, window_bounds = array<i64: 32, 128>}, {pipeline_mode = #tpu.pipeline_mode<synchronous>, transform_indices = @transform_12, window_bounds = array<i64: 1, 128>}, {pipeline_mode = #tpu.pipeline_mode<synchronous>, transform_indices = @transform_13, window_bounds = array<i64: 32, 16>}, {pipeline_mode = #tpu.pipeline_mode<synchronous>, transform_indices = @transform_14, window_bounds = array<i64: 1, 8>}, {pipeline_mode = #tpu.pipeline_mode<synchronous>, transform_indices = @transform_15, window_bounds = array<i64: 168, 8>}]} {
    %c0 = arith.constant 0 : index
    %c0_0 = arith.constant 0 : index
    %c0_1 = arith.constant 0 : index
    %0 = vector.load %arg1[%c0, %c0_0, %c0_1] : memref<12x16x8xf32, #tpu.memory_space<vmem>>, vector<12x16x8xf32>
    %cst = arith.constant dense<0.000000e+00> : vector<12x16xf32>
    %1 = vector.multi_reduction <add>, %0, %cst [2] : vector<12x16x8xf32> to vector<12x16xf32>
    %2 = vector.shape_cast %1 : vector<12x16xf32> to vector<12x16x1xf32>
    %cst_2 = arith.constant 8.000000e+00 : f32
    %3 = vector.broadcast %cst_2 : f32 to vector<12x16x1xf32>
    %4 = arith.divf %2, %3 : vector<12x16x1xf32>
    %cst_3 = arith.constant dense<0.000000e+00> : vector<16x1xf32>
    %5 = vector.multi_reduction <add>, %4, %cst_3 [0] : vector<12x16x1xf32> to vector<16x1xf32>
    %6 = vector.shape_cast %5 : vector<16x1xf32> to vector<1x16x1xf32>
    %cst_4 = arith.constant 1.200000e+01 : f32
    %7 = vector.broadcast %cst_4 : f32 to vector<1x16x1xf32>
    %8 = arith.divf %6, %7 : vector<1x16x1xf32>
    %9 = vector.broadcast %8 : vector<1x16x1xf32> to vector<12x16x8xf32>
    %10 = arith.subf %0, %9 : vector<12x16x8xf32>
    %11 = arith.mulf %10, %10 : vector<12x16x8xf32>
    %cst_5 = arith.constant dense<0.000000e+00> : vector<12x16xf32>
    %12 = vector.multi_reduction <add>, %11, %cst_5 [2] : vector<12x16x8xf32> to vector<12x16xf32>
    %13 = vector.shape_cast %12 : vector<12x16xf32> to vector<12x16x1xf32>
    %cst_6 = arith.constant 8.000000e+00 : f32
    %14 = vector.broadcast %cst_6 : f32 to vector<12x16x1xf32>
    %15 = arith.divf %13, %14 : vector<12x16x1xf32>
    %cst_7 = arith.constant dense<0.000000e+00> : vector<16x1xf32>
    %16 = vector.multi_reduction <add>, %15, %cst_7 [0] : vector<12x16x1xf32> to vector<16x1xf32>
    %17 = vector.shape_cast %16 : vector<16x1xf32> to vector<1x16x1xf32>
    %cst_8 = arith.constant 1.200000e+01 : f32
    %18 = vector.broadcast %cst_8 : f32 to vector<1x16x1xf32>
    %19 = arith.divf %17, %18 : vector<1x16x1xf32>
    %20 = vector.broadcast %8 : vector<1x16x1xf32> to vector<12x16x8xf32>
    %21 = arith.subf %0, %20 : vector<12x16x8xf32>
    %cst_9 = arith.constant 1.1920929E-7 : f32
    %22 = vector.broadcast %cst_9 : f32 to vector<1x16x1xf32>
    %23 = arith.addf %19, %22 : vector<1x16x1xf32>
    %24 = math.rsqrt %23 : vector<1x16x1xf32>
    %25 = vector.broadcast %24 : vector<1x16x1xf32> to vector<12x16x8xf32>
    %26 = arith.mulf %21, %25 : vector<12x16x8xf32>
    %c0_10 = arith.constant 0 : index
    %c0_11 = arith.constant 0 : index
    %27 = vector.load %arg2[%c0_10, %c0_11] : memref<1x8xf32, #tpu.memory_space<vmem>>, vector<1x8xf32>
    %28 = vector.shape_cast %27 : vector<1x8xf32> to vector<1x1x8xf32>
    %29 = vector.broadcast %28 : vector<1x1x8xf32> to vector<12x16x8xf32>
    %30 = arith.mulf %26, %29 : vector<12x16x8xf32>
    %c0_12 = arith.constant 0 : index
    %c0_13 = arith.constant 0 : index
    %31 = vector.load %arg3[%c0_12, %c0_13] : memref<1x8xf32, #tpu.memory_space<vmem>>, vector<1x8xf32>
    %32 = vector.shape_cast %31 : vector<1x8xf32> to vector<1x1x8xf32>
    %33 = vector.broadcast %32 : vector<1x1x8xf32> to vector<12x16x8xf32>
    %34 = arith.addf %30, %33 : vector<12x16x8xf32>
    %35 = vector.shape_cast %34 : vector<12x16x8xf32> to vector<192x8xf32>
    %c0_14 = arith.constant 0 : index
    %c0_15 = arith.constant 0 : index
    %36 = vector.load %arg4[%c0_14, %c0_15] : memref<8x64xf32, #tpu.memory_space<vmem>>, vector<8x64xf32>
    %cst_16 = arith.constant dense<0.000000e+00> : vector<192x64xf32>
    %37 = tpu.matmul %35, %36, %cst_16 {dimension_numbers = #tpu.dot_dimension_numbers<[1], [0], [0], [1], [0, 0, 1, 1], [], []>} : vector<192x8xf32>, vector<8x64xf32>, vector<192x64xf32> -> vector<192x64xf32>
    %c0_17 = arith.constant 0 : index
    %c0_18 = arith.constant 0 : index
    %38 = vector.load %arg6[%c0_17, %c0_18] : memref<1x64xf32, #tpu.memory_space<vmem>>, vector<1x64xf32>
    %39 = vector.broadcast %38 : vector<1x64xf32> to vector<192x64xf32>
    %40 = arith.addf %37, %39 : vector<192x64xf32>
    %c0_19 = arith.constant 0 : index
    %c0_20 = arith.constant 0 : index
    %41 = vector.load %arg5[%c0_19, %c0_20] : memref<16x64xf32, #tpu.memory_space<vmem>>, vector<16x64xf32>
    %cst_21 = arith.constant 0.000000e+00 : f32
    %42 = vector.broadcast %cst_21 : f32 to vector<16x16xf32>
    %cst_22 = arith.constant 0.000000e+00 : f32
    %43 = vector.broadcast %cst_22 : f32 to vector<16x16xf32>
    %44 = vector.extract_strided_slice %40 {offsets = [0, 0], sizes = [16, 64], strides = [1, 1]} : vector<192x64xf32> to vector<16x64xf32>
    %cst_23 = arith.constant dense<0.000000e+00> : vector<16x64xf32>
    %45 = tpu.matmul %42, %41, %cst_23 {dimension_numbers = #tpu.dot_dimension_numbers<[1], [0], [0], [1], [0, 0, 1, 1], [], []>} : vector<16x16xf32>, vector<16x64xf32>, vector<16x64xf32> -> vector<16x64xf32>
    %46 = arith.addf %44, %45 : vector<16x64xf32>
    %47 = arith.negf %46 : vector<16x64xf32>
    %48 = math.exp %47 : vector<16x64xf32>
    %cst_24 = arith.constant 1.000000e+00 : f32
    %49 = vector.broadcast %cst_24 : f32 to vector<16x64xf32>
    %50 = arith.addf %49, %48 : vector<16x64xf32>
    %51 = arith.divf %49, %50 : vector<16x64xf32>
    %52 = math.tanh %46 : vector<16x64xf32>
    %53 = vector.extract_strided_slice %51 {offsets = [0, 0], sizes = [16, 16], strides = [1, 1]} : vector<16x64xf32> to vector<16x16xf32>
    %54 = vector.extract_strided_slice %51 {offsets = [0, 16], sizes = [16, 16], strides = [1, 1]} : vector<16x64xf32> to vector<16x16xf32>
    %55 = vector.extract_strided_slice %52 {offsets = [0, 32], sizes = [16, 16], strides = [1, 1]} : vector<16x64xf32> to vector<16x16xf32>
    %56 = vector.extract_strided_slice %51 {offsets = [0, 48], sizes = [16, 16], strides = [1, 1]} : vector<16x64xf32> to vector<16x16xf32>
    %57 = arith.mulf %54, %43 : vector<16x16xf32>
    %58 = arith.mulf %53, %55 : vector<16x16xf32>
    %59 = arith.addf %57, %58 : vector<16x16xf32>
    %60 = math.tanh %59 : vector<16x16xf32>
    %61 = arith.mulf %56, %60 : vector<16x16xf32>
    %62 = vector.extract_strided_slice %40 {offsets = [16, 0], sizes = [16, 64], strides = [1, 1]} : vector<192x64xf32> to vector<16x64xf32>
    %cst_25 = arith.constant dense<0.000000e+00> : vector<16x64xf32>
    %63 = tpu.matmul %61, %41, %cst_25 {dimension_numbers = #tpu.dot_dimension_numbers<[1], [0], [0], [1], [0, 0, 1, 1], [], []>} : vector<16x16xf32>, vector<16x64xf32>, vector<16x64xf32> -> vector<16x64xf32>
    %64 = arith.addf %62, %63 : vector<16x64xf32>
    %65 = arith.negf %64 : vector<16x64xf32>
    %66 = math.exp %65 : vector<16x64xf32>
    %cst_26 = arith.constant 1.000000e+00 : f32
    %67 = vector.broadcast %cst_26 : f32 to vector<16x64xf32>
    %68 = arith.addf %67, %66 : vector<16x64xf32>
    %69 = arith.divf %67, %68 : vector<16x64xf32>
    %70 = math.tanh %64 : vector<16x64xf32>
    %71 = vector.extract_strided_slice %69 {offsets = [0, 0], sizes = [16, 16], strides = [1, 1]} : vector<16x64xf32> to vector<16x16xf32>
    %72 = vector.extract_strided_slice %69 {offsets = [0, 16], sizes = [16, 16], strides = [1, 1]} : vector<16x64xf32> to vector<16x16xf32>
    %73 = vector.extract_strided_slice %70 {offsets = [0, 32], sizes = [16, 16], strides = [1, 1]} : vector<16x64xf32> to vector<16x16xf32>
    %74 = vector.extract_strided_slice %69 {offsets = [0, 48], sizes = [16, 16], strides = [1, 1]} : vector<16x64xf32> to vector<16x16xf32>
    %75 = arith.mulf %72, %59 : vector<16x16xf32>
    %76 = arith.mulf %71, %73 : vector<16x16xf32>
    %77 = arith.addf %75, %76 : vector<16x16xf32>
    %78 = math.tanh %77 : vector<16x16xf32>
    %79 = arith.mulf %74, %78 : vector<16x16xf32>
    %80 = vector.extract_strided_slice %40 {offsets = [32, 0], sizes = [16, 64], strides = [1, 1]} : vector<192x64xf32> to vector<16x64xf32>
    %cst_27 = arith.constant dense<0.000000e+00> : vector<16x64xf32>
    %81 = tpu.matmul %79, %41, %cst_27 {dimension_numbers = #tpu.dot_dimension_numbers<[1], [0], [0], [1], [0, 0, 1, 1], [], []>} : vector<16x16xf32>, vector<16x64xf32>, vector<16x64xf32> -> vector<16x64xf32>
    %82 = arith.addf %80, %81 : vector<16x64xf32>
    %83 = arith.negf %82 : vector<16x64xf32>
    %84 = math.exp %83 : vector<16x64xf32>
    %cst_28 = arith.constant 1.000000e+00 : f32
    %85 = vector.broadcast %cst_28 : f32 to vector<16x64xf32>
    %86 = arith.addf %85, %84 : vector<16x64xf32>
    %87 = arith.divf %85, %86 : vector<16x64xf32>
    %88 = math.tanh %82 : vector<16x64xf32>
    %89 = vector.extract_strided_slice %87 {offsets = [0, 0], sizes = [16, 16], strides = [1, 1]} : vector<16x64xf32> to vector<16x16xf32>
    %90 = vector.extract_strided_slice %87 {offsets = [0, 16], sizes = [16, 16], strides = [1, 1]} : vector<16x64xf32> to vector<16x16xf32>
    %91 = vector.extract_strided_slice %88 {offsets = [0, 32], sizes = [16, 16], strides = [1, 1]} : vector<16x64xf32> to vector<16x16xf32>
    %92 = vector.extract_strided_slice %87 {offsets = [0, 48], sizes = [16, 16], strides = [1, 1]} : vector<16x64xf32> to vector<16x16xf32>
    %93 = arith.mulf %90, %77 : vector<16x16xf32>
    %94 = arith.mulf %89, %91 : vector<16x16xf32>
    %95 = arith.addf %93, %94 : vector<16x16xf32>
    %96 = math.tanh %95 : vector<16x16xf32>
    %97 = arith.mulf %92, %96 : vector<16x16xf32>
    %98 = vector.extract_strided_slice %40 {offsets = [48, 0], sizes = [16, 64], strides = [1, 1]} : vector<192x64xf32> to vector<16x64xf32>
    %cst_29 = arith.constant dense<0.000000e+00> : vector<16x64xf32>
    %99 = tpu.matmul %97, %41, %cst_29 {dimension_numbers = #tpu.dot_dimension_numbers<[1], [0], [0], [1], [0, 0, 1, 1], [], []>} : vector<16x16xf32>, vector<16x64xf32>, vector<16x64xf32> -> vector<16x64xf32>
    %100 = arith.addf %98, %99 : vector<16x64xf32>
    %101 = arith.negf %100 : vector<16x64xf32>
    %102 = math.exp %101 : vector<16x64xf32>
    %cst_30 = arith.constant 1.000000e+00 : f32
    %103 = vector.broadcast %cst_30 : f32 to vector<16x64xf32>
    %104 = arith.addf %103, %102 : vector<16x64xf32>
    %105 = arith.divf %103, %104 : vector<16x64xf32>
    %106 = math.tanh %100 : vector<16x64xf32>
    %107 = vector.extract_strided_slice %105 {offsets = [0, 0], sizes = [16, 16], strides = [1, 1]} : vector<16x64xf32> to vector<16x16xf32>
    %108 = vector.extract_strided_slice %105 {offsets = [0, 16], sizes = [16, 16], strides = [1, 1]} : vector<16x64xf32> to vector<16x16xf32>
    %109 = vector.extract_strided_slice %106 {offsets = [0, 32], sizes = [16, 16], strides = [1, 1]} : vector<16x64xf32> to vector<16x16xf32>
    %110 = vector.extract_strided_slice %105 {offsets = [0, 48], sizes = [16, 16], strides = [1, 1]} : vector<16x64xf32> to vector<16x16xf32>
    %111 = arith.mulf %108, %95 : vector<16x16xf32>
    %112 = arith.mulf %107, %109 : vector<16x16xf32>
    %113 = arith.addf %111, %112 : vector<16x16xf32>
    %114 = math.tanh %113 : vector<16x16xf32>
    %115 = arith.mulf %110, %114 : vector<16x16xf32>
    %116 = vector.extract_strided_slice %40 {offsets = [64, 0], sizes = [16, 64], strides = [1, 1]} : vector<192x64xf32> to vector<16x64xf32>
    %cst_31 = arith.constant dense<0.000000e+00> : vector<16x64xf32>
    %117 = tpu.matmul %115, %41, %cst_31 {dimension_numbers = #tpu.dot_dimension_numbers<[1], [0], [0], [1], [0, 0, 1, 1], [], []>} : vector<16x16xf32>, vector<16x64xf32>, vector<16x64xf32> -> vector<16x64xf32>
    %118 = arith.addf %116, %117 : vector<16x64xf32>
    %119 = arith.negf %118 : vector<16x64xf32>
    %120 = math.exp %119 : vector<16x64xf32>
    %cst_32 = arith.constant 1.000000e+00 : f32
    %121 = vector.broadcast %cst_32 : f32 to vector<16x64xf32>
    %122 = arith.addf %121, %120 : vector<16x64xf32>
    %123 = arith.divf %121, %122 : vector<16x64xf32>
    %124 = math.tanh %118 : vector<16x64xf32>
    %125 = vector.extract_strided_slice %123 {offsets = [0, 0], sizes = [16, 16], strides = [1, 1]} : vector<16x64xf32> to vector<16x16xf32>
    %126 = vector.extract_strided_slice %123 {offsets = [0, 16], sizes = [16, 16], strides = [1, 1]} : vector<16x64xf32> to vector<16x16xf32>
    %127 = vector.extract_strided_slice %124 {offsets = [0, 32], sizes = [16, 16], strides = [1, 1]} : vector<16x64xf32> to vector<16x16xf32>
    %128 = vector.extract_strided_slice %123 {offsets = [0, 48], sizes = [16, 16], strides = [1, 1]} : vector<16x64xf32> to vector<16x16xf32>
    %129 = arith.mulf %126, %113 : vector<16x16xf32>
    %130 = arith.mulf %125, %127 : vector<16x16xf32>
    %131 = arith.addf %129, %130 : vector<16x16xf32>
    %132 = math.tanh %131 : vector<16x16xf32>
    %133 = arith.mulf %128, %132 : vector<16x16xf32>
    %134 = vector.extract_strided_slice %40 {offsets = [80, 0], sizes = [16, 64], strides = [1, 1]} : vector<192x64xf32> to vector<16x64xf32>
    %cst_33 = arith.constant dense<0.000000e+00> : vector<16x64xf32>
    %135 = tpu.matmul %133, %41, %cst_33 {dimension_numbers = #tpu.dot_dimension_numbers<[1], [0], [0], [1], [0, 0, 1, 1], [], []>} : vector<16x16xf32>, vector<16x64xf32>, vector<16x64xf32> -> vector<16x64xf32>
    %136 = arith.addf %134, %135 : vector<16x64xf32>
    %137 = arith.negf %136 : vector<16x64xf32>
    %138 = math.exp %137 : vector<16x64xf32>
    %cst_34 = arith.constant 1.000000e+00 : f32
    %139 = vector.broadcast %cst_34 : f32 to vector<16x64xf32>
    %140 = arith.addf %139, %138 : vector<16x64xf32>
    %141 = arith.divf %139, %140 : vector<16x64xf32>
    %142 = math.tanh %136 : vector<16x64xf32>
    %143 = vector.extract_strided_slice %141 {offsets = [0, 0], sizes = [16, 16], strides = [1, 1]} : vector<16x64xf32> to vector<16x16xf32>
    %144 = vector.extract_strided_slice %141 {offsets = [0, 16], sizes = [16, 16], strides = [1, 1]} : vector<16x64xf32> to vector<16x16xf32>
    %145 = vector.extract_strided_slice %142 {offsets = [0, 32], sizes = [16, 16], strides = [1, 1]} : vector<16x64xf32> to vector<16x16xf32>
    %146 = vector.extract_strided_slice %141 {offsets = [0, 48], sizes = [16, 16], strides = [1, 1]} : vector<16x64xf32> to vector<16x16xf32>
    %147 = arith.mulf %144, %131 : vector<16x16xf32>
    %148 = arith.mulf %143, %145 : vector<16x16xf32>
    %149 = arith.addf %147, %148 : vector<16x16xf32>
    %150 = math.tanh %149 : vector<16x16xf32>
    %151 = arith.mulf %146, %150 : vector<16x16xf32>
    %152 = vector.extract_strided_slice %40 {offsets = [96, 0], sizes = [16, 64], strides = [1, 1]} : vector<192x64xf32> to vector<16x64xf32>
    %cst_35 = arith.constant dense<0.000000e+00> : vector<16x64xf32>
    %153 = tpu.matmul %151, %41, %cst_35 {dimension_numbers = #tpu.dot_dimension_numbers<[1], [0], [0], [1], [0, 0, 1, 1], [], []>} : vector<16x16xf32>, vector<16x64xf32>, vector<16x64xf32> -> vector<16x64xf32>
    %154 = arith.addf %152, %153 : vector<16x64xf32>
    %155 = arith.negf %154 : vector<16x64xf32>
    %156 = math.exp %155 : vector<16x64xf32>
    %cst_36 = arith.constant 1.000000e+00 : f32
    %157 = vector.broadcast %cst_36 : f32 to vector<16x64xf32>
    %158 = arith.addf %157, %156 : vector<16x64xf32>
    %159 = arith.divf %157, %158 : vector<16x64xf32>
    %160 = math.tanh %154 : vector<16x64xf32>
    %161 = vector.extract_strided_slice %159 {offsets = [0, 0], sizes = [16, 16], strides = [1, 1]} : vector<16x64xf32> to vector<16x16xf32>
    %162 = vector.extract_strided_slice %159 {offsets = [0, 16], sizes = [16, 16], strides = [1, 1]} : vector<16x64xf32> to vector<16x16xf32>
    %163 = vector.extract_strided_slice %160 {offsets = [0, 32], sizes = [16, 16], strides = [1, 1]} : vector<16x64xf32> to vector<16x16xf32>
    %164 = vector.extract_strided_slice %159 {offsets = [0, 48], sizes = [16, 16], strides = [1, 1]} : vector<16x64xf32> to vector<16x16xf32>
    %165 = arith.mulf %162, %149 : vector<16x16xf32>
    %166 = arith.mulf %161, %163 : vector<16x16xf32>
    %167 = arith.addf %165, %166 : vector<16x16xf32>
    %168 = math.tanh %167 : vector<16x16xf32>
    %169 = arith.mulf %164, %168 : vector<16x16xf32>
    %170 = vector.extract_strided_slice %40 {offsets = [112, 0], sizes = [16, 64], strides = [1, 1]} : vector<192x64xf32> to vector<16x64xf32>
    %cst_37 = arith.constant dense<0.000000e+00> : vector<16x64xf32>
    %171 = tpu.matmul %169, %41, %cst_37 {dimension_numbers = #tpu.dot_dimension_numbers<[1], [0], [0], [1], [0, 0, 1, 1], [], []>} : vector<16x16xf32>, vector<16x64xf32>, vector<16x64xf32> -> vector<16x64xf32>
    %172 = arith.addf %170, %171 : vector<16x64xf32>
    %173 = arith.negf %172 : vector<16x64xf32>
    %174 = math.exp %173 : vector<16x64xf32>
    %cst_38 = arith.constant 1.000000e+00 : f32
    %175 = vector.broadcast %cst_38 : f32 to vector<16x64xf32>
    %176 = arith.addf %175, %174 : vector<16x64xf32>
    %177 = arith.divf %175, %176 : vector<16x64xf32>
    %178 = math.tanh %172 : vector<16x64xf32>
    %179 = vector.extract_strided_slice %177 {offsets = [0, 0], sizes = [16, 16], strides = [1, 1]} : vector<16x64xf32> to vector<16x16xf32>
    %180 = vector.extract_strided_slice %177 {offsets = [0, 16], sizes = [16, 16], strides = [1, 1]} : vector<16x64xf32> to vector<16x16xf32>
    %181 = vector.extract_strided_slice %178 {offsets = [0, 32], sizes = [16, 16], strides = [1, 1]} : vector<16x64xf32> to vector<16x16xf32>
    %182 = vector.extract_strided_slice %177 {offsets = [0, 48], sizes = [16, 16], strides = [1, 1]} : vector<16x64xf32> to vector<16x16xf32>
    %183 = arith.mulf %180, %167 : vector<16x16xf32>
    %184 = arith.mulf %179, %181 : vector<16x16xf32>
    %185 = arith.addf %183, %184 : vector<16x16xf32>
    %186 = math.tanh %185 : vector<16x16xf32>
    %187 = arith.mulf %182, %186 : vector<16x16xf32>
    %188 = vector.extract_strided_slice %40 {offsets = [128, 0], sizes = [16, 64], strides = [1, 1]} : vector<192x64xf32> to vector<16x64xf32>
    %cst_39 = arith.constant dense<0.000000e+00> : vector<16x64xf32>
    %189 = tpu.matmul %187, %41, %cst_39 {dimension_numbers = #tpu.dot_dimension_numbers<[1], [0], [0], [1], [0, 0, 1, 1], [], []>} : vector<16x16xf32>, vector<16x64xf32>, vector<16x64xf32> -> vector<16x64xf32>
    %190 = arith.addf %188, %189 : vector<16x64xf32>
    %191 = arith.negf %190 : vector<16x64xf32>
    %192 = math.exp %191 : vector<16x64xf32>
    %cst_40 = arith.constant 1.000000e+00 : f32
    %193 = vector.broadcast %cst_40 : f32 to vector<16x64xf32>
    %194 = arith.addf %193, %192 : vector<16x64xf32>
    %195 = arith.divf %193, %194 : vector<16x64xf32>
    %196 = math.tanh %190 : vector<16x64xf32>
    %197 = vector.extract_strided_slice %195 {offsets = [0, 0], sizes = [16, 16], strides = [1, 1]} : vector<16x64xf32> to vector<16x16xf32>
    %198 = vector.extract_strided_slice %195 {offsets = [0, 16], sizes = [16, 16], strides = [1, 1]} : vector<16x64xf32> to vector<16x16xf32>
    %199 = vector.extract_strided_slice %196 {offsets = [0, 32], sizes = [16, 16], strides = [1, 1]} : vector<16x64xf32> to vector<16x16xf32>
    %200 = vector.extract_strided_slice %195 {offsets = [0, 48], sizes = [16, 16], strides = [1, 1]} : vector<16x64xf32> to vector<16x16xf32>
    %201 = arith.mulf %198, %185 : vector<16x16xf32>
    %202 = arith.mulf %197, %199 : vector<16x16xf32>
    %203 = arith.addf %201, %202 : vector<16x16xf32>
    %204 = math.tanh %203 : vector<16x16xf32>
    %205 = arith.mulf %200, %204 : vector<16x16xf32>
    %206 = vector.extract_strided_slice %40 {offsets = [144, 0], sizes = [16, 64], strides = [1, 1]} : vector<192x64xf32> to vector<16x64xf32>
    %cst_41 = arith.constant dense<0.000000e+00> : vector<16x64xf32>
    %207 = tpu.matmul %205, %41, %cst_41 {dimension_numbers = #tpu.dot_dimension_numbers<[1], [0], [0], [1], [0, 0, 1, 1], [], []>} : vector<16x16xf32>, vector<16x64xf32>, vector<16x64xf32> -> vector<16x64xf32>
    %208 = arith.addf %206, %207 : vector<16x64xf32>
    %209 = arith.negf %208 : vector<16x64xf32>
    %210 = math.exp %209 : vector<16x64xf32>
    %cst_42 = arith.constant 1.000000e+00 : f32
    %211 = vector.broadcast %cst_42 : f32 to vector<16x64xf32>
    %212 = arith.addf %211, %210 : vector<16x64xf32>
    %213 = arith.divf %211, %212 : vector<16x64xf32>
    %214 = math.tanh %208 : vector<16x64xf32>
    %215 = vector.extract_strided_slice %213 {offsets = [0, 0], sizes = [16, 16], strides = [1, 1]} : vector<16x64xf32> to vector<16x16xf32>
    %216 = vector.extract_strided_slice %213 {offsets = [0, 16], sizes = [16, 16], strides = [1, 1]} : vector<16x64xf32> to vector<16x16xf32>
    %217 = vector.extract_strided_slice %214 {offsets = [0, 32], sizes = [16, 16], strides = [1, 1]} : vector<16x64xf32> to vector<16x16xf32>
    %218 = vector.extract_strided_slice %213 {offsets = [0, 48], sizes = [16, 16], strides = [1, 1]} : vector<16x64xf32> to vector<16x16xf32>
    %219 = arith.mulf %216, %203 : vector<16x16xf32>
    %220 = arith.mulf %215, %217 : vector<16x16xf32>
    %221 = arith.addf %219, %220 : vector<16x16xf32>
    %222 = math.tanh %221 : vector<16x16xf32>
    %223 = arith.mulf %218, %222 : vector<16x16xf32>
    %224 = vector.extract_strided_slice %40 {offsets = [160, 0], sizes = [16, 64], strides = [1, 1]} : vector<192x64xf32> to vector<16x64xf32>
    %cst_43 = arith.constant dense<0.000000e+00> : vector<16x64xf32>
    %225 = tpu.matmul %223, %41, %cst_43 {dimension_numbers = #tpu.dot_dimension_numbers<[1], [0], [0], [1], [0, 0, 1, 1], [], []>} : vector<16x16xf32>, vector<16x64xf32>, vector<16x64xf32> -> vector<16x64xf32>
    %226 = arith.addf %224, %225 : vector<16x64xf32>
    %227 = arith.negf %226 : vector<16x64xf32>
    %228 = math.exp %227 : vector<16x64xf32>
    %cst_44 = arith.constant 1.000000e+00 : f32
    %229 = vector.broadcast %cst_44 : f32 to vector<16x64xf32>
    %230 = arith.addf %229, %228 : vector<16x64xf32>
    %231 = arith.divf %229, %230 : vector<16x64xf32>
    %232 = math.tanh %226 : vector<16x64xf32>
    %233 = vector.extract_strided_slice %231 {offsets = [0, 0], sizes = [16, 16], strides = [1, 1]} : vector<16x64xf32> to vector<16x16xf32>
    %234 = vector.extract_strided_slice %231 {offsets = [0, 16], sizes = [16, 16], strides = [1, 1]} : vector<16x64xf32> to vector<16x16xf32>
    %235 = vector.extract_strided_slice %232 {offsets = [0, 32], sizes = [16, 16], strides = [1, 1]} : vector<16x64xf32> to vector<16x16xf32>
    %236 = vector.extract_strided_slice %231 {offsets = [0, 48], sizes = [16, 16], strides = [1, 1]} : vector<16x64xf32> to vector<16x16xf32>
    %237 = arith.mulf %234, %221 : vector<16x16xf32>
    %238 = arith.mulf %233, %235 : vector<16x16xf32>
    %239 = arith.addf %237, %238 : vector<16x16xf32>
    %240 = math.tanh %239 : vector<16x16xf32>
    %241 = arith.mulf %236, %240 : vector<16x16xf32>
    %242 = vector.extract_strided_slice %40 {offsets = [176, 0], sizes = [16, 64], strides = [1, 1]} : vector<192x64xf32> to vector<16x64xf32>
    %cst_45 = arith.constant dense<0.000000e+00> : vector<16x64xf32>
    %243 = tpu.matmul %241, %41, %cst_45 {dimension_numbers = #tpu.dot_dimension_numbers<[1], [0], [0], [1], [0, 0, 1, 1], [], []>} : vector<16x16xf32>, vector<16x64xf32>, vector<16x64xf32> -> vector<16x64xf32>
    %244 = arith.addf %242, %243 : vector<16x64xf32>
    %245 = arith.negf %244 : vector<16x64xf32>
    %246 = math.exp %245 : vector<16x64xf32>
    %cst_46 = arith.constant 1.000000e+00 : f32
    %247 = vector.broadcast %cst_46 : f32 to vector<16x64xf32>
    %248 = arith.addf %247, %246 : vector<16x64xf32>
    %249 = arith.divf %247, %248 : vector<16x64xf32>
    %250 = math.tanh %244 : vector<16x64xf32>
    %251 = vector.extract_strided_slice %249 {offsets = [0, 0], sizes = [16, 16], strides = [1, 1]} : vector<16x64xf32> to vector<16x16xf32>
    %252 = vector.extract_strided_slice %249 {offsets = [0, 16], sizes = [16, 16], strides = [1, 1]} : vector<16x64xf32> to vector<16x16xf32>
    %253 = vector.extract_strided_slice %250 {offsets = [0, 32], sizes = [16, 16], strides = [1, 1]} : vector<16x64xf32> to vector<16x16xf32>
    %254 = vector.extract_strided_slice %249 {offsets = [0, 48], sizes = [16, 16], strides = [1, 1]} : vector<16x64xf32> to vector<16x16xf32>
    %255 = arith.mulf %252, %239 : vector<16x16xf32>
    %256 = arith.mulf %251, %253 : vector<16x16xf32>
    %257 = arith.addf %255, %256 : vector<16x16xf32>
    %258 = math.tanh %257 : vector<16x16xf32>
    %259 = arith.mulf %254, %258 : vector<16x16xf32>
    %260 = tpu.concatenate %61, %79, %97, %115, %133, %151, %169, %187, %205, %223, %241, %259 in 0 : vector<16x16xf32>, vector<16x16xf32>, vector<16x16xf32>, vector<16x16xf32>, vector<16x16xf32>, vector<16x16xf32>, vector<16x16xf32>, vector<16x16xf32>, vector<16x16xf32>, vector<16x16xf32>, vector<16x16xf32>, vector<16x16xf32> -> vector<192x16xf32>
    %c0_47 = arith.constant 0 : index
    %c0_48 = arith.constant 0 : index
    %261 = vector.load %arg7[%c0_47, %c0_48] : memref<16x8xf32, #tpu.memory_space<vmem>>, vector<16x8xf32>
    %cst_49 = arith.constant dense<0.000000e+00> : vector<192x8xf32>
    %262 = tpu.matmul %260, %261, %cst_49 {dimension_numbers = #tpu.dot_dimension_numbers<[1], [0], [0], [1], [0, 0, 1, 1], [], []>} : vector<192x16xf32>, vector<16x8xf32>, vector<192x8xf32> -> vector<192x8xf32>
    %c0_50 = arith.constant 0 : index
    %c0_51 = arith.constant 0 : index
    %263 = vector.load %arg8[%c0_50, %c0_51] : memref<1x8xf32, #tpu.memory_space<vmem>>, vector<1x8xf32>
    %264 = vector.broadcast %263 : vector<1x8xf32> to vector<192x8xf32>
    %265 = arith.addf %262, %264 : vector<192x8xf32>
    %266 = vector.shape_cast %265 : vector<192x8xf32> to vector<12x16x8xf32>
    %267 = arith.addf %0, %266 : vector<12x16x8xf32>
    %268 = vector.extract_strided_slice %267 {offsets = [0, 0, 0], sizes = [12, 1, 8], strides = [1, 1, 1]} : vector<12x16x8xf32> to vector<12x1x8xf32>
    %269 = vector.shape_cast %268 : vector<12x1x8xf32> to vector<12x8xf32>
    %270 = vector.extract_strided_slice %267 {offsets = [0, 7, 0], sizes = [12, 1, 8], strides = [1, 1, 1]} : vector<12x16x8xf32> to vector<12x1x8xf32>
    %271 = vector.shape_cast %270 : vector<12x1x8xf32> to vector<12x8xf32>
    %272 = vector.extract_strided_slice %267 {offsets = [0, 1, 0], sizes = [12, 1, 8], strides = [1, 1, 1]} : vector<12x16x8xf32> to vector<12x1x8xf32>
    %273 = vector.shape_cast %272 : vector<12x1x8xf32> to vector<12x8xf32>
    %274 = vector.extract_strided_slice %267 {offsets = [0, 8, 0], sizes = [12, 1, 8], strides = [1, 1, 1]} : vector<12x16x8xf32> to vector<12x1x8xf32>
    %275 = vector.shape_cast %274 : vector<12x1x8xf32> to vector<12x8xf32>
    %276 = vector.extract_strided_slice %267 {offsets = [0, 2, 0], sizes = [12, 1, 8], strides = [1, 1, 1]} : vector<12x16x8xf32> to vector<12x1x8xf32>
    %277 = vector.shape_cast %276 : vector<12x1x8xf32> to vector<12x8xf32>
    %278 = vector.extract_strided_slice %267 {offsets = [0, 9, 0], sizes = [12, 1, 8], strides = [1, 1, 1]} : vector<12x16x8xf32> to vector<12x1x8xf32>
    %279 = vector.shape_cast %278 : vector<12x1x8xf32> to vector<12x8xf32>
    %280 = vector.extract_strided_slice %267 {offsets = [0, 3, 0], sizes = [12, 1, 8], strides = [1, 1, 1]} : vector<12x16x8xf32> to vector<12x1x8xf32>
    %281 = vector.shape_cast %280 : vector<12x1x8xf32> to vector<12x8xf32>
    %282 = vector.extract_strided_slice %267 {offsets = [0, 10, 0], sizes = [12, 1, 8], strides = [1, 1, 1]} : vector<12x16x8xf32> to vector<12x1x8xf32>
    %283 = vector.shape_cast %282 : vector<12x1x8xf32> to vector<12x8xf32>
    %284 = vector.extract_strided_slice %267 {offsets = [0, 4, 0], sizes = [12, 1, 8], strides = [1, 1, 1]} : vector<12x16x8xf32> to vector<12x1x8xf32>
    %285 = vector.shape_cast %284 : vector<12x1x8xf32> to vector<12x8xf32>
    %286 = vector.extract_strided_slice %267 {offsets = [0, 11, 0], sizes = [12, 1, 8], strides = [1, 1, 1]} : vector<12x16x8xf32> to vector<12x1x8xf32>
    %287 = vector.shape_cast %286 : vector<12x1x8xf32> to vector<12x8xf32>
    %288 = vector.extract_strided_slice %267 {offsets = [0, 5, 0], sizes = [12, 1, 8], strides = [1, 1, 1]} : vector<12x16x8xf32> to vector<12x1x8xf32>
    %289 = vector.shape_cast %288 : vector<12x1x8xf32> to vector<12x8xf32>
    %290 = vector.extract_strided_slice %267 {offsets = [0, 12, 0], sizes = [12, 1, 8], strides = [1, 1, 1]} : vector<12x16x8xf32> to vector<12x1x8xf32>
    %291 = vector.shape_cast %290 : vector<12x1x8xf32> to vector<12x8xf32>
    %292 = vector.extract_strided_slice %267 {offsets = [0, 6, 0], sizes = [12, 1, 8], strides = [1, 1, 1]} : vector<12x16x8xf32> to vector<12x1x8xf32>
    %293 = vector.shape_cast %292 : vector<12x1x8xf32> to vector<12x8xf32>
    %294 = vector.extract_strided_slice %267 {offsets = [0, 13, 0], sizes = [12, 1, 8], strides = [1, 1, 1]} : vector<12x16x8xf32> to vector<12x1x8xf32>
    %295 = vector.shape_cast %294 : vector<12x1x8xf32> to vector<12x8xf32>
    %296 = tpu.concatenate %269, %271, %273, %275, %277, %279, %281, %283, %285, %287, %289, %291, %293, %295 in 0 : vector<12x8xf32>, vector<12x8xf32>, vector<12x8xf32>, vector<12x8xf32>, vector<12x8xf32>, vector<12x8xf32>, vector<12x8xf32>, vector<12x8xf32>, vector<12x8xf32>, vector<12x8xf32>, vector<12x8xf32>, vector<12x8xf32>, vector<12x8xf32>, vector<12x8xf32> -> vector<168x8xf32>
    %297 = vector.shape_cast %296 : vector<168x8xf32> to vector<7x24x8xf32>
    %cst_52 = arith.constant dense<0.000000e+00> : vector<7x24xf32>
    %298 = vector.multi_reduction <add>, %297, %cst_52 [2] : vector<7x24x8xf32> to vector<7x24xf32>
    %299 = vector.shape_cast %298 : vector<7x24xf32> to vector<7x24x1xf32>
    %cst_53 = arith.constant 8.000000e+00 : f32
    %300 = vector.broadcast %cst_53 : f32 to vector<7x24x1xf32>
    %301 = arith.divf %299, %300 : vector<7x24x1xf32>
    %cst_54 = arith.constant dense<0.000000e+00> : vector<24x1xf32>
    %302 = vector.multi_reduction <add>, %301, %cst_54 [0] : vector<7x24x1xf32> to vector<24x1xf32>
    %303 = vector.shape_cast %302 : vector<24x1xf32> to vector<1x24x1xf32>
    %cst_55 = arith.constant 7.000000e+00 : f32
    %304 = vector.broadcast %cst_55 : f32 to vector<1x24x1xf32>
    %305 = arith.divf %303, %304 : vector<1x24x1xf32>
    %306 = vector.broadcast %305 : vector<1x24x1xf32> to vector<7x24x8xf32>
    %307 = arith.subf %297, %306 : vector<7x24x8xf32>
    %308 = arith.mulf %307, %307 : vector<7x24x8xf32>
    %cst_56 = arith.constant dense<0.000000e+00> : vector<7x24xf32>
    %309 = vector.multi_reduction <add>, %308, %cst_56 [2] : vector<7x24x8xf32> to vector<7x24xf32>
    %310 = vector.shape_cast %309 : vector<7x24xf32> to vector<7x24x1xf32>
    %cst_57 = arith.constant 8.000000e+00 : f32
    %311 = vector.broadcast %cst_57 : f32 to vector<7x24x1xf32>
    %312 = arith.divf %310, %311 : vector<7x24x1xf32>
    %cst_58 = arith.constant dense<0.000000e+00> : vector<24x1xf32>
    %313 = vector.multi_reduction <add>, %312, %cst_58 [0] : vector<7x24x1xf32> to vector<24x1xf32>
    %314 = vector.shape_cast %313 : vector<24x1xf32> to vector<1x24x1xf32>
    %cst_59 = arith.constant 7.000000e+00 : f32
    %315 = vector.broadcast %cst_59 : f32 to vector<1x24x1xf32>
    %316 = arith.divf %314, %315 : vector<1x24x1xf32>
    %317 = vector.broadcast %305 : vector<1x24x1xf32> to vector<7x24x8xf32>
    %318 = arith.subf %297, %317 : vector<7x24x8xf32>
    %cst_60 = arith.constant 1.1920929E-7 : f32
    %319 = vector.broadcast %cst_60 : f32 to vector<1x24x1xf32>
    %320 = arith.addf %316, %319 : vector<1x24x1xf32>
    %321 = math.rsqrt %320 : vector<1x24x1xf32>
    %322 = vector.broadcast %321 : vector<1x24x1xf32> to vector<7x24x8xf32>
    %323 = arith.mulf %318, %322 : vector<7x24x8xf32>
    %c0_61 = arith.constant 0 : index
    %c0_62 = arith.constant 0 : index
    %324 = vector.load %arg9[%c0_61, %c0_62] : memref<1x8xf32, #tpu.memory_space<vmem>>, vector<1x8xf32>
    %325 = vector.shape_cast %324 : vector<1x8xf32> to vector<1x1x8xf32>
    %326 = vector.broadcast %325 : vector<1x1x8xf32> to vector<7x24x8xf32>
    %327 = arith.mulf %323, %326 : vector<7x24x8xf32>
    %c0_63 = arith.constant 0 : index
    %c0_64 = arith.constant 0 : index
    %328 = vector.load %arg10[%c0_63, %c0_64] : memref<1x8xf32, #tpu.memory_space<vmem>>, vector<1x8xf32>
    %329 = vector.shape_cast %328 : vector<1x8xf32> to vector<1x1x8xf32>
    %330 = vector.broadcast %329 : vector<1x1x8xf32> to vector<7x24x8xf32>
    %331 = arith.addf %327, %330 : vector<7x24x8xf32>
    %332 = vector.shape_cast %331 : vector<7x24x8xf32> to vector<168x8xf32>
    %333 = vector.extract_strided_slice %332 {offsets = [144, 0], sizes = [24, 8], strides = [1, 1]} : vector<168x8xf32> to vector<24x8xf32>
    %334 = vector.extract_strided_slice %332 {offsets = [120, 0], sizes = [24, 8], strides = [1, 1]} : vector<168x8xf32> to vector<24x8xf32>
    %335 = vector.extract_strided_slice %332 {offsets = [96, 0], sizes = [24, 8], strides = [1, 1]} : vector<168x8xf32> to vector<24x8xf32>
    %336 = vector.extract_strided_slice %332 {offsets = [72, 0], sizes = [24, 8], strides = [1, 1]} : vector<168x8xf32> to vector<24x8xf32>
    %337 = vector.extract_strided_slice %332 {offsets = [48, 0], sizes = [24, 8], strides = [1, 1]} : vector<168x8xf32> to vector<24x8xf32>
    %338 = vector.extract_strided_slice %332 {offsets = [24, 0], sizes = [24, 8], strides = [1, 1]} : vector<168x8xf32> to vector<24x8xf32>
    %339 = vector.extract_strided_slice %332 {offsets = [0, 0], sizes = [24, 8], strides = [1, 1]} : vector<168x8xf32> to vector<24x8xf32>
    %340 = tpu.concatenate %333, %334, %335, %336, %337, %338, %339 in 0 : vector<24x8xf32>, vector<24x8xf32>, vector<24x8xf32>, vector<24x8xf32>, vector<24x8xf32>, vector<24x8xf32>, vector<24x8xf32> -> vector<168x8xf32>
    %341 = tpu.concatenate %332, %340 in 1 : vector<168x8xf32>, vector<168x8xf32> -> vector<168x16xf32>
    %c0_65 = arith.constant 0 : index
    %c0_66 = arith.constant 0 : index
    %342 = vector.load %arg11[%c0_65, %c0_66] : memref<16x128xf32, #tpu.memory_space<vmem>>, vector<16x128xf32>
    %cst_67 = arith.constant dense<0.000000e+00> : vector<168x128xf32>
    %343 = tpu.matmul %341, %342, %cst_67 {dimension_numbers = #tpu.dot_dimension_numbers<[1], [0], [0], [1], [0, 0, 1, 1], [], []>} : vector<168x16xf32>, vector<16x128xf32>, vector<168x128xf32> -> vector<168x128xf32>
    %c0_68 = arith.constant 0 : index
    %c0_69 = arith.constant 0 : index
    %344 = vector.load %arg13[%c0_68, %c0_69] : memref<1x128xf32, #tpu.memory_space<vmem>>, vector<1x128xf32>
    %345 = vector.broadcast %344 : vector<1x128xf32> to vector<168x128xf32>
    %346 = arith.addf %343, %345 : vector<168x128xf32>
    %c0_70 = arith.constant 0 : index
    %c0_71 = arith.constant 0 : index
    %347 = vector.load %arg12[%c0_70, %c0_71] : memref<32x128xf32, #tpu.memory_space<vmem>>, vector<32x128xf32>
    %cst_72 = arith.constant 0.000000e+00 : f32
    %348 = vector.broadcast %cst_72 : f32 to vector<24x32xf32>
    %cst_73 = arith.constant 0.000000e+00 : f32
    %349 = vector.broadcast %cst_73 : f32 to vector<24x32xf32>
    %350 = vector.extract_strided_slice %346 {offsets = [0, 0], sizes = [24, 128], strides = [1, 1]} : vector<168x128xf32> to vector<24x128xf32>
    %cst_74 = arith.constant dense<0.000000e+00> : vector<24x128xf32>
    %351 = tpu.matmul %348, %347, %cst_74 {dimension_numbers = #tpu.dot_dimension_numbers<[1], [0], [0], [1], [0, 0, 1, 1], [], []>} : vector<24x32xf32>, vector<32x128xf32>, vector<24x128xf32> -> vector<24x128xf32>
    %352 = arith.addf %350, %351 : vector<24x128xf32>
    %353 = arith.negf %352 : vector<24x128xf32>
    %354 = math.exp %353 : vector<24x128xf32>
    %cst_75 = arith.constant 1.000000e+00 : f32
    %355 = vector.broadcast %cst_75 : f32 to vector<24x128xf32>
    %356 = arith.addf %355, %354 : vector<24x128xf32>
    %357 = arith.divf %355, %356 : vector<24x128xf32>
    %358 = math.tanh %352 : vector<24x128xf32>
    %359 = vector.extract_strided_slice %357 {offsets = [0, 0], sizes = [24, 32], strides = [1, 1]} : vector<24x128xf32> to vector<24x32xf32>
    %360 = vector.extract_strided_slice %357 {offsets = [0, 32], sizes = [24, 32], strides = [1, 1]} : vector<24x128xf32> to vector<24x32xf32>
    %361 = vector.extract_strided_slice %358 {offsets = [0, 64], sizes = [24, 32], strides = [1, 1]} : vector<24x128xf32> to vector<24x32xf32>
    %362 = vector.extract_strided_slice %357 {offsets = [0, 96], sizes = [24, 32], strides = [1, 1]} : vector<24x128xf32> to vector<24x32xf32>
    %363 = arith.mulf %360, %349 : vector<24x32xf32>
    %364 = arith.mulf %359, %361 : vector<24x32xf32>
    %365 = arith.addf %363, %364 : vector<24x32xf32>
    %366 = math.tanh %365 : vector<24x32xf32>
    %367 = arith.mulf %362, %366 : vector<24x32xf32>
    %368 = vector.extract_strided_slice %346 {offsets = [24, 0], sizes = [24, 128], strides = [1, 1]} : vector<168x128xf32> to vector<24x128xf32>
    %cst_76 = arith.constant dense<0.000000e+00> : vector<24x128xf32>
    %369 = tpu.matmul %367, %347, %cst_76 {dimension_numbers = #tpu.dot_dimension_numbers<[1], [0], [0], [1], [0, 0, 1, 1], [], []>} : vector<24x32xf32>, vector<32x128xf32>, vector<24x128xf32> -> vector<24x128xf32>
    %370 = arith.addf %368, %369 : vector<24x128xf32>
    %371 = arith.negf %370 : vector<24x128xf32>
    %372 = math.exp %371 : vector<24x128xf32>
    %cst_77 = arith.constant 1.000000e+00 : f32
    %373 = vector.broadcast %cst_77 : f32 to vector<24x128xf32>
    %374 = arith.addf %373, %372 : vector<24x128xf32>
    %375 = arith.divf %373, %374 : vector<24x128xf32>
    %376 = math.tanh %370 : vector<24x128xf32>
    %377 = vector.extract_strided_slice %375 {offsets = [0, 0], sizes = [24, 32], strides = [1, 1]} : vector<24x128xf32> to vector<24x32xf32>
    %378 = vector.extract_strided_slice %375 {offsets = [0, 32], sizes = [24, 32], strides = [1, 1]} : vector<24x128xf32> to vector<24x32xf32>
    %379 = vector.extract_strided_slice %376 {offsets = [0, 64], sizes = [24, 32], strides = [1, 1]} : vector<24x128xf32> to vector<24x32xf32>
    %380 = vector.extract_strided_slice %375 {offsets = [0, 96], sizes = [24, 32], strides = [1, 1]} : vector<24x128xf32> to vector<24x32xf32>
    %381 = arith.mulf %378, %365 : vector<24x32xf32>
    %382 = arith.mulf %377, %379 : vector<24x32xf32>
    %383 = arith.addf %381, %382 : vector<24x32xf32>
    %384 = math.tanh %383 : vector<24x32xf32>
    %385 = arith.mulf %380, %384 : vector<24x32xf32>
    %386 = vector.extract_strided_slice %346 {offsets = [48, 0], sizes = [24, 128], strides = [1, 1]} : vector<168x128xf32> to vector<24x128xf32>
    %cst_78 = arith.constant dense<0.000000e+00> : vector<24x128xf32>
    %387 = tpu.matmul %385, %347, %cst_78 {dimension_numbers = #tpu.dot_dimension_numbers<[1], [0], [0], [1], [0, 0, 1, 1], [], []>} : vector<24x32xf32>, vector<32x128xf32>, vector<24x128xf32> -> vector<24x128xf32>
    %388 = arith.addf %386, %387 : vector<24x128xf32>
    %389 = arith.negf %388 : vector<24x128xf32>
    %390 = math.exp %389 : vector<24x128xf32>
    %cst_79 = arith.constant 1.000000e+00 : f32
    %391 = vector.broadcast %cst_79 : f32 to vector<24x128xf32>
    %392 = arith.addf %391, %390 : vector<24x128xf32>
    %393 = arith.divf %391, %392 : vector<24x128xf32>
    %394 = math.tanh %388 : vector<24x128xf32>
    %395 = vector.extract_strided_slice %393 {offsets = [0, 0], sizes = [24, 32], strides = [1, 1]} : vector<24x128xf32> to vector<24x32xf32>
    %396 = vector.extract_strided_slice %393 {offsets = [0, 32], sizes = [24, 32], strides = [1, 1]} : vector<24x128xf32> to vector<24x32xf32>
    %397 = vector.extract_strided_slice %394 {offsets = [0, 64], sizes = [24, 32], strides = [1, 1]} : vector<24x128xf32> to vector<24x32xf32>
    %398 = vector.extract_strided_slice %393 {offsets = [0, 96], sizes = [24, 32], strides = [1, 1]} : vector<24x128xf32> to vector<24x32xf32>
    %399 = arith.mulf %396, %383 : vector<24x32xf32>
    %400 = arith.mulf %395, %397 : vector<24x32xf32>
    %401 = arith.addf %399, %400 : vector<24x32xf32>
    %402 = math.tanh %401 : vector<24x32xf32>
    %403 = arith.mulf %398, %402 : vector<24x32xf32>
    %404 = vector.extract_strided_slice %346 {offsets = [72, 0], sizes = [24, 128], strides = [1, 1]} : vector<168x128xf32> to vector<24x128xf32>
    %cst_80 = arith.constant dense<0.000000e+00> : vector<24x128xf32>
    %405 = tpu.matmul %403, %347, %cst_80 {dimension_numbers = #tpu.dot_dimension_numbers<[1], [0], [0], [1], [0, 0, 1, 1], [], []>} : vector<24x32xf32>, vector<32x128xf32>, vector<24x128xf32> -> vector<24x128xf32>
    %406 = arith.addf %404, %405 : vector<24x128xf32>
    %407 = arith.negf %406 : vector<24x128xf32>
    %408 = math.exp %407 : vector<24x128xf32>
    %cst_81 = arith.constant 1.000000e+00 : f32
    %409 = vector.broadcast %cst_81 : f32 to vector<24x128xf32>
    %410 = arith.addf %409, %408 : vector<24x128xf32>
    %411 = arith.divf %409, %410 : vector<24x128xf32>
    %412 = math.tanh %406 : vector<24x128xf32>
    %413 = vector.extract_strided_slice %411 {offsets = [0, 0], sizes = [24, 32], strides = [1, 1]} : vector<24x128xf32> to vector<24x32xf32>
    %414 = vector.extract_strided_slice %411 {offsets = [0, 32], sizes = [24, 32], strides = [1, 1]} : vector<24x128xf32> to vector<24x32xf32>
    %415 = vector.extract_strided_slice %412 {offsets = [0, 64], sizes = [24, 32], strides = [1, 1]} : vector<24x128xf32> to vector<24x32xf32>
    %416 = vector.extract_strided_slice %411 {offsets = [0, 96], sizes = [24, 32], strides = [1, 1]} : vector<24x128xf32> to vector<24x32xf32>
    %417 = arith.mulf %414, %401 : vector<24x32xf32>
    %418 = arith.mulf %413, %415 : vector<24x32xf32>
    %419 = arith.addf %417, %418 : vector<24x32xf32>
    %420 = math.tanh %419 : vector<24x32xf32>
    %421 = arith.mulf %416, %420 : vector<24x32xf32>
    %422 = vector.extract_strided_slice %346 {offsets = [96, 0], sizes = [24, 128], strides = [1, 1]} : vector<168x128xf32> to vector<24x128xf32>
    %cst_82 = arith.constant dense<0.000000e+00> : vector<24x128xf32>
    %423 = tpu.matmul %421, %347, %cst_82 {dimension_numbers = #tpu.dot_dimension_numbers<[1], [0], [0], [1], [0, 0, 1, 1], [], []>} : vector<24x32xf32>, vector<32x128xf32>, vector<24x128xf32> -> vector<24x128xf32>
    %424 = arith.addf %422, %423 : vector<24x128xf32>
    %425 = arith.negf %424 : vector<24x128xf32>
    %426 = math.exp %425 : vector<24x128xf32>
    %cst_83 = arith.constant 1.000000e+00 : f32
    %427 = vector.broadcast %cst_83 : f32 to vector<24x128xf32>
    %428 = arith.addf %427, %426 : vector<24x128xf32>
    %429 = arith.divf %427, %428 : vector<24x128xf32>
    %430 = math.tanh %424 : vector<24x128xf32>
    %431 = vector.extract_strided_slice %429 {offsets = [0, 0], sizes = [24, 32], strides = [1, 1]} : vector<24x128xf32> to vector<24x32xf32>
    %432 = vector.extract_strided_slice %429 {offsets = [0, 32], sizes = [24, 32], strides = [1, 1]} : vector<24x128xf32> to vector<24x32xf32>
    %433 = vector.extract_strided_slice %430 {offsets = [0, 64], sizes = [24, 32], strides = [1, 1]} : vector<24x128xf32> to vector<24x32xf32>
    %434 = vector.extract_strided_slice %429 {offsets = [0, 96], sizes = [24, 32], strides = [1, 1]} : vector<24x128xf32> to vector<24x32xf32>
    %435 = arith.mulf %432, %419 : vector<24x32xf32>
    %436 = arith.mulf %431, %433 : vector<24x32xf32>
    %437 = arith.addf %435, %436 : vector<24x32xf32>
    %438 = math.tanh %437 : vector<24x32xf32>
    %439 = arith.mulf %434, %438 : vector<24x32xf32>
    %440 = vector.extract_strided_slice %346 {offsets = [120, 0], sizes = [24, 128], strides = [1, 1]} : vector<168x128xf32> to vector<24x128xf32>
    %cst_84 = arith.constant dense<0.000000e+00> : vector<24x128xf32>
    %441 = tpu.matmul %439, %347, %cst_84 {dimension_numbers = #tpu.dot_dimension_numbers<[1], [0], [0], [1], [0, 0, 1, 1], [], []>} : vector<24x32xf32>, vector<32x128xf32>, vector<24x128xf32> -> vector<24x128xf32>
    %442 = arith.addf %440, %441 : vector<24x128xf32>
    %443 = arith.negf %442 : vector<24x128xf32>
    %444 = math.exp %443 : vector<24x128xf32>
    %cst_85 = arith.constant 1.000000e+00 : f32
    %445 = vector.broadcast %cst_85 : f32 to vector<24x128xf32>
    %446 = arith.addf %445, %444 : vector<24x128xf32>
    %447 = arith.divf %445, %446 : vector<24x128xf32>
    %448 = math.tanh %442 : vector<24x128xf32>
    %449 = vector.extract_strided_slice %447 {offsets = [0, 0], sizes = [24, 32], strides = [1, 1]} : vector<24x128xf32> to vector<24x32xf32>
    %450 = vector.extract_strided_slice %447 {offsets = [0, 32], sizes = [24, 32], strides = [1, 1]} : vector<24x128xf32> to vector<24x32xf32>
    %451 = vector.extract_strided_slice %448 {offsets = [0, 64], sizes = [24, 32], strides = [1, 1]} : vector<24x128xf32> to vector<24x32xf32>
    %452 = vector.extract_strided_slice %447 {offsets = [0, 96], sizes = [24, 32], strides = [1, 1]} : vector<24x128xf32> to vector<24x32xf32>
    %453 = arith.mulf %450, %437 : vector<24x32xf32>
    %454 = arith.mulf %449, %451 : vector<24x32xf32>
    %455 = arith.addf %453, %454 : vector<24x32xf32>
    %456 = math.tanh %455 : vector<24x32xf32>
    %457 = arith.mulf %452, %456 : vector<24x32xf32>
    %458 = vector.extract_strided_slice %346 {offsets = [144, 0], sizes = [24, 128], strides = [1, 1]} : vector<168x128xf32> to vector<24x128xf32>
    %cst_86 = arith.constant dense<0.000000e+00> : vector<24x128xf32>
    %459 = tpu.matmul %457, %347, %cst_86 {dimension_numbers = #tpu.dot_dimension_numbers<[1], [0], [0], [1], [0, 0, 1, 1], [], []>} : vector<24x32xf32>, vector<32x128xf32>, vector<24x128xf32> -> vector<24x128xf32>
    %460 = arith.addf %458, %459 : vector<24x128xf32>
    %461 = arith.negf %460 : vector<24x128xf32>
    %462 = math.exp %461 : vector<24x128xf32>
    %cst_87 = arith.constant 1.000000e+00 : f32
    %463 = vector.broadcast %cst_87 : f32 to vector<24x128xf32>
    %464 = arith.addf %463, %462 : vector<24x128xf32>
    %465 = arith.divf %463, %464 : vector<24x128xf32>
    %466 = math.tanh %460 : vector<24x128xf32>
    %467 = vector.extract_strided_slice %465 {offsets = [0, 0], sizes = [24, 32], strides = [1, 1]} : vector<24x128xf32> to vector<24x32xf32>
    %468 = vector.extract_strided_slice %465 {offsets = [0, 32], sizes = [24, 32], strides = [1, 1]} : vector<24x128xf32> to vector<24x32xf32>
    %469 = vector.extract_strided_slice %466 {offsets = [0, 64], sizes = [24, 32], strides = [1, 1]} : vector<24x128xf32> to vector<24x32xf32>
    %470 = vector.extract_strided_slice %465 {offsets = [0, 96], sizes = [24, 32], strides = [1, 1]} : vector<24x128xf32> to vector<24x32xf32>
    %471 = arith.mulf %468, %455 : vector<24x32xf32>
    %472 = arith.mulf %467, %469 : vector<24x32xf32>
    %473 = arith.addf %471, %472 : vector<24x32xf32>
    %474 = math.tanh %473 : vector<24x32xf32>
    %475 = arith.mulf %470, %474 : vector<24x32xf32>
    %476 = tpu.concatenate %367, %385, %403, %421, %439, %457, %475 in 0 : vector<24x32xf32>, vector<24x32xf32>, vector<24x32xf32>, vector<24x32xf32>, vector<24x32xf32>, vector<24x32xf32>, vector<24x32xf32> -> vector<168x32xf32>
    %c0_88 = arith.constant 0 : index
    %c0_89 = arith.constant 0 : index
    %477 = vector.load %arg14[%c0_88, %c0_89] : memref<32x16xf32, #tpu.memory_space<vmem>>, vector<32x16xf32>
    %cst_90 = arith.constant dense<0.000000e+00> : vector<168x16xf32>
    %478 = tpu.matmul %476, %477, %cst_90 {dimension_numbers = #tpu.dot_dimension_numbers<[1], [0], [0], [1], [0, 0, 1, 1], [], []>} : vector<168x32xf32>, vector<32x16xf32>, vector<168x16xf32> -> vector<168x16xf32>
    %479 = vector.extract_strided_slice %478 {offsets = [144, 8], sizes = [24, 8], strides = [1, 1]} : vector<168x16xf32> to vector<24x8xf32>
    %480 = vector.extract_strided_slice %478 {offsets = [120, 8], sizes = [24, 8], strides = [1, 1]} : vector<168x16xf32> to vector<24x8xf32>
    %481 = vector.extract_strided_slice %478 {offsets = [96, 8], sizes = [24, 8], strides = [1, 1]} : vector<168x16xf32> to vector<24x8xf32>
    %482 = vector.extract_strided_slice %478 {offsets = [72, 8], sizes = [24, 8], strides = [1, 1]} : vector<168x16xf32> to vector<24x8xf32>
    %483 = vector.extract_strided_slice %478 {offsets = [48, 8], sizes = [24, 8], strides = [1, 1]} : vector<168x16xf32> to vector<24x8xf32>
    %484 = vector.extract_strided_slice %478 {offsets = [24, 8], sizes = [24, 8], strides = [1, 1]} : vector<168x16xf32> to vector<24x8xf32>
    %485 = vector.extract_strided_slice %478 {offsets = [0, 8], sizes = [24, 8], strides = [1, 1]} : vector<168x16xf32> to vector<24x8xf32>
    %486 = tpu.concatenate %479, %480, %481, %482, %483, %484, %485 in 0 : vector<24x8xf32>, vector<24x8xf32>, vector<24x8xf32>, vector<24x8xf32>, vector<24x8xf32>, vector<24x8xf32>, vector<24x8xf32> -> vector<168x8xf32>
    %487 = vector.extract_strided_slice %478 {offsets = [0, 0], sizes = [168, 8], strides = [1, 1]} : vector<168x16xf32> to vector<168x8xf32>
    %488 = arith.addf %487, %486 : vector<168x8xf32>
    %c0_91 = arith.constant 0 : index
    %c0_92 = arith.constant 0 : index
    %489 = vector.load %arg15[%c0_91, %c0_92] : memref<1x8xf32, #tpu.memory_space<vmem>>, vector<1x8xf32>
    %490 = vector.broadcast %489 : vector<1x8xf32> to vector<168x8xf32>
    %491 = arith.addf %488, %490 : vector<168x8xf32>
    %492 = arith.addf %296, %491 : vector<168x8xf32>
    %c0_93 = arith.constant 0 : index
    %c0_94 = arith.constant 0 : index
    %493 = vector.load %arg16[%c0_93, %c0_94] : memref<168x8xf32, #tpu.memory_space<vmem>>, vector<168x8xf32>
    tpu.vector_store %arg16[%c0_93, %c0_94], %492 {strides = array<i32>} : memref<168x8xf32, #tpu.memory_space<vmem>>, vector<168x8xf32>,
    return
  }
  func.func @transform_0(%arg0: i32) -> (i32, i32, i32) {
    %c0_i32 = arith.constant 0 : i32
    %c0_i32_0 = arith.constant 0 : i32
    %c0_i32_1 = arith.constant 0 : i32
    %c0_i32_2 = arith.constant 0 : i32
    return %c0_i32, %c0_i32_0, %c0_i32_1 : i32, i32, i32
  }
  func.func @transform_1(%arg0: i32) -> (i32, i32) {
    %c0_i32 = arith.constant 0 : i32
    %c0_i32_0 = arith.constant 0 : i32
    %c0_i32_1 = arith.constant 0 : i32
    return %c0_i32, %c0_i32_0 : i32, i32
  }
  func.func @transform_2(%arg0: i32) -> (i32, i32) {
    %c0_i32 = arith.constant 0 : i32
    %c0_i32_0 = arith.constant 0 : i32
    %c0_i32_1 = arith.constant 0 : i32
    return %c0_i32, %c0_i32_0 : i32, i32
  }
  func.func @transform_3(%arg0: i32) -> (i32, i32) {
    %c0_i32 = arith.constant 0 : i32
    %c0_i32_0 = arith.constant 0 : i32
    %c0_i32_1 = arith.constant 0 : i32
    return %c0_i32, %c0_i32_0 : i32, i32
  }
  func.func @transform_4(%arg0: i32) -> (i32, i32) {
    %c0_i32 = arith.constant 0 : i32
    %c0_i32_0 = arith.constant 0 : i32
    %c0_i32_1 = arith.constant 0 : i32
    return %c0_i32, %c0_i32_0 : i32, i32
  }
  func.func @transform_5(%arg0: i32) -> (i32, i32) {
    %c0_i32 = arith.constant 0 : i32
    %c0_i32_0 = arith.constant 0 : i32
    %c0_i32_1 = arith.constant 0 : i32
    return %c0_i32, %c0_i32_0 : i32, i32
  }
  func.func @transform_6(%arg0: i32) -> (i32, i32) {
    %c0_i32 = arith.constant 0 : i32
    %c0_i32_0 = arith.constant 0 : i32
    %c0_i32_1 = arith.constant 0 : i32
    return %c0_i32, %c0_i32_0 : i32, i32
  }
  func.func @transform_7(%arg0: i32) -> (i32, i32) {
    %c0_i32 = arith.constant 0 : i32
    %c0_i32_0 = arith.constant 0 : i32
    %c0_i32_1 = arith.constant 0 : i32
    return %c0_i32, %c0_i32_0 : i32, i32
  }
  func.func @transform_8(%arg0: i32) -> (i32, i32) {
    %c0_i32 = arith.constant 0 : i32
    %c0_i32_0 = arith.constant 0 : i32
    %c0_i32_1 = arith.constant 0 : i32
    return %c0_i32, %c0_i32_0 : i32, i32
  }
  func.func @transform_9(%arg0: i32) -> (i32, i32) {
    %c0_i32 = arith.constant 0 : i32
    %c0_i32_0 = arith.constant 0 : i32
    %c0_i32_1 = arith.constant 0 : i32
    return %c0_i32, %c0_i32_0 : i32, i32
  }
  func.func @transform_10(%arg0: i32) -> (i32, i32) {
    %c0_i32 = arith.constant 0 : i32
    %c0_i32_0 = arith.constant 0 : i32
    %c0_i32_1 = arith.constant 0 : i32
    return %c0_i32, %c0_i32_0 : i32, i32
  }
  func.func @transform_11(%arg0: i32) -> (i32, i32) {
    %c0_i32 = arith.constant 0 : i32
    %c0_i32_0 = arith.constant 0 : i32
    %c0_i32_1 = arith.constant 0 : i32
    return %c0_i32, %c0_i32_0 : i32, i32
  }
  func.func @transform_12(%arg0: i32) -> (i32, i32) {
    %c0_i32 = arith.constant 0 : i32
    %c0_i32_0 = arith.constant 0 : i32
    %c0_i32_1 = arith.constant 0 : i32
    return %c0_i32, %c0_i32_0 : i32, i32
  }
  func.func @transform_13(%arg0: i32) -> (i32, i32) {
    %c0_i32 = arith.constant 0 : i32
    %c0_i32_0 = arith.constant 0 : i32
    %c0_i32_1 = arith.constant 0 : i32
    return %c0_i32, %c0_i32_0 : i32, i32
  }
  func.func @transform_14(%arg0: i32) -> (i32, i32) {
    %c0_i32 = arith.constant 0 : i32
    %c0_i32_0 = arith.constant 0 : i32
    %c0_i32_1 = arith.constant 0 : i32
    return %c0_i32, %c0_i32_0 : i32, i32
  }
  func.func @transform_15(%arg0: i32) -> (i32, i32) {
    %c0_i32 = arith.constant 0 : i32
    %c0_i32_0 = arith.constant 0 : i32
    %c0_i32_1 = arith.constant 0 : i32
    return %c0_i32, %c0_i32_0 : i32, i32
  }
}

</mosaic_0001>

<llo_original>
// kernel: bsnet_forward.1
$region0: #{bsnet_forward.1}
  #allocation0 [shape = 'u32[]', space=smem, size = 0x4, offset = 0x4, fixed_abs, tag = 'smem constant byte address 0x4 - core index']
  #allocation1 [shape = 'u32[144,128]{1,0:T(1,128)}', space=vmem, size = 0x12000, scoped, tag = 'internal scratch']
  %s0 = inlined_call_operand.vmem [shape: f32[12,16,8], index: 0, kind: input, shape index: {}]
  %s1 = inlined_call_operand.vmem [shape: f32[1,8], index: 1, kind: input, shape index: {}]
  %s2 = inlined_call_operand.vmem [shape: f32[1,8], index: 2, kind: input, shape index: {}]
  %s3 = inlined_call_operand.vmem [shape: f32[8,64], index: 3, kind: input, shape index: {}]
  %s4 = inlined_call_operand.vmem [shape: f32[16,64], index: 4, kind: input, shape index: {}]
  %s5 = inlined_call_operand.vmem [shape: f32[1,64], index: 5, kind: input, shape index: {}]
  %s6 = inlined_call_operand.vmem [shape: f32[16,8], index: 6, kind: input, shape index: {}]
  %s7 = inlined_call_operand.vmem [shape: f32[1,8], index: 7, kind: input, shape index: {}]
  %s8 = inlined_call_operand.vmem [shape: f32[1,8], index: 8, kind: input, shape index: {}]
  %s9 = inlined_call_operand.vmem [shape: f32[1,8], index: 9, kind: input, shape index: {}]
  %s10 = inlined_call_operand.vmem [shape: f32[16,128], index: 10, kind: input, shape index: {}]
  %s11 = inlined_call_operand.vmem [shape: f32[32,128], index: 11, kind: input, shape index: {}]
  %s12 = inlined_call_operand.vmem [shape: f32[1,128], index: 12, kind: input, shape index: {}]
  %s13 = inlined_call_operand.vmem [shape: f32[32,16], index: 13, kind: input, shape index: {}]
  %s14 = inlined_call_operand.vmem [shape: f32[1,8], index: 14, kind: input, shape index: {}]
  %s15 = inlined_call_operand.vmem [shape: f32[168,8], index: 15, kind: output, shape index: {}]
  %s16 = sld [smem:[#allocation0]]
  $region70: #{bsnet_forward.1} parent=0
    _
  %s18 = ssub.s32 1, %s16
  %s19 = scalar_select 0, %s18, %s16
  // Predicated region
  $region2: #{bsnet_forward.1} parent=0 // pred_check
    _
  $region3: #{bsnet_forward.1} parent=0 // pred_check_branch
    %21 = sbr.rel (0) target = $region5
  $region4: #{bsnet_forward.1} parent=0 // pred_region
    _
  $region5: #{bsnet_forward.1} parent=0 // pred_fallthru
    _
  // Predicated region
  $region6: #{bsnet_forward.1} parent=0 // pred_check
    _
  $region7: #{bsnet_forward.1} parent=0 // pred_check_branch
    %23 = sbr.rel (0) target = $region9
  $region8: #{bsnet_forward.1} parent=0 // pred_region
    _
  $region9: #{bsnet_forward.1} parent=0 // pred_fallthru
    _
  // Predicated region
  $region10: #{bsnet_forward.1} parent=0 // pred_check
    _
  $region11: #{bsnet_forward.1} parent=0 // pred_check_branch
    %25 = sbr.rel (0) target = $region13
  $region12: #{bsnet_forward.1} parent=0 // pred_region
    _
  $region13: #{bsnet_forward.1} parent=0 // pred_fallthru
    _
  // Predicated region
  $region14: #{bsnet_forward.1} parent=0 // pred_check
    _
  $region15: #{bsnet_forward.1} parent=0 // pred_check_branch
    %27 = sbr.rel (0) target = $region17
  $region16: #{bsnet_forward.1} parent=0 // pred_region
    _
  $region17: #{bsnet_forward.1} parent=0 // pred_fallthru
    _
  // Predicated region
  $region18: #{bsnet_forward.1} parent=0 // pred_check
    _
  $region19: #{bsnet_forward.1} parent=0 // pred_check_branch
    %29 = sbr.rel (0) target = $region21
  $region20: #{bsnet_forward.1} parent=0 // pred_region
    _
  $region21: #{bsnet_forward.1} parent=0 // pred_fallthru
    _
  // Predicated region
  $region22: #{bsnet_forward.1} parent=0 // pred_check
    _
  $region23: #{bsnet_forward.1} parent=0 // pred_check_branch
    %31 = sbr.rel (0) target = $region25
  $region24: #{bsnet_forward.1} parent=0 // pred_region
    _
  $region25: #{bsnet_forward.1} parent=0 // pred_fallthru
    _
  // Predicated region
  $region26: #{bsnet_forward.1} parent=0 // pred_check
    _
  $region27: #{bsnet_forward.1} parent=0 // pred_check_branch
    %33 = sbr.rel (0) target = $region29
  $region28: #{bsnet_forward.1} parent=0 // pred_region
    _
  $region29: #{bsnet_forward.1} parent=0 // pred_fallthru
    _
  // Predicated region
  $region30: #{bsnet_forward.1} parent=0 // pred_check
    _
  $region31: #{bsnet_forward.1} parent=0 // pred_check_branch
    %35 = sbr.rel (0) target = $region33
  $region32: #{bsnet_forward.1} parent=0 // pred_region
    _
  $region33: #{bsnet_forward.1} parent=0 // pred_fallthru
    _
  // Predicated region
  $region34: #{bsnet_forward.1} parent=0 // pred_check
    _
  $region35: #{bsnet_forward.1} parent=0 // pred_check_branch
    %37 = sbr.rel (0) target = $region37
  $region36: #{bsnet_forward.1} parent=0 // pred_region
    _
  $region37: #{bsnet_forward.1} parent=0 // pred_fallthru
    _
  // Predicated region
  $region38: #{bsnet_forward.1} parent=0 // pred_check
    _
  $region39: #{bsnet_forward.1} parent=0 // pred_check_branch
    %39 = sbr.rel (0) target = $region41
  $region40: #{bsnet_forward.1} parent=0 // pred_region
    _
  $region41: #{bsnet_forward.1} parent=0 // pred_fallthru
    _
  // Predicated region
  $region42: #{bsnet_forward.1} parent=0 // pred_check
    _
  $region43: #{bsnet_forward.1} parent=0 // pred_check_branch
    %41 = sbr.rel (0) target = $region45
  $region44: #{bsnet_forward.1} parent=0 // pred_region
    _
  $region45: #{bsnet_forward.1} parent=0 // pred_fallthru
    _
  // Predicated region
  $region46: #{bsnet_forward.1} parent=0 // pred_check
    _
  $region47: #{bsnet_forward.1} parent=0 // pred_check_branch
    %43 = sbr.rel (0) target = $region49
  $region48: #{bsnet_forward.1} parent=0 // pred_region
    _
  $region49: #{bsnet_forward.1} parent=0 // pred_fallthru
    _
  // Predicated region
  $region50: #{bsnet_forward.1} parent=0 // pred_check
    _
  $region51: #{bsnet_forward.1} parent=0 // pred_check_branch
    %45 = sbr.rel (0) target = $region53
  $region52: #{bsnet_forward.1} parent=0 // pred_region
    _
  $region53: #{bsnet_forward.1} parent=0 // pred_fallthru
    _
  // Predicated region
  $region54: #{bsnet_forward.1} parent=0 // pred_check
    _
  $region55: #{bsnet_forward.1} parent=0 // pred_check_branch
    %47 = sbr.rel (0) target = $region57
  $region56: #{bsnet_forward.1} parent=0 // pred_region
    _
  $region57: #{bsnet_forward.1} parent=0 // pred_fallthru
    _
  // Predicated region
  $region58: #{bsnet_forward.1} parent=0 // pred_check
    _
  $region59: #{bsnet_forward.1} parent=0 // pred_check_branch
    %49 = sbr.rel (0) target = $region61
  $region60: #{bsnet_forward.1} parent=0 // pred_region
    _
  $region61: #{bsnet_forward.1} parent=0 // pred_fallthru
    _
  %v50 = vld [vmem:[%s0] sm:$0xff]
  %v51 = vld [vmem:[%s0 + $0x8] sm:$0xff]
  %v52 = vld [vmem:[%s0 + $0x10] sm:$0xff]
  %v53 = vld [vmem:[%s0 + $0x18] sm:$0xff]
  %v54 = vld [vmem:[%s0 + $0x20] sm:$0xff]
  %v55 = vld [vmem:[%s0 + $0x28] sm:$0xff]
  %v56 = vld [vmem:[%s0 + $0x30] sm:$0xff]
  %v57 = vld [vmem:[%s0 + $0x38] sm:$0xff]
  %v58 = vld [vmem:[%s0 + $0x40] sm:$0xff]
  %v59 = vld [vmem:[%s0 + $0x48] sm:$0xff]
  %v60 = vld [vmem:[%s0 + $0x50] sm:$0xff]
  %v61 = vld [vmem:[%s0 + $0x58] sm:$0xff]
  %v62 = vld [vmem:[%s0 + $0x60] sm:$0xff]
  %v63 = vld [vmem:[%s0 + $0x68] sm:$0xff]
  %v64 = vld [vmem:[%s0 + $0x70] sm:$0xff]
  %v65 = vld [vmem:[%s0 + $0x78] sm:$0xff]
  %v66 = vld [vmem:[%s0 + $0x80] sm:$0xff]
  %v67 = vld [vmem:[%s0 + $0x88] sm:$0xff]
  %v68 = vld [vmem:[%s0 + $0x90] sm:$0xff]
  %v69 = vld [vmem:[%s0 + $0x98] sm:$0xff]
  %v70 = vld [vmem:[%s0 + $0xa0] sm:$0xff]
  %v71 = vld [vmem:[%s0 + $0xa8] sm:$0xff]
  %v72 = vld [vmem:[%s0 + $0xb0] sm:$0xff]
  %v73 = vld [vmem:[%s0 + $0xb8] sm:$0xff]
  %vm74 = vcmask 64512
  %v75 = vsel %vm74, %v50, 0.0
  %76 = vadd.xlane.f32.xlu0 %v75
  %v77 = vpop.xlane.xlu0 %76
  %v78 = vsel %vm74, %v51, 0.0
  %79 = vadd.xlane.f32.xlu0 %v78
  %v80 = vpop.xlane.xlu0 %79
  %v81 = vsel %vm74, %v52, 0.0
  %82 = vadd.xlane.f32.xlu0 %v81
  %v83 = vpop.xlane.xlu0 %82
  %v84 = vsel %vm74, %v53, 0.0
  %85 = vadd.xlane.f32.xlu0 %v84
  %v86 = vpop.xlane.xlu0 %85
  %v87 = vsel %vm74, %v54, 0.0
  %88 = vadd.xlane.f32.xlu0 %v87
  %v89 = vpop.xlane.xlu0 %88
  %v90 = vsel %vm74, %v55, 0.0
  %91 = vadd.xlane.f32.xlu0 %v90
  %v92 = vpop.xlane.xlu0 %91
  %v93 = vsel %vm74, %v56, 0.0
  %94 = vadd.xlane.f32.xlu0 %v93
  %v95 = vpop.xlane.xlu0 %94
  %v96 = vsel %vm74, %v57, 0.0
  %97 = vadd.xlane.f32.xlu0 %v96
  %v98 = vpop.xlane.xlu0 %97
  %v99 = vsel %vm74, %v58, 0.0
  %100 = vadd.xlane.f32.xlu0 %v99
  %v101 = vpop.xlane.xlu0 %100
  %v102 = vsel %vm74, %v59, 0.0
  %103 = vadd.xlane.f32.xlu0 %v102
  %v104 = vpop.xlane.xlu0 %103
  %v105 = vsel %vm74, %v60, 0.0
  %106 = vadd.xlane.f32.xlu0 %v105
  %v107 = vpop.xlane.xlu0 %106
  %v108 = vsel %vm74, %v61, 0.0
  %109 = vadd.xlane.f32.xlu0 %v108
  %v110 = vpop.xlane.xlu0 %109
  %v111 = vsel %vm74, %v62, 0.0
  %112 = vadd.xlane.f32.xlu0 %v111
  %v113 = vpop.xlane.xlu0 %112
  %v114 = vsel %vm74, %v63, 0.0
  %115 = vadd.xlane.f32.xlu0 %v114
  %v116 = vpop.xlane.xlu0 %115
  %v117 = vsel %vm74, %v64, 0.0
  %118 = vadd.xlane.f32.xlu0 %v117
  %v119 = vpop.xlane.xlu0 %118
  %v120 = vsel %vm74, %v65, 0.0
  %121 = vadd.xlane.f32.xlu0 %v120
  %v122 = vpop.xlane.xlu0 %121
  %v123 = vsel %vm74, %v66, 0.0
  %124 = vadd.xlane.f32.xlu0 %v123
  %v125 = vpop.xlane.xlu0 %124
  %v126 = vsel %vm74, %v67, 0.0
  %127 = vadd.xlane.f32.xlu0 %v126
  %v128 = vpop.xlane.xlu0 %127
  %v129 = vsel %vm74, %v68, 0.0
  %130 = vadd.xlane.f32.xlu0 %v129
  %v131 = vpop.xlane.xlu0 %130
  %v132 = vsel %vm74, %v69, 0.0
  %133 = vadd.xlane.f32.xlu0 %v132
  %v134 = vpop.xlane.xlu0 %133
  %v135 = vsel %vm74, %v70, 0.0
  %136 = vadd.xlane.f32.xlu0 %v135
  %v137 = vpop.xlane.xlu0 %136
  %v138 = vsel %vm74, %v71, 0.0
  %139 = vadd.xlane.f32.xlu0 %v138
  %v140 = vpop.xlane.xlu0 %139
  %v141 = vsel %vm74, %v72, 0.0
  %142 = vadd.xlane.f32.xlu0 %v141
  %v143 = vpop.xlane.xlu0 %142
  %v144 = vsel %vm74, %v73, 0.0
  %145 = vadd.xlane.f32.xlu0 %v144
  %v146 = vpop.xlane.xlu0 %145
  %v147 = vrcp.pop 8.0
  %v148 = vmul.f32 %v77, %v147
  %v149 = vmul.f32 %v80, %v147
  %v150 = vmul.f32 %v83, %v147
  %v151 = vmul.f32 %v86, %v147
  %v152 = vmul.f32 %v89, %v147
  %v153 = vmul.f32 %v92, %v147
  %v154 = vmul.f32 %v95, %v147
  %v155 = vmul.f32 %v98, %v147
  %v156 = vmul.f32 %v101, %v147
  %v157 = vmul.f32 %v104, %v147
  %v158 = vmul.f32 %v107, %v147
  %v159 = vmul.f32 %v110, %v147
  %v160 = vmul.f32 %v113, %v147
  %v161 = vmul.f32 %v116, %v147
  %v162 = vmul.f32 %v119, %v147
  %v163 = vmul.f32 %v122, %v147
  %v164 = vmul.f32 %v125, %v147
  %v165 = vmul.f32 %v128, %v147
  %v166 = vmul.f32 %v131, %v147
  %v167 = vmul.f32 %v134, %v147
  %v168 = vmul.f32 %v137, %v147
  %v169 = vmul.f32 %v140, %v147
  %v170 = vmul.f32 %v143, %v147
  %v171 = vmul.f32 %v146, %v147
  %v172 = vadd.f32 %v148, %v150
  %v173 = vadd.f32 %v172, %v152
  %v174 = vadd.f32 %v173, %v154
  %v175 = vadd.f32 %v174, %v156
  %v176 = vadd.f32 %v175, %v158
  %v177 = vadd.f32 %v176, %v160
  %v178 = vadd.f32 %v177, %v162
  %v179 = vadd.f32 %v178, %v164
  %v180 = vadd.f32 %v179, %v166
  %v181 = vadd.f32 %v180, %v168
  %v182 = vadd.f32 %v181, %v170
  %v183 = vadd.f32 %v149, %v151
  %v184 = vadd.f32 %v183, %v153
  %v185 = vadd.f32 %v184, %v155
  %v186 = vadd.f32 %v185, %v157
  %v187 = vadd.f32 %v186, %v159
  %v188 = vadd.f32 %v187, %v161
  %v189 = vadd.f32 %v188, %v163
  %v190 = vadd.f32 %v189, %v165
  %v191 = vadd.f32 %v190, %v167
  %v192 = vadd.f32 %v191, %v169
  %v193 = vadd.f32 %v192, %v171
  %v194 = vrcp.pop 12.0
  %v195 = vmul.f32 %v182, %v194
  %v196 = vmul.f32 %v193, %v194
  %v197 = vsub.f32 %v50, %v195
  %v198 = vsub.f32 %v51, %v196
  %v199 = vsub.f32 %v52, %v195
  %v200 = vsub.f32 %v53, %v196
  %v201 = vsub.f32 %v54, %v195
  %v202 = vsub.f32 %v55, %v196
  %v203 = vsub.f32 %v56, %v195
  %v204 = vsub.f32 %v57, %v196
  %v205 = vsub.f32 %v58, %v195
  %v206 = vsub.f32 %v59, %v196
  %v207 = vsub.f32 %v60, %v195
  %v208 = vsub.f32 %v61, %v196
  %v209 = vsub.f32 %v62, %v195
  %v210 = vsub.f32 %v63, %v196
  %v211 = vsub.f32 %v64, %v195
  %v212 = vsub.f32 %v65, %v196
  %v213 = vsub.f32 %v66, %v195
  %v214 = vsub.f32 %v67, %v196
  %v215 = vsub.f32 %v68, %v195
  %v216 = vsub.f32 %v69, %v196
  %v217 = vsub.f32 %v70, %v195
  %v218 = vsub.f32 %v71, %v196
  %v219 = vsub.f32 %v72, %v195
  %v220 = vsub.f32 %v73, %v196
  %v221 = vmul.f32 %v197, %v197
  %v222 = vmul.f32 %v198, %v198
  %v223 = vmul.f32 %v199, %v199
  %v224 = vmul.f32 %v200, %v200
  %v225 = vmul.f32 %v201, %v201
  %v226 = vmul.f32 %v202, %v202
  %v227 = vmul.f32 %v203, %v203
  %v228 = vmul.f32 %v204, %v204
  %v229 = vmul.f32 %v205, %v205
  %v230 = vmul.f32 %v206, %v206
  %v231 = vmul.f32 %v207, %v207
  %v232 = vmul.f32 %v208, %v208
  %v233 = vmul.f32 %v209, %v209
  %v234 = vmul.f32 %v210, %v210
  %v235 = vmul.f32 %v211, %v211
  %v236 = vmul.f32 %v212, %v212
  %v237 = vmul.f32 %v213, %v213
  %v238 = vmul.f32 %v214, %v214
  %v239 = vmul.f32 %v215, %v215
  %v240 = vmul.f32 %v216, %v216
  %v241 = vmul.f32 %v217, %v217
  %v242 = vmul.f32 %v218, %v218
  %v243 = vmul.f32 %v219, %v219
  %v244 = vmul.f32 %v220, %v220
  %v245 = vsel %vm74, %v221, 0.0
  %246 = vadd.xlane.f32.xlu0 %v245
  %v247 = vpop.xlane.xlu0 %246
  %v248 = vsel %vm74, %v222, 0.0
  %249 = vadd.xlane.f32.xlu0 %v248
  %v250 = vpop.xlane.xlu0 %249
  %v251 = vsel %vm74, %v223, 0.0
  %252 = vadd.xlane.f32.xlu0 %v251
  %v253 = vpop.xlane.xlu0 %252
  %v254 = vsel %vm74, %v224, 0.0
  %255 = vadd.xlane.f32.xlu0 %v254
  %v256 = vpop.xlane.xlu0 %255
  %v257 = vsel %vm74, %v225, 0.0
  %258 = vadd.xlane.f32.xlu0 %v257
  %v259 = vpop.xlane.xlu0 %258
  %v260 = vsel %vm74, %v226, 0.0
  %261 = vadd.xlane.f32.xlu0 %v260
  %v262 = vpop.xlane.xlu0 %261
  %v263 = vsel %vm74, %v227, 0.0
  %264 = vadd.xlane.f32.xlu0 %v263
  %v265 = vpop.xlane.xlu0 %264
  %v266 = vsel %vm74, %v228, 0.0
  %267 = vadd.xlane.f32.xlu0 %v266
  %v268 = vpop.xlane.xlu0 %267
  %v269 = vsel %vm74, %v229, 0.0
  %270 = vadd.xlane.f32.xlu0 %v269
  %v271 = vpop.xlane.xlu0 %270
  %v272 = vsel %vm74, %v230, 0.0
  %273 = vadd.xlane.f32.xlu0 %v272
  %v274 = vpop.xlane.xlu0 %273
  %v275 = vsel %vm74, %v231, 0.0
  %276 = vadd.xlane.f32.xlu0 %v275
  %v277 = vpop.xlane.xlu0 %276
  %v278 = vsel %vm74, %v232, 0.0
  %279 = vadd.xlane.f32.xlu0 %v278
  %v280 = vpop.xlane.xlu0 %279
  %v281 = vsel %vm74, %v233, 0.0
  %282 = vadd.xlane.f32.xlu0 %v281
  %v283 = vpop.xlane.xlu0 %282
  %v284 = vsel %vm74, %v234, 0.0
  %285 = vadd.xlane.f32.xlu0 %v284
  %v286 = vpop.xlane.xlu0 %285
  %v287 = vsel %vm74, %v235, 0.0
  %288 = vadd.xlane.f32.xlu0 %v287
  %v289 = vpop.xlane.xlu0 %288
  %v290 = vsel %vm74, %v236, 0.0
  %291 = vadd.xlane.f32.xlu0 %v290
  %v292 = vpop.xlane.xlu0 %291
  %v293 = vsel %vm74, %v237, 0.0
  %294 = vadd.xlane.f32.xlu0 %v293
  %v295 = vpop.xlane.xlu0 %294
  %v296 = vsel %vm74, %v238, 0.0
  %297 = vadd.xlane.f32.xlu0 %v296
  %v298 = vpop.xlane.xlu0 %297
  %v299 = vsel %vm74, %v239, 0.0
  %300 = vadd.xlane.f32.xlu0 %v299
  %v301 = vpop.xlane.xlu0 %300
  %v302 = vsel %vm74, %v240, 0.0
  %303 = vadd.xlane.f32.xlu0 %v302
  %v304 = vpop.xlane.xlu0 %303
  %v305 = vsel %vm74, %v241, 0.0
  %306 = vadd.xlane.f32.xlu0 %v305
  %v307 = vpop.xlane.xlu0 %306
  %v308 = vsel %vm74, %v242, 0.0
  %309 = vadd.xlane.f32.xlu0 %v308
  %v310 = vpop.xlane.xlu0 %309
  %v311 = vsel %vm74, %v243, 0.0
  %312 = vadd.xlane.f32.xlu0 %v311
  %v313 = vpop.xlane.xlu0 %312
  %v314 = vsel %vm74, %v244, 0.0
  %315 = vadd.xlane.f32.xlu0 %v314
  %v316 = vpop.xlane.xlu0 %315
  %v317 = vmul.f32 %v247, %v147
  %v318 = vmul.f32 %v250, %v147
  %v319 = vmul.f32 %v253, %v147
  %v320 = vmul.f32 %v256, %v147
  %v321 = vmul.f32 %v259, %v147
  %v322 = vmul.f32 %v262, %v147
  %v323 = vmul.f32 %v265, %v147
  %v324 = vmul.f32 %v268, %v147
  %v325 = vmul.f32 %v271, %v147
  %v326 = vmul.f32 %v274, %v147
  %v327 = vmul.f32 %v277, %v147
  %v328 = vmul.f32 %v280, %v147
  %v329 = vmul.f32 %v283, %v147
  %v330 = vmul.f32 %v286, %v147
  %v331 = vmul.f32 %v289, %v147
  %v332 = vmul.f32 %v292, %v147
  %v333 = vmul.f32 %v295, %v147
  %v334 = vmul.f32 %v298, %v147
  %v335 = vmul.f32 %v301, %v147
  %v336 = vmul.f32 %v304, %v147
  %v337 = vmul.f32 %v307, %v147
  %v338 = vmul.f32 %v310, %v147
  %v339 = vmul.f32 %v313, %v147
  %v340 = vmul.f32 %v316, %v147
  %v341 = vadd.f32 %v317, %v319
  %v342 = vadd.f32 %v341, %v321
  %v343 = vadd.f32 %v342, %v323
  %v344 = vadd.f32 %v343, %v325
  %v345 = vadd.f32 %v344, %v327
  %v346 = vadd.f32 %v345, %v329
  %v347 = vadd.f32 %v346, %v331
  %v348 = vadd.f32 %v347, %v333
  %v349 = vadd.f32 %v348, %v335
  %v350 = vadd.f32 %v349, %v337
  %v351 = vadd.f32 %v350, %v339
  %v352 = vadd.f32 %v318, %v320
  %v353 = vadd.f32 %v352, %v322
  %v354 = vadd.f32 %v353, %v324
  %v355 = vadd.f32 %v354, %v326
  %v356 = vadd.f32 %v355, %v328
  %v357 = vadd.f32 %v356, %v330
  %v358 = vadd.f32 %v357, %v332
  %v359 = vadd.f32 %v358, %v334
  %v360 = vadd.f32 %v359, %v336
  %v361 = vadd.f32 %v360, %v338
  %v362 = vadd.f32 %v361, %v340
  %v363 = vmul.f32 %v351, %v194
  %v364 = vmul.f32 %v362, %v194
  %v365 = vadd.f32 %v363, 1.1920929e-07
  %v366 = vadd.f32 %v364, 1.1920929e-07
  %v367 = vrsqrt.pop %v365
  %v368 = vrsqrt.pop %v366
  %v369 = vmul.f32 %v197, %v367
  %v370 = vmul.f32 %v198, %v368
  %v371 = vmul.f32 %v199, %v367
  %v372 = vmul.f32 %v200, %v368
  %v373 = vmul.f32 %v201, %v367
  %v374 = vmul.f32 %v202, %v368
  %v375 = vmul.f32 %v203, %v367
  %v376 = vmul.f32 %v204, %v368
  %v377 = vmul.f32 %v205, %v367
  %v378 = vmul.f32 %v206, %v368
  %v379 = vmul.f32 %v207, %v367
  %v380 = vmul.f32 %v208, %v368
  %v381 = vmul.f32 %v209, %v367
  %v382 = vmul.f32 %v210, %v368
  %v383 = vmul.f32 %v211, %v367
  %v384 = vmul.f32 %v212, %v368
  %v385 = vmul.f32 %v213, %v367
  %v386 = vmul.f32 %v214, %v368
  %v387 = vmul.f32 %v215, %v367
  %v388 = vmul.f32 %v216, %v368
  %v389 = vmul.f32 %v217, %v367
  %v390 = vmul.f32 %v218, %v368
  %v391 = vmul.f32 %v219, %v367
  %v392 = vmul.f32 %v220, %v368
  %v393 = vld [vmem:[%s1] sm:$0x1]
  %v395 = vlaneseq
  %v396 = vshrl.u32 %v395, 7
  %v397 = vsub.s32 0, %v396
  %v398 = vrot.slane %v393, %v397
  %v400 = vmul.f32 %v369, %v398
  %v401 = vmul.f32 %v370, %v398
  %v402 = vmul.f32 %v371, %v398
  %v403 = vmul.f32 %v372, %v398
  %v404 = vmul.f32 %v373, %v398
  %v405 = vmul.f32 %v374, %v398
  %v406 = vmul.f32 %v375, %v398
  %v407 = vmul.f32 %v376, %v398
  %v408 = vmul.f32 %v377, %v398
  %v409 = vmul.f32 %v378, %v398
  %v410 = vmul.f32 %v379, %v398
  %v411 = vmul.f32 %v380, %v398
  %v412 = vmul.f32 %v381, %v398
  %v413 = vmul.f32 %v382, %v398
  %v414 = vmul.f32 %v383, %v398
  %v415 = vmul.f32 %v384, %v398
  %v416 = vmul.f32 %v385, %v398
  %v417 = vmul.f32 %v386, %v398
  %v418 = vmul.f32 %v387, %v398
  %v419 = vmul.f32 %v388, %v398
  %v420 = vmul.f32 %v389, %v398
  %v421 = vmul.f32 %v390, %v398
  %v422 = vmul.f32 %v391, %v398
  %v423 = vmul.f32 %v392, %v398
  %v424 = vld [vmem:[%s2] sm:$0x1]
  %v426 = vlaneseq
  %v427 = vshrl.u32 %v426, 7
  %v428 = vsub.s32 0, %v427
  %v429 = vrot.slane %v424, %v428
  %v431 = vadd.f32 %v400, %v429
  %v432 = vadd.f32 %v401, %v429
  %v433 = vadd.f32 %v402, %v429
  %v434 = vadd.f32 %v403, %v429
  %v435 = vadd.f32 %v404, %v429
  %v436 = vadd.f32 %v405, %v429
  %v437 = vadd.f32 %v406, %v429
  %v438 = vadd.f32 %v407, %v429
  %v439 = vadd.f32 %v408, %v429
  %v440 = vadd.f32 %v409, %v429
  %v441 = vadd.f32 %v410, %v429
  %v442 = vadd.f32 %v411, %v429
  %v443 = vadd.f32 %v412, %v429
  %v444 = vadd.f32 %v413, %v429
  %v445 = vadd.f32 %v414, %v429
  %v446 = vadd.f32 %v415, %v429
  %v447 = vadd.f32 %v416, %v429
  %v448 = vadd.f32 %v417, %v429
  %v449 = vadd.f32 %v418, %v429
  %v450 = vadd.f32 %v419, %v429
  %v451 = vadd.f32 %v420, %v429
  %v452 = vadd.f32 %v421, %v429
  %v453 = vadd.f32 %v422, %v429
  %v454 = vadd.f32 %v423, %v429
  %v455 = vld [vmem:[%s3] sm:$0xff]
  %v456 = vld [vmem:[%s5] sm:$0x1]
  %v458 = vlaneseq
  %v459 = vshrl.u32 %v458, 7
  %v460 = vsub.s32 0, %v459
  %v461 = vrot.slane %v456, %v460
  %v464 = vsel %vm74, %v431, 0
  %v467 = vsel %vm74, %v432, 0
  %v470 = vsel %vm74, %v433, 0
  %v473 = vsel %vm74, %v434, 0
  %v476 = vsel %vm74, %v435, 0
  %v479 = vsel %vm74, %v436, 0
  %v482 = vsel %vm74, %v437, 0
  %v485 = vsel %vm74, %v438, 0
  %v488 = vsel %vm74, %v439, 0
  %v491 = vsel %vm74, %v440, 0
  %v494 = vsel %vm74, %v441, 0
  %v497 = vsel %vm74, %v442, 0
  %v500 = vsel %vm74, %v443, 0
  %v503 = vsel %vm74, %v444, 0
  %v506 = vsel %vm74, %v445, 0
  %v509 = vsel %vm74, %v446, 0
  %v512 = vsel %vm74, %v447, 0
  %v515 = vsel %vm74, %v448, 0
  %v518 = vsel %vm74, %v449, 0
  %v521 = vsel %vm74, %v450, 0
  %v524 = vsel %vm74, %v451, 0
  %v527 = vsel %vm74, %v452, 0
  %v530 = vsel %vm74, %v453, 0
  %v533 = vsel %vm74, %v454, 0
  %535 = vmatprep.subr.mxu0 0.0
  %536 = vmatpush1.msra.mxu0 %v455
  %537 = vmatprep.subr.mxu0 0.0
  %538 = vmatpush1.msra.mxu0 0.0
  %539 = vmatprep.subr.mxu0 0.0
  %540 = vmatpush1.msra.mxu0 0.0
  %541 = vmatprep.subr.mxu0 0.0
  %542 = vmatpush1.msra.mxu0 0.0
  %543 = vmatprep.subr.mxu0 0.0
  %544 = vmatpush1.msra.mxu0 0.0
  %545 = vmatprep.subr.mxu0 0.0
  %546 = vmatpush1.msra.mxu0 0.0
  %547 = vmatprep.subr.mxu0 0.0
  %548 = vmatpush1.msra.mxu0 0.0
  %549 = vmatprep.subr.mxu0 0.0
  %550 = vmatpush1.msra.mxu0 0.0
  %551 = vmatprep.subr.mxu0 0.0
  %552 = vmatpush1.msra.mxu0 0.0
  %553 = vmatprep.subr.mxu0 0.0
  %554 = vmatpush1.msra.mxu0 0.0
  %555 = vmatprep.subr.mxu0 0.0
  %556 = vmatpush1.msra.mxu0 0.0
  %557 = vmatprep.subr.mxu0 0.0
  %558 = vmatpush1.msra.mxu0 0.0
  %559 = vmatprep.subr.mxu0 0.0
  %560 = vmatpush1.msra.mxu0 0.0
  %561 = vmatprep.subr.mxu0 0.0
  %562 = vmatpush1.msra.mxu0 0.0
  %563 = vmatprep.subr.mxu0 0.0
  %564 = vmatpush1.msra.mxu0 0.0
  %565 = vmatprep.subr.mxu0 0.0
  %566 = vmatpush1.msra.mxu0 0.0
  %567 = vmatprep.subr.mxu0 0.0
  %568 = vmatpush1.msra.mxu0 0.0
  %569 = vmatprep.subr.mxu0 0.0
  %570 = vmatpush1.msra.mxu0 0.0
  %571 = vmatprep.subr.mxu0 0.0
  %572 = vmatpush1.msra.mxu0 0.0
  %573 = vmatprep.subr.mxu0 0.0
  %574 = vmatpush1.msra.mxu0 0.0
  %575 = vmatprep.subr.mxu0 0.0
  %576 = vmatpush1.msra.mxu0 0.0
  %577 = vmatprep.subr.mxu0 0.0
  %578 = vmatpush1.msra.mxu0 0.0
  %579 = vmatprep.subr.mxu0 0.0
  %580 = vmatpush1.msra.mxu0 0.0
  %581 = vmatprep.subr.mxu0 0.0
  %582 = vmatpush1.msra.mxu0 0.0
  %583 = vmatprep.subr.mxu0 0.0
  %584 = vmatpush1.msra.mxu0 0.0
  %585 = vmatprep.subr.mxu0 0.0
  %586 = vmatpush1.msra.mxu0 0.0
  %587 = vmatprep.subr.mxu0 0.0
  %588 = vmatpush1.msra.mxu0 0.0
  %589 = vmatprep.subr.mxu0 0.0
  %590 = vmatpush1.msra.mxu0 0.0
  %591 = vmatprep.subr.mxu0 0.0
  %592 = vmatpush1.msra.mxu0 0.0
  %593 = vmatprep.subr.mxu0 0.0
  %594 = vmatpush1.msra.mxu0 0.0
  %595 = vmatprep.subr.mxu0 0.0
  %596 = vmatpush1.msra.mxu0 0.0
  %597 = vmatprep.subr.mxu0 0.0
  %598 = vmatpush1.msra.mxu0 0.0
  %599 = vmatprep.mubr.f32.mxu0 0.0
  %600 = vmatmul.mubr.f32.gmra.mrb[0].mxu0 %v464
  %v601 = vpop.f32.mrb[0].mxu0
  %v602 = vadd.f32 %v461, %v601
  %v603 = vpop.f32.mrb[0].mxu0
  %604 = vmatprep.mubr.f32.mxu0 0.0
  %605 = vmatmul.mubr.f32.gmra.mrb[0].mxu0 %v467
  %v606 = vpop.f32.mrb[0].mxu0
  %v607 = vadd.f32 %v461, %v606
  %v608 = vpop.f32.mrb[0].mxu0
  %609 = vmatprep.mubr.f32.mxu0 0.0
  %610 = vmatmul.mubr.f32.gmra.mrb[0].mxu0 %v470
  %v611 = vpop.f32.mrb[0].mxu0
  %v612 = vadd.f32 %v461, %v611
  %v613 = vpop.f32.mrb[0].mxu0
  %614 = vmatprep.mubr.f32.mxu0 0.0
  %615 = vmatmul.mubr.f32.gmra.mrb[0].mxu0 %v473
  %v616 = vpop.f32.mrb[0].mxu0
  %v617 = vadd.f32 %v461, %v616
  %v618 = vpop.f32.mrb[0].mxu0
  %619 = vmatprep.mubr.f32.mxu0 0.0
  %620 = vmatmul.mubr.f32.gmra.mrb[0].mxu0 %v476
  %v621 = vpop.f32.mrb[0].mxu0
  %v622 = vadd.f32 %v461, %v621
  %v623 = vpop.f32.mrb[0].mxu0
  %624 = vmatprep.mubr.f32.mxu0 0.0
  %625 = vmatmul.mubr.f32.gmra.mrb[0].mxu0 %v479
  %v626 = vpop.f32.mrb[0].mxu0
  %v627 = vadd.f32 %v461, %v626
  %v628 = vpop.f32.mrb[0].mxu0
  %629 = vmatprep.mubr.f32.mxu0 0.0
  %630 = vmatmul.mubr.f32.gmra.mrb[0].mxu0 %v482
  %v631 = vpop.f32.mrb[0].mxu0
  %v632 = vadd.f32 %v461, %v631
  %v633 = vpop.f32.mrb[0].mxu0
  %634 = vmatprep.mubr.f32.mxu0 0.0
  %635 = vmatmul.mubr.f32.gmra.mrb[0].mxu0 %v485
  %v636 = vpop.f32.mrb[0].mxu0
  %v637 = vadd.f32 %v461, %v636
  %v638 = vpop.f32.mrb[0].mxu0
  %639 = vmatprep.mubr.f32.mxu0 0.0
  %640 = vmatmul.mubr.f32.gmra.mrb[0].mxu0 %v488
  %v641 = vpop.f32.mrb[0].mxu0
  %v642 = vadd.f32 %v461, %v641
  %v643 = vpop.f32.mrb[0].mxu0
  %644 = vmatprep.mubr.f32.mxu0 0.0
  %645 = vmatmul.mubr.f32.gmra.mrb[0].mxu0 %v491
  %v646 = vpop.f32.mrb[0].mxu0
  %v647 = vadd.f32 %v461, %v646
  %v648 = vpop.f32.mrb[0].mxu0
  %649 = vmatprep.mubr.f32.mxu0 0.0
  %650 = vmatmul.mubr.f32.gmra.mrb[0].mxu0 %v494
  %v651 = vpop.f32.mrb[0].mxu0
  %v652 = vadd.f32 %v461, %v651
  %v653 = vpop.f32.mrb[0].mxu0
  %654 = vmatprep.mubr.f32.mxu0 0.0
  %655 = vmatmul.mubr.f32.gmra.mrb[0].mxu0 %v497
  %v656 = vpop.f32.mrb[0].mxu0
  %v657 = vadd.f32 %v461, %v656
  %v658 = vpop.f32.mrb[0].mxu0
  %659 = vmatprep.mubr.f32.mxu0 0.0
  %660 = vmatmul.mubr.f32.gmra.mrb[0].mxu0 %v500
  %v661 = vpop.f32.mrb[0].mxu0
  %v662 = vadd.f32 %v461, %v661
  %v663 = vpop.f32.mrb[0].mxu0
  %664 = vmatprep.mubr.f32.mxu0 0.0
  %665 = vmatmul.mubr.f32.gmra.mrb[0].mxu0 %v503
  %v666 = vpop.f32.mrb[0].mxu0
  %v667 = vadd.f32 %v461, %v666
  %v668 = vpop.f32.mrb[0].mxu0
  %669 = vmatprep.mubr.f32.mxu0 0.0
  %670 = vmatmul.mubr.f32.gmra.mrb[0].mxu0 %v506
  %v671 = vpop.f32.mrb[0].mxu0
  %v672 = vadd.f32 %v461, %v671
  %v673 = vpop.f32.mrb[0].mxu0
  %674 = vmatprep.mubr.f32.mxu0 0.0
  %675 = vmatmul.mubr.f32.gmra.mrb[0].mxu0 %v509
  %v676 = vpop.f32.mrb[0].mxu0
  %v677 = vadd.f32 %v461, %v676
  %v678 = vpop.f32.mrb[0].mxu0
  %679 = vmatprep.mubr.f32.mxu0 0.0
  %680 = vmatmul.mubr.f32.gmra.mrb[0].mxu0 %v512
  %v681 = vpop.f32.mrb[0].mxu0
  %v682 = vadd.f32 %v461, %v681
  %v683 = vpop.f32.mrb[0].mxu0
  %684 = vmatprep.mubr.f32.mxu0 0.0
  %685 = vmatmul.mubr.f32.gmra.mrb[0].mxu0 %v515
  %v686 = vpop.f32.mrb[0].mxu0
  %v687 = vadd.f32 %v461, %v686
  %v688 = vpop.f32.mrb[0].mxu0
  %689 = vmatprep.mubr.f32.mxu0 0.0
  %690 = vmatmul.mubr.f32.gmra.mrb[0].mxu0 %v518
  %v691 = vpop.f32.mrb[0].mxu0
  %v692 = vadd.f32 %v461, %v691
  %v693 = vpop.f32.mrb[0].mxu0
  %694 = vmatprep.mubr.f32.mxu0 0.0
  %695 = vmatmul.mubr.f32.gmra.mrb[0].mxu0 %v521
  %v696 = vpop.f32.mrb[0].mxu0
  %v697 = vadd.f32 %v461, %v696
  %v698 = vpop.f32.mrb[0].mxu0
  %699 = vmatprep.mubr.f32.mxu0 0.0
  %700 = vmatmul.mubr.f32.gmra.mrb[0].mxu0 %v524
  %v701 = vpop.f32.mrb[0].mxu0
  %v702 = vadd.f32 %v461, %v701
  %v703 = vpop.f32.mrb[0].mxu0
  %704 = vmatprep.mubr.f32.mxu0 0.0
  %705 = vmatmul.mubr.f32.gmra.mrb[0].mxu0 %v527
  %v706 = vpop.f32.mrb[0].mxu0
  %v707 = vadd.f32 %v461, %v706
  %v708 = vpop.f32.mrb[0].mxu0
  %709 = vmatprep.mubr.f32.mxu0 0.0
  %710 = vmatmul.mubr.f32.gmra.mrb[0].mxu0 %v530
  %v711 = vpop.f32.mrb[0].mxu0
  %v712 = vadd.f32 %v461, %v711
  %v713 = vpop.f32.mrb[0].mxu0
  %714 = vmatprep.mubr.f32.mxu0 0.0
  %715 = vmatmul.mubr.f32.gmra.mrb[0].mxu0 %v533
  %v716 = vpop.f32.mrb[0].mxu0
  %v717 = vadd.f32 %v461, %v716
  %v718 = vpop.f32.mrb[0].mxu0
  %719 = vdwg.mxu0
  %v720 = vld [vmem:[%s4] sm:$0xff]
  %v721 = vld [vmem:[%s4 + $0x8] sm:$0xff]
  %vm722 = vcmask 130048
  %v724 = vsel %vm722, 0.0, 0
  %726 = vmatprep.subr.mxu0 0.0
  %727 = vmatpush1.msra.mxu0 %v720
  %728 = vmatprep.subr.mxu0 0.0
  %729 = vmatpush1.msra.mxu0 %v721
  %730 = vmatprep.subr.mxu0 0.0
  %731 = vmatpush1.msra.mxu0 0.0
  %732 = vmatprep.subr.mxu0 0.0
  %733 = vmatpush1.msra.mxu0 0.0
  %734 = vmatprep.subr.mxu0 0.0
  %735 = vmatpush1.msra.mxu0 0.0
  %736 = vmatprep.subr.mxu0 0.0
  %737 = vmatpush1.msra.mxu0 0.0
  %738 = vmatprep.subr.mxu0 0.0
  %739 = vmatpush1.msra.mxu0 0.0
  %740 = vmatprep.subr.mxu0 0.0
  %741 = vmatpush1.msra.mxu0 0.0
  %742 = vmatprep.subr.mxu0 0.0
  %743 = vmatpush1.msra.mxu0 0.0
  %744 = vmatprep.subr.mxu0 0.0
  %745 = vmatpush1.msra.mxu0 0.0
  %746 = vmatprep.subr.mxu0 0.0
  %747 = vmatpush1.msra.mxu0 0.0
  %748 = vmatprep.subr.mxu0 0.0
  %749 = vmatpush1.msra.mxu0 0.0
  %750 = vmatprep.subr.mxu0 0.0
  %751 = vmatpush1.msra.mxu0 0.0
  %752 = vmatprep.subr.mxu0 0.0
  %753 = vmatpush1.msra.mxu0 0.0
  %754 = vmatprep.subr.mxu0 0.0
  %755 = vmatpush1.msra.mxu0 0.0
  %756 = vmatprep.subr.mxu0 0.0
  %757 = vmatpush1.msra.mxu0 0.0
  %758 = vmatprep.subr.mxu0 0.0
  %759 = vmatpush1.msra.mxu0 0.0
  %760 = vmatprep.subr.mxu0 0.0
  %761 = vmatpush1.msra.mxu0 0.0
  %762 = vmatprep.subr.mxu0 0.0
  %763 = vmatpush1.msra.mxu0 0.0
  %764 = vmatprep.subr.mxu0 0.0
  %765 = vmatpush1.msra.mxu0 0.0
  %766 = vmatprep.subr.mxu0 0.0
  %767 = vmatpush1.msra.mxu0 0.0
  %768 = vmatprep.subr.mxu0 0.0
  %769 = vmatpush1.msra.mxu0 0.0
  %770 = vmatprep.subr.mxu0 0.0
  %771 = vmatpush1.msra.mxu0 0.0
  %772 = vmatprep.subr.mxu0 0.0
  %773 = vmatpush1.msra.mxu0 0.0
  %774 = vmatprep.subr.mxu0 0.0
  %775 = vmatpush1.msra.mxu0 0.0
  %776 = vmatprep.subr.mxu0 0.0
  %777 = vmatpush1.msra.mxu0 0.0
  %778 = vmatprep.subr.mxu0 0.0
  %779 = vmatpush1.msra.mxu0 0.0
  %780 = vmatprep.subr.mxu0 0.0
  %781 = vmatpush1.msra.mxu0 0.0
  %782 = vmatprep.subr.mxu0 0.0
  %783 = vmatpush1.msra.mxu0 0.0
  %784 = vmatprep.subr.mxu0 0.0
  %785 = vmatpush1.msra.mxu0 0.0
  %786 = vmatprep.subr.mxu0 0.0
  %787 = vmatpush1.msra.mxu0 0.0
  %788 = vmatprep.subr.mxu0 0.0
  %789 = vmatpush1.msra.mxu0 0.0
  %790 = vmatprep.mubr.f32.mxu0 0.0
  %791 = vmatmul.mubr.f32.gmra.mrb[0].mxu0 %v724
  %v792 = vpop.f32.mrb[0].mxu0
  %v793 = vadd.f32 0.0, %v792
  %v794 = vpop.f32.mrb[0].mxu0
  %795 = vmatprep.mubr.f32.mxu0 0.0
  %796 = vmatmul.mubr.f32.gmra.mrb[0].mxu0 %v724
  %v797 = vpop.f32.mrb[0].mxu0
  %v798 = vadd.f32 0.0, %v797
  %v799 = vpop.f32.mrb[0].mxu0
  %800 = vdwg.mxu0
  %v801 = vadd.f32 %v602, %v793
  %v802 = vadd.f32 %v607, %v798
  %v803 = vxor.u32 %v801, 2147483648
  %v804 = vxor.u32 %v802, 2147483648
  %v805 = vmul.f32 %v803, 1.442695
  %v806 = vpow.pop %v805
  %v807 = vmul.f32 %v804, 1.442695
  %v808 = vpow.pop %v807
  %v809 = vadd.f32 %v806, 1.0
  %v810 = vadd.f32 %v808, 1.0
  %v811 = vrcp.pop %v809
  %v812 = vmul.f32 1.0, %v811
  %v813 = vrcp.pop %v810
  %v814 = vmul.f32 1.0, %v813
  %v815 = vtanh.pop %v801
  %v816 = vtanh.pop %v802
  %v817 = vmul.f32 %v812, 0.0
  %v818 = vmul.f32 %v814, 0.0
  %821 = vrot.lane.b32.xlu0 %v815, 96
  %v822 = vpop.permute.xlu0 %821
  %823 = vrot.lane.b32.xlu0 %v816, 96
  %v824 = vpop.permute.xlu0 %823
  %v827 = vmul.f32 %v812, %v822
  %v828 = vmul.f32 %v814, %v824
  %831 = vrot.lane.b32.xlu0 %v827, 16
  %v832 = vpop.permute.xlu0 %831
  %833 = vrot.lane.b32.xlu0 %v828, 16
  %v834 = vpop.permute.xlu0 %833
  %v837 = vadd.f32 %v817, %v832
  %v838 = vadd.f32 %v818, %v834
  %v839 = vtanh.pop %v837
  %v840 = vtanh.pop %v838
  %843 = vrot.lane.b32.xlu0 %v839, 32
  %v844 = vpop.permute.xlu0 %843
  %845 = vrot.lane.b32.xlu0 %v840, 32
  %v846 = vpop.permute.xlu0 %845
  %v849 = vmul.f32 %v812, %v844
  %v850 = vmul.f32 %v814, %v846
  %853 = vrot.lane.b32.xlu0 %v849, 80
  %v854 = vpop.permute.xlu0 %853
  %855 = vrot.lane.b32.xlu0 %v850, 80
  %v856 = vpop.permute.xlu0 %855
  %v857 = vsel %vm722, %v854, 0
  %v859 = vsel %vm722, %v856, 0
  %861 = vmatprep.subr.mxu0 0.0
  %862 = vmatpush1.msra.mxu0 %v720
  %863 = vmatprep.subr.mxu0 0.0
  %864 = vmatpush1.msra.mxu0 %v721
  %865 = vmatprep.subr.mxu0 0.0
  %866 = vmatpush1.msra.mxu0 0.0
  %867 = vmatprep.subr.mxu0 0.0
  %868 = vmatpush1.msra.mxu0 0.0
  %869 = vmatprep.subr.mxu0 0.0
  %870 = vmatpush1.msra.mxu0 0.0
  %871 = vmatprep.subr.mxu0 0.0
  %872 = vmatpush1.msra.mxu0 0.0
  %873 = vmatprep.subr.mxu0 0.0
  %874 = vmatpush1.msra.mxu0 0.0
  %875 = vmatprep.subr.mxu0 0.0
  %876 = vmatpush1.msra.mxu0 0.0
  %877 = vmatprep.subr.mxu0 0.0
  %878 = vmatpush1.msra.mxu0 0.0
  %879 = vmatprep.subr.mxu0 0.0
  %880 = vmatpush1.msra.mxu0 0.0
  %881 = vmatprep.subr.mxu0 0.0
  %882 = vmatpush1.msra.mxu0 0.0
  %883 = vmatprep.subr.mxu0 0.0
  %884 = vmatpush1.msra.mxu0 0.0
  %885 = vmatprep.subr.mxu0 0.0
  %886 = vmatpush1.msra.mxu0 0.0
  %887 = vmatprep.subr.mxu0 0.0
  %888 = vmatpush1.msra.mxu0 0.0
  %889 = vmatprep.subr.mxu0 0.0
  %890 = vmatpush1.msra.mxu0 0.0
  %891 = vmatprep.subr.mxu0 0.0
  %892 = vmatpush1.msra.mxu0 0.0
  %893 = vmatprep.subr.mxu0 0.0
  %894 = vmatpush1.msra.mxu0 0.0
  %895 = vmatprep.subr.mxu0 0.0
  %896 = vmatpush1.msra.mxu0 0.0
  %897 = vmatprep.subr.mxu0 0.0
  %898 = vmatpush1.msra.mxu0 0.0
  %899 = vmatprep.subr.mxu0 0.0
  %900 = vmatpush1.msra.mxu0 0.0
  %901 = vmatprep.subr.mxu0 0.0
  %902 = vmatpush1.msra.mxu0 0.0
  %903 = vmatprep.subr.mxu0 0.0
  %904 = vmatpush1.msra.mxu0 0.0
  %905 = vmatprep.subr.mxu0 0.0
  %906 = vmatpush1.msra.mxu0 0.0
  %907 = vmatprep.subr.mxu0 0.0
  %908 = vmatpush1.msra.mxu0 0.0
  %909 = vmatprep.subr.mxu0 0.0
  %910 = vmatpush1.msra.mxu0 0.0
  %911 = vmatprep.subr.mxu0 0.0
  %912 = vmatpush1.msra.mxu0 0.0
  %913 = vmatprep.subr.mxu0 0.0
  %914 = vmatpush1.msra.mxu0 0.0
  %915 = vmatprep.subr.mxu0 0.0
  %916 = vmatpush1.msra.mxu0 0.0
  %917 = vmatprep.subr.mxu0 0.0
  %918 = vmatpush1.msra.mxu0 0.0
  %919 = vmatprep.subr.mxu0 0.0
  %920 = vmatpush1.msra.mxu0 0.0
  %921 = vmatprep.subr.mxu0 0.0
  %922 = vmatpush1.msra.mxu0 0.0
  %923 = vmatprep.subr.mxu0 0.0
  %924 = vmatpush1.msra.mxu0 0.0
  %925 = vmatprep.mubr.f32.mxu0 0.0
  %926 = vmatmul.mubr.f32.gmra.mrb[0].mxu0 %v857
  %v927 = vpop.f32.mrb[0].mxu0
  %v928 = vadd.f32 0.0, %v927
  %v929 = vpop.f32.mrb[0].mxu0
  %930 = vmatprep.mubr.f32.mxu0 0.0
  %931 = vmatmul.mubr.f32.gmra.mrb[0].mxu0 %v859
  %v932 = vpop.f32.mrb[0].mxu0
  %v933 = vadd.f32 0.0, %v932
  %v934 = vpop.f32.mrb[0].mxu0
  %935 = vdwg.mxu0
  %v936 = vadd.f32 %v612, %v928
  %v937 = vadd.f32 %v617, %v933
  %v938 = vxor.u32 %v936, 2147483648
  %v939 = vxor.u32 %v937, 2147483648
  %v940 = vmul.f32 %v938, 1.442695
  %v941 = vpow.pop %v940
  %v942 = vmul.f32 %v939, 1.442695
  %v943 = vpow.pop %v942
  %v944 = vadd.f32 %v941, 1.0
  %v945 = vadd.f32 %v943, 1.0
  %v946 = vrcp.pop %v944
  %v947 = vmul.f32 1.0, %v946
  %v948 = vrcp.pop %v945
  %v949 = vmul.f32 1.0, %v948
  %v950 = vtanh.pop %v936
  %v951 = vtanh.pop %v937
  %v952 = vmul.f32 %v947, %v837
  %v953 = vmul.f32 %v949, %v838
  %956 = vrot.lane.b32.xlu0 %v950, 96
  %v957 = vpop.permute.xlu0 %956
  %958 = vrot.lane.b32.xlu0 %v951, 96
  %v959 = vpop.permute.xlu0 %958
  %v962 = vmul.f32 %v947, %v957
  %v963 = vmul.f32 %v949, %v959
  %966 = vrot.lane.b32.xlu0 %v962, 16
  %v967 = vpop.permute.xlu0 %966
  %968 = vrot.lane.b32.xlu0 %v963, 16
  %v969 = vpop.permute.xlu0 %968
  %v972 = vadd.f32 %v952, %v967
  %v973 = vadd.f32 %v953, %v969
  %v974 = vtanh.pop %v972
  %v975 = vtanh.pop %v973
  %978 = vrot.lane.b32.xlu0 %v974, 32
  %v979 = vpop.permute.xlu0 %978
  %980 = vrot.lane.b32.xlu0 %v975, 32
  %v981 = vpop.permute.xlu0 %980
  %v984 = vmul.f32 %v947, %v979
  %v985 = vmul.f32 %v949, %v981
  %988 = vrot.lane.b32.xlu0 %v984, 80
  %v989 = vpop.permute.xlu0 %988
  %990 = vrot.lane.b32.xlu0 %v985, 80
  %v991 = vpop.permute.xlu0 %990
  %v992 = vsel %vm722, %v989, 0
  %v994 = vsel %vm722, %v991, 0
  %996 = vmatprep.subr.mxu0 0.0
  %997 = vmatpush1.msra.mxu0 %v720
  %998 = vmatprep.subr.mxu0 0.0
  %999 = vmatpush1.msra.mxu0 %v721
  %1000 = vmatprep.subr.mxu0 0.0
  %1001 = vmatpush1.msra.mxu0 0.0
  %1002 = vmatprep.subr.mxu0 0.0
  %1003 = vmatpush1.msra.mxu0 0.0
  %1004 = vmatprep.subr.mxu0 0.0
  %1005 = vmatpush1.msra.mxu0 0.0
  %1006 = vmatprep.subr.mxu0 0.0
  %1007 = vmatpush1.msra.mxu0 0.0
  %1008 = vmatprep.subr.mxu0 0.0
  %1009 = vmatpush1.msra.mxu0 0.0
  %1010 = vmatprep.subr.mxu0 0.0
  %1011 = vmatpush1.msra.mxu0 0.0
  %1012 = vmatprep.subr.mxu0 0.0
  %1013 = vmatpush1.msra.mxu0 0.0
  %1014 = vmatprep.subr.mxu0 0.0
  %1015 = vmatpush1.msra.mxu0 0.0
  %1016 = vmatprep.subr.mxu0 0.0
  %1017 = vmatpush1.msra.mxu0 0.0
  %1018 = vmatprep.subr.mxu0 0.0
  %1019 = vmatpush1.msra.mxu0 0.0
  %1020 = vmatprep.subr.mxu0 0.0
  %1021 = vmatpush1.msra.mxu0 0.0
  %1022 = vmatprep.subr.mxu0 0.0
  %1023 = vmatpush1.msra.mxu0 0.0
  %1024 = vmatprep.subr.mxu0 0.0
  %1025 = vmatpush1.msra.mxu0 0.0
  %1026 = vmatprep.subr.mxu0 0.0
  %1027 = vmatpush1.msra.mxu0 0.0
  %1028 = vmatprep.subr.mxu0 0.0
  %1029 = vmatpush1.msra.mxu0 0.0
  %1030 = vmatprep.subr.mxu0 0.0
  %1031 = vmatpush1.msra.mxu0 0.0
  %1032 = vmatprep.subr.mxu0 0.0
  %1033 = vmatpush1.msra.mxu0 0.0
  %1034 = vmatprep.subr.mxu0 0.0
  %1035 = vmatpush1.msra.mxu0 0.0
  %1036 = vmatprep.subr.mxu0 0.0
  %1037 = vmatpush1.msra.mxu0 0.0
  %1038 = vmatprep.subr.mxu0 0.0
  %1039 = vmatpush1.msra.mxu0 0.0
  %1040 = vmatprep.subr.mxu0 0.0
  %1041 = vmatpush1.msra.mxu0 0.0
  %1042 = vmatprep.subr.mxu0 0.0
  %1043 = vmatpush1.msra.mxu0 0.0
  %1044 = vmatprep.subr.mxu0 0.0
  %1045 = vmatpush1.msra.mxu0 0.0
  %1046 = vmatprep.subr.mxu0 0.0
  %1047 = vmatpush1.msra.mxu0 0.0
  %1048 = vmatprep.subr.mxu0 0.0
  %1049 = vmatpush1.msra.mxu0 0.0
  %1050 = vmatprep.subr.mxu0 0.0
  %1051 = vmatpush1.msra.mxu0 0.0
  %1052 = vmatprep.subr.mxu0 0.0
  %1053 = vmatpush1.msra.mxu0 0.0
  %1054 = vmatprep.subr.mxu0 0.0
  %1055 = vmatpush1.msra.mxu0 0.0
  %1056 = vmatprep.subr.mxu0 0.0
  %1057 = vmatpush1.msra.mxu0 0.0
  %1058 = vmatprep.subr.mxu0 0.0
  %1059 = vmatpush1.msra.mxu0 0.0
  %1060 = vmatprep.mubr.f32.mxu0 0.0
  %1061 = vmatmul.mubr.f32.gmra.mrb[0].mxu0 %v992
  %v1062 = vpop.f32.mrb[0].mxu0
  %v1063 = vadd.f32 0.0, %v1062
  %v1064 = vpop.f32.mrb[0].mxu0
  %1065 = vmatprep.mubr.f32.mxu0 0.0
  %1066 = vmatmul.mubr.f32.gmra.mrb[0].mxu0 %v994
  %v1067 = vpop.f32.mrb[0].mxu0
  %v1068 = vadd.f32 0.0, %v1067
  %v1069 = vpop.f32.mrb[0].mxu0
  %1070 = vdwg.mxu0
  %v1071 = vadd.f32 %v622, %v1063
  %v1072 = vadd.f32 %v627, %v1068
  %v1073 = vxor.u32 %v1071, 2147483648
  %v1074 = vxor.u32 %v1072, 2147483648
  %v1075 = vmul.f32 %v1073, 1.442695
  %v1076 = vpow.pop %v1075
  %v1077 = vmul.f32 %v1074, 1.442695
  %v1078 = vpow.pop %v1077
  %v1079 = vadd.f32 %v1076, 1.0
  %v1080 = vadd.f32 %v1078, 1.0
  %v1081 = vrcp.pop %v1079
  %v1082 = vmul.f32 1.0, %v1081
  %v1083 = vrcp.pop %v1080
  %v1084 = vmul.f32 1.0, %v1083
  %v1085 = vtanh.pop %v1071
  %v1086 = vtanh.pop %v1072
  %v1087 = vmul.f32 %v1082, %v972
  %v1088 = vmul.f32 %v1084, %v973
  %1091 = vrot.lane.b32.xlu0 %v1085, 96
  %v1092 = vpop.permute.xlu0 %1091
  %1093 = vrot.lane.b32.xlu0 %v1086, 96
  %v1094 = vpop.permute.xlu0 %1093
  %v1097 = vmul.f32 %v1082, %v1092
  %v1098 = vmul.f32 %v1084, %v1094
  %1101 = vrot.lane.b32.xlu0 %v1097, 16
  %v1102 = vpop.permute.xlu0 %1101
  %1103 = vrot.lane.b32.xlu0 %v1098, 16
  %v1104 = vpop.permute.xlu0 %1103
  %v1107 = vadd.f32 %v1087, %v1102
  %v1108 = vadd.f32 %v1088, %v1104
  %v1109 = vtanh.pop %v1107
  %v1110 = vtanh.pop %v1108
  %1113 = vrot.lane.b32.xlu0 %v1109, 32
  %v1114 = vpop.permute.xlu0 %1113
  %1115 = vrot.lane.b32.xlu0 %v1110, 32
  %v1116 = vpop.permute.xlu0 %1115
  %v1119 = vmul.f32 %v1082, %v1114
  %v1120 = vmul.f32 %v1084, %v1116
  %1123 = vrot.lane.b32.xlu0 %v1119, 80
  %v1124 = vpop.permute.xlu0 %1123
  %1125 = vrot.lane.b32.xlu0 %v1120, 80
  %v1126 = vpop.permute.xlu0 %1125
  %v1127 = vsel %vm722, %v1124, 0
  %v1129 = vsel %vm722, %v1126, 0
  %1131 = vmatprep.subr.mxu0 0.0
  %1132 = vmatpush1.msra.mxu0 %v720
  %1133 = vmatprep.subr.mxu0 0.0
  %1134 = vmatpush1.msra.mxu0 %v721
  %1135 = vmatprep.subr.mxu0 0.0
  %1136 = vmatpush1.msra.mxu0 0.0
  %1137 = vmatprep.subr.mxu0 0.0
  %1138 = vmatpush1.msra.mxu0 0.0
  %1139 = vmatprep.subr.mxu0 0.0
  %1140 = vmatpush1.msra.mxu0 0.0
  %1141 = vmatprep.subr.mxu0 0.0
  %1142 = vmatpush1.msra.mxu0 0.0
  %1143 = vmatprep.subr.mxu0 0.0
  %1144 = vmatpush1.msra.mxu0 0.0
  %1145 = vmatprep.subr.mxu0 0.0
  %1146 = vmatpush1.msra.mxu0 0.0
  %1147 = vmatprep.subr.mxu0 0.0
  %1148 = vmatpush1.msra.mxu0 0.0
  %1149 = vmatprep.subr.mxu0 0.0
  %1150 = vmatpush1.msra.mxu0 0.0
  %1151 = vmatprep.subr.mxu0 0.0
  %1152 = vmatpush1.msra.mxu0 0.0
  %1153 = vmatprep.subr.mxu0 0.0
  %1154 = vmatpush1.msra.mxu0 0.0
  %1155 = vmatprep.subr.mxu0 0.0
  %1156 = vmatpush1.msra.mxu0 0.0
  %1157 = vmatprep.subr.mxu0 0.0
  %1158 = vmatpush1.msra.mxu0 0.0
  %1159 = vmatprep.subr.mxu0 0.0
  %1160 = vmatpush1.msra.mxu0 0.0
  %1161 = vmatprep.subr.mxu0 0.0
  %1162 = vmatpush1.msra.mxu0 0.0
  %1163 = vmatprep.subr.mxu0 0.0
  %1164 = vmatpush1.msra.mxu0 0.0
  %1165 = vmatprep.subr.mxu0 0.0
  %1166 = vmatpush1.msra.mxu0 0.0
  %1167 = vmatprep.subr.mxu0 0.0
  %1168 = vmatpush1.msra.mxu0 0.0
  %1169 = vmatprep.subr.mxu0 0.0
  %1170 = vmatpush1.msra.mxu0 0.0
  %1171 = vmatprep.subr.mxu0 0.0
  %1172 = vmatpush1.msra.mxu0 0.0
  %1173 = vmatprep.subr.mxu0 0.0
  %1174 = vmatpush1.msra.mxu0 0.0
  %1175 = vmatprep.subr.mxu0 0.0
  %1176 = vmatpush1.msra.mxu0 0.0
  %1177 = vmatprep.subr.mxu0 0.0
  %1178 = vmatpush1.msra.mxu0 0.0
  %1179 = vmatprep.subr.mxu0 0.0
  %1180 = vmatpush1.msra.mxu0 0.0
  %1181 = vmatprep.subr.mxu0 0.0
  %1182 = vmatpush1.msra.mxu0 0.0
  %1183 = vmatprep.subr.mxu0 0.0
  %1184 = vmatpush1.msra.mxu0 0.0
  %1185 = vmatprep.subr.mxu0 0.0
  %1186 = vmatpush1.msra.mxu0 0.0
  %1187 = vmatprep.subr.mxu0 0.0
  %1188 = vmatpush1.msra.mxu0 0.0
  %1189 = vmatprep.subr.mxu0 0.0
  %1190 = vmatpush1.msra.mxu0 0.0
  %1191 = vmatprep.subr.mxu0 0.0
  %1192 = vmatpush1.msra.mxu0 0.0
  %1193 = vmatprep.subr.mxu0 0.0
  %1194 = vmatpush1.msra.mxu0 0.0
  %1195 = vmatprep.mubr.f32.mxu0 0.0
  %1196 = vmatmul.mubr.f32.gmra.mrb[0].mxu0 %v1127
  %v1197 = vpop.f32.mrb[0].mxu0
  %v1198 = vadd.f32 0.0, %v1197
  %v1199 = vpop.f32.mrb[0].mxu0
  %1200 = vmatprep.mubr.f32.mxu0 0.0
  %1201 = vmatmul.mubr.f32.gmra.mrb[0].mxu0 %v1129
  %v1202 = vpop.f32.mrb[0].mxu0
  %v1203 = vadd.f32 0.0, %v1202
  %v1204 = vpop.f32.mrb[0].mxu0
  %1205 = vdwg.mxu0
  %v1206 = vadd.f32 %v632, %v1198
  %v1207 = vadd.f32 %v637, %v1203
  %v1208 = vxor.u32 %v1206, 2147483648
  %v1209 = vxor.u32 %v1207, 2147483648
  %v1210 = vmul.f32 %v1208, 1.442695
  %v1211 = vpow.pop %v1210
  %v1212 = vmul.f32 %v1209, 1.442695
  %v1213 = vpow.pop %v1212
  %v1214 = vadd.f32 %v1211, 1.0
  %v1215 = vadd.f32 %v1213, 1.0
  %v1216 = vrcp.pop %v1214
  %v1217 = vmul.f32 1.0, %v1216
  %v1218 = vrcp.pop %v1215
  %v1219 = vmul.f32 1.0, %v1218
  %v1220 = vtanh.pop %v1206
  %v1221 = vtanh.pop %v1207
  %v1222 = vmul.f32 %v1217, %v1107
  %v1223 = vmul.f32 %v1219, %v1108
  %1226 = vrot.lane.b32.xlu0 %v1220, 96
  %v1227 = vpop.permute.xlu0 %1226
  %1228 = vrot.lane.b32.xlu0 %v1221, 96
  %v1229 = vpop.permute.xlu0 %1228
  %v1232 = vmul.f32 %v1217, %v1227
  %v1233 = vmul.f32 %v1219, %v1229
  %1236 = vrot.lane.b32.xlu0 %v1232, 16
  %v1237 = vpop.permute.xlu0 %1236
  %1238 = vrot.lane.b32.xlu0 %v1233, 16
  %v1239 = vpop.permute.xlu0 %1238
  %v1242 = vadd.f32 %v1222, %v1237
  %v1243 = vadd.f32 %v1223, %v1239
  %v1244 = vtanh.pop %v1242
  %v1245 = vtanh.pop %v1243
  %1248 = vrot.lane.b32.xlu0 %v1244, 32
  %v1249 = vpop.permute.xlu0 %1248
  %1250 = vrot.lane.b32.xlu0 %v1245, 32
  %v1251 = vpop.permute.xlu0 %1250
  %v1254 = vmul.f32 %v1217, %v1249
  %v1255 = vmul.f32 %v1219, %v1251
  %1258 = vrot.lane.b32.xlu0 %v1254, 80
  %v1259 = vpop.permute.xlu0 %1258
  %1260 = vrot.lane.b32.xlu0 %v1255, 80
  %v1261 = vpop.permute.xlu0 %1260
  %v1262 = vsel %vm722, %v1259, 0
  %v1264 = vsel %vm722, %v1261, 0
  %1266 = vmatprep.subr.mxu0 0.0
  %1267 = vmatpush1.msra.mxu0 %v720
  %1268 = vmatprep.subr.mxu0 0.0
  %1269 = vmatpush1.msra.mxu0 %v721
  %1270 = vmatprep.subr.mxu0 0.0
  %1271 = vmatpush1.msra.mxu0 0.0
  %1272 = vmatprep.subr.mxu0 0.0
  %1273 = vmatpush1.msra.mxu0 0.0
  %1274 = vmatprep.subr.mxu0 0.0
  %1275 = vmatpush1.msra.mxu0 0.0
  %1276 = vmatprep.subr.mxu0 0.0
  %1277 = vmatpush1.msra.mxu0 0.0
  %1278 = vmatprep.subr.mxu0 0.0
  %1279 = vmatpush1.msra.mxu0 0.0
  %1280 = vmatprep.subr.mxu0 0.0
  %1281 = vmatpush1.msra.mxu0 0.0
  %1282 = vmatprep.subr.mxu0 0.0
  %1283 = vmatpush1.msra.mxu0 0.0
  %1284 = vmatprep.subr.mxu0 0.0
  %1285 = vmatpush1.msra.mxu0 0.0
  %1286 = vmatprep.subr.mxu0 0.0
  %1287 = vmatpush1.msra.mxu0 0.0
  %1288 = vmatprep.subr.mxu0 0.0
  %1289 = vmatpush1.msra.mxu0 0.0
  %1290 = vmatprep.subr.mxu0 0.0
  %1291 = vmatpush1.msra.mxu0 0.0
  %1292 = vmatprep.subr.mxu0 0.0
  %1293 = vmatpush1.msra.mxu0 0.0
  %1294 = vmatprep.subr.mxu0 0.0
  %1295 = vmatpush1.msra.mxu0 0.0
  %1296 = vmatprep.subr.mxu0 0.0
  %1297 = vmatpush1.msra.mxu0 0.0
  %1298 = vmatprep.subr.mxu0 0.0
  %1299 = vmatpush1.msra.mxu0 0.0
  %1300 = vmatprep.subr.mxu0 0.0
  %1301 = vmatpush1.msra.mxu0 0.0
  %1302 = vmatprep.subr.mxu0 0.0
  %1303 = vmatpush1.msra.mxu0 0.0
  %1304 = vmatprep.subr.mxu0 0.0
  %1305 = vmatpush1.msra.mxu0 0.0
  %1306 = vmatprep.subr.mxu0 0.0
  %1307 = vmatpush1.msra.mxu0 0.0
  %1308 = vmatprep.subr.mxu0 0.0
  %1309 = vmatpush1.msra.mxu0 0.0
  %1310 = vmatprep.subr.mxu0 0.0
  %1311 = vmatpush1.msra.mxu0 0.0
  %1312 = vmatprep.subr.mxu0 0.0
  %1313 = vmatpush1.msra.mxu0 0.0
  %1314 = vmatprep.subr.mxu0 0.0
  %1315 = vmatpush1.msra.mxu0 0.0
  %1316 = vmatprep.subr.mxu0 0.0
  %1317 = vmatpush1.msra.mxu0 0.0
  %1318 = vmatprep.subr.mxu0 0.0
  %1319 = vmatpush1.msra.mxu0 0.0
  %1320 = vmatprep.subr.mxu0 0.0
  %1321 = vmatpush1.msra.mxu0 0.0
  %1322 = vmatprep.subr.mxu0 0.0
  %1323 = vmatpush1.msra.mxu0 0.0
  %1324 = vmatprep.subr.mxu0 0.0
  %1325 = vmatpush1.msra.mxu0 0.0
  %1326 = vmatprep.subr.mxu0 0.0
  %1327 = vmatpush1.msra.mxu0 0.0
  %1328 = vmatprep.subr.mxu0 0.0
  %1329 = vmatpush1.msra.mxu0 0.0
  %1330 = vmatprep.mubr.f32.mxu0 0.0
  %1331 = vmatmul.mubr.f32.gmra.mrb[0].mxu0 %v1262
  %v1332 = vpop.f32.mrb[0].mxu0
  %v1333 = vadd.f32 0.0, %v1332
  %v1334 = vpop.f32.mrb[0].mxu0
  %1335 = vmatprep.mubr.f32.mxu0 0.0
  %1336 = vmatmul.mubr.f32.gmra.mrb[0].mxu0 %v1264
  %v1337 = vpop.f32.mrb[0].mxu0
  %v1338 = vadd.f32 0.0, %v1337
  %v1339 = vpop.f32.mrb[0].mxu0
  %1340 = vdwg.mxu0
  %v1341 = vadd.f32 %v642, %v1333
  %v1342 = vadd.f32 %v647, %v1338
  %v1343 = vxor.u32 %v1341, 2147483648
  %v1344 = vxor.u32 %v1342, 2147483648
  %v1345 = vmul.f32 %v1343, 1.442695
  %v1346 = vpow.pop %v1345
  %v1347 = vmul.f32 %v1344, 1.442695
  %v1348 = vpow.pop %v1347
  %v1349 = vadd.f32 %v1346, 1.0
  %v1350 = vadd.f32 %v1348, 1.0
  %v1351 = vrcp.pop %v1349
  %v1352 = vmul.f32 1.0, %v1351
  %v1353 = vrcp.pop %v1350
  %v1354 = vmul.f32 1.0, %v1353
  %v1355 = vtanh.pop %v1341
  %v1356 = vtanh.pop %v1342
  %v1357 = vmul.f32 %v1352, %v1242
  %v1358 = vmul.f32 %v1354, %v1243
  %1361 = vrot.lane.b32.xlu0 %v1355, 96
  %v1362 = vpop.permute.xlu0 %1361
  %1363 = vrot.lane.b32.xlu0 %v1356, 96
  %v1364 = vpop.permute.xlu0 %1363
  %v1367 = vmul.f32 %v1352, %v1362
  %v1368 = vmul.f32 %v1354, %v1364
  %1371 = vrot.lane.b32.xlu0 %v1367, 16
  %v1372 = vpop.permute.xlu0 %1371
  %1373 = vrot.lane.b32.xlu0 %v1368, 16
  %v1374 = vpop.permute.xlu0 %1373
  %v1377 = vadd.f32 %v1357, %v1372
  %v1378 = vadd.f32 %v1358, %v1374
  %v1379 = vtanh.pop %v1377
  %v1380 = vtanh.pop %v1378
  %1383 = vrot.lane.b32.xlu0 %v1379, 32
  %v1384 = vpop.permute.xlu0 %1383
  %1385 = vrot.lane.b32.xlu0 %v1380, 32
  %v1386 = vpop.permute.xlu0 %1385
  %v1389 = vmul.f32 %v1352, %v1384
  %v1390 = vmul.f32 %v1354, %v1386
  %1393 = vrot.lane.b32.xlu0 %v1389, 80
  %v1394 = vpop.permute.xlu0 %1393
  %1395 = vrot.lane.b32.xlu0 %v1390, 80
  %v1396 = vpop.permute.xlu0 %1395
  %v1397 = vsel %vm722, %v1394, 0
  %v1399 = vsel %vm722, %v1396, 0
  %1401 = vmatprep.subr.mxu0 0.0
  %1402 = vmatpush1.msra.mxu0 %v720
  %1403 = vmatprep.subr.mxu0 0.0
  %1404 = vmatpush1.msra.mxu0 %v721
  %1405 = vmatprep.subr.mxu0 0.0
  %1406 = vmatpush1.msra.mxu0 0.0
  %1407 = vmatprep.subr.mxu0 0.0
  %1408 = vmatpush1.msra.mxu0 0.0
  %1409 = vmatprep.subr.mxu0 0.0
  %1410 = vmatpush1.msra.mxu0 0.0
  %1411 = vmatprep.subr.mxu0 0.0
  %1412 = vmatpush1.msra.mxu0 0.0
  %1413 = vmatprep.subr.mxu0 0.0
  %1414 = vmatpush1.msra.mxu0 0.0
  %1415 = vmatprep.subr.mxu0 0.0
  %1416 = vmatpush1.msra.mxu0 0.0
  %1417 = vmatprep.subr.mxu0 0.0
  %1418 = vmatpush1.msra.mxu0 0.0
  %1419 = vmatprep.subr.mxu0 0.0
  %1420 = vmatpush1.msra.mxu0 0.0
  %1421 = vmatprep.subr.mxu0 0.0
  %1422 = vmatpush1.msra.mxu0 0.0
  %1423 = vmatprep.subr.mxu0 0.0
  %1424 = vmatpush1.msra.mxu0 0.0
  %1425 = vmatprep.subr.mxu0 0.0
  %1426 = vmatpush1.msra.mxu0 0.0
  %1427 = vmatprep.subr.mxu0 0.0
  %1428 = vmatpush1.msra.mxu0 0.0
  %1429 = vmatprep.subr.mxu0 0.0
  %1430 = vmatpush1.msra.mxu0 0.0
  %1431 = vmatprep.subr.mxu0 0.0
  %1432 = vmatpush1.msra.mxu0 0.0
  %1433 = vmatprep.subr.mxu0 0.0
  %1434 = vmatpush1.msra.mxu0 0.0
  %1435 = vmatprep.subr.mxu0 0.0
  %1436 = vmatpush1.msra.mxu0 0.0
  %1437 = vmatprep.subr.mxu0 0.0
  %1438 = vmatpush1.msra.mxu0 0.0
  %1439 = vmatprep.subr.mxu0 0.0
  %1440 = vmatpush1.msra.mxu0 0.0
  %1441 = vmatprep.subr.mxu0 0.0
  %1442 = vmatpush1.msra.mxu0 0.0
  %1443 = vmatprep.subr.mxu0 0.0
  %1444 = vmatpush1.msra.mxu0 0.0
  %1445 = vmatprep.subr.mxu0 0.0
  %1446 = vmatpush1.msra.mxu0 0.0
  %1447 = vmatprep.subr.mxu0 0.0
  %1448 = vmatpush1.msra.mxu0 0.0
  %1449 = vmatprep.subr.mxu0 0.0
  %1450 = vmatpush1.msra.mxu0 0.0
  %1451 = vmatprep.subr.mxu0 0.0
  %1452 = vmatpush1.msra.mxu0 0.0
  %1453 = vmatprep.subr.mxu0 0.0
  %1454 = vmatpush1.msra.mxu0 0.0
  %1455 = vmatprep.subr.mxu0 0.0
  %1456 = vmatpush1.msra.mxu0 0.0
  %1457 = vmatprep.subr.mxu0 0.0
  %1458 = vmatpush1.msra.mxu0 0.0
  %1459 = vmatprep.subr.mxu0 0.0
  %1460 = vmatpush1.msra.mxu0 0.0
  %1461 = vmatprep.subr.mxu0 0.0
  %1462 = vmatpush1.msra.mxu0 0.0
  %1463 = vmatprep.subr.mxu0 0.0
  %1464 = vmatpush1.msra.mxu0 0.0
  %1465 = vmatprep.mubr.f32.mxu0 0.0
  %1466 = vmatmul.mubr.f32.gmra.mrb[0].mxu0 %v1397
  %v1467 = vpop.f32.mrb[0].mxu0
  %v1468 = vadd.f32 0.0, %v1467
  %v1469 = vpop.f32.mrb[0].mxu0
  %1470 = vmatprep.mubr.f32.mxu0 0.0
  %1471 = vmatmul.mubr.f32.gmra.mrb[0].mxu0 %v1399
  %v1472 = vpop.f32.mrb[0].mxu0
  %v1473 = vadd.f32 0.0, %v1472
  %v1474 = vpop.f32.mrb[0].mxu0
  %1475 = vdwg.mxu0
  %v1476 = vadd.f32 %v652, %v1468
  %v1477 = vadd.f32 %v657, %v1473
  %v1478 = vxor.u32 %v1476, 2147483648
  %v1479 = vxor.u32 %v1477, 2147483648
  %v1480 = vmul.f32 %v1478, 1.442695
  %v1481 = vpow.pop %v1480
  %v1482 = vmul.f32 %v1479, 1.442695
  %v1483 = vpow.pop %v1482
  %v1484 = vadd.f32 %v1481, 1.0
  %v1485 = vadd.f32 %v1483, 1.0
  %v1486 = vrcp.pop %v1484
  %v1487 = vmul.f32 1.0, %v1486
  %v1488 = vrcp.pop %v1485
  %v1489 = vmul.f32 1.0, %v1488
  %v1490 = vtanh.pop %v1476
  %v1491 = vtanh.pop %v1477
  %v1492 = vmul.f32 %v1487, %v1377
  %v1493 = vmul.f32 %v1489, %v1378
  %1496 = vrot.lane.b32.xlu0 %v1490, 96
  %v1497 = vpop.permute.xlu0 %1496
  %1498 = vrot.lane.b32.xlu0 %v1491, 96
  %v1499 = vpop.permute.xlu0 %1498
  %v1502 = vmul.f32 %v1487, %v1497
  %v1503 = vmul.f32 %v1489, %v1499
  %1506 = vrot.lane.b32.xlu0 %v1502, 16
  %v1507 = vpop.permute.xlu0 %1506
  %1508 = vrot.lane.b32.xlu0 %v1503, 16
  %v1509 = vpop.permute.xlu0 %1508
  %v1512 = vadd.f32 %v1492, %v1507
  %v1513 = vadd.f32 %v1493, %v1509
  %v1514 = vtanh.pop %v1512
  %v1515 = vtanh.pop %v1513
  %1518 = vrot.lane.b32.xlu0 %v1514, 32
  %v1519 = vpop.permute.xlu0 %1518
  %1520 = vrot.lane.b32.xlu0 %v1515, 32
  %v1521 = vpop.permute.xlu0 %1520
  %v1524 = vmul.f32 %v1487, %v1519
  %v1525 = vmul.f32 %v1489, %v1521
  %1528 = vrot.lane.b32.xlu0 %v1524, 80
  %v1529 = vpop.permute.xlu0 %1528
  %1530 = vrot.lane.b32.xlu0 %v1525, 80
  %v1531 = vpop.permute.xlu0 %1530
  %v1532 = vsel %vm722, %v1529, 0
  %v1534 = vsel %vm722, %v1531, 0
  %1536 = vmatprep.subr.mxu0 0.0
  %1537 = vmatpush1.msra.mxu0 %v720
  %1538 = vmatprep.subr.mxu0 0.0
  %1539 = vmatpush1.msra.mxu0 %v721
  %1540 = vmatprep.subr.mxu0 0.0
  %1541 = vmatpush1.msra.mxu0 0.0
  %1542 = vmatprep.subr.mxu0 0.0
  %1543 = vmatpush1.msra.mxu0 0.0
  %1544 = vmatprep.subr.mxu0 0.0
  %1545 = vmatpush1.msra.mxu0 0.0
  %1546 = vmatprep.subr.mxu0 0.0
  %1547 = vmatpush1.msra.mxu0 0.0
  %1548 = vmatprep.subr.mxu0 0.0
  %1549 = vmatpush1.msra.mxu0 0.0
  %1550 = vmatprep.subr.mxu0 0.0
  %1551 = vmatpush1.msra.mxu0 0.0
  %1552 = vmatprep.subr.mxu0 0.0
  %1553 = vmatpush1.msra.mxu0 0.0
  %1554 = vmatprep.subr.mxu0 0.0
  %1555 = vmatpush1.msra.mxu0 0.0
  %1556 = vmatprep.subr.mxu0 0.0
  %1557 = vmatpush1.msra.mxu0 0.0
  %1558 = vmatprep.subr.mxu0 0.0
  %1559 = vmatpush1.msra.mxu0 0.0
  %1560 = vmatprep.subr.mxu0 0.0
  %1561 = vmatpush1.msra.mxu0 0.0
  %1562 = vmatprep.subr.mxu0 0.0
  %1563 = vmatpush1.msra.mxu0 0.0
  %1564 = vmatprep.subr.mxu0 0.0
  %1565 = vmatpush1.msra.mxu0 0.0
  %1566 = vmatprep.subr.mxu0 0.0
  %1567 = vmatpush1.msra.mxu0 0.0
  %1568 = vmatprep.subr.mxu0 0.0
  %1569 = vmatpush1.msra.mxu0 0.0
  %1570 = vmatprep.subr.mxu0 0.0
  %1571 = vmatpush1.msra.mxu0 0.0
  %1572 = vmatprep.subr.mxu0 0.0
  %1573 = vmatpush1.msra.mxu0 0.0
  %1574 = vmatprep.subr.mxu0 0.0
  %1575 = vmatpush1.msra.mxu0 0.0
  %1576 = vmatprep.subr.mxu0 0.0
  %1577 = vmatpush1.msra.mxu0 0.0
  %1578 = vmatprep.subr.mxu0 0.0
  %1579 = vmatpush1.msra.mxu0 0.0
  %1580 = vmatprep.subr.mxu0 0.0
  %1581 = vmatpush1.msra.mxu0 0.0
  %1582 = vmatprep.subr.mxu0 0.0
  %1583 = vmatpush1.msra.mxu0 0.0
  %1584 = vmatprep.subr.mxu0 0.0
  %1585 = vmatpush1.msra.mxu0 0.0
  %1586 = vmatprep.subr.mxu0 0.0
  %1587 = vmatpush1.msra.mxu0 0.0
  %1588 = vmatprep.subr.mxu0 0.0
  %1589 = vmatpush1.msra.mxu0 0.0
  %1590 = vmatprep.subr.mxu0 0.0
  %1591 = vmatpush1.msra.mxu0 0.0
  %1592 = vmatprep.subr.mxu0 0.0
  %1593 = vmatpush1.msra.mxu0 0.0
  %1594 = vmatprep.subr.mxu0 0.0
  %1595 = vmatpush1.msra.mxu0 0.0
  %1596 = vmatprep.subr.mxu0 0.0
  %1597 = vmatpush1.msra.mxu0 0.0
  %1598 = vmatprep.subr.mxu0 0.0
  %1599 = vmatpush1.msra.mxu0 0.0
  %1600 = vmatprep.mubr.f32.mxu0 0.0
  %1601 = vmatmul.mubr.f32.gmra.mrb[0].mxu0 %v1532
  %v1602 = vpop.f32.mrb[0].mxu0
  %v1603 = vadd.f32 0.0, %v1602
  %v1604 = vpop.f32.mrb[0].mxu0
  %1605 = vmatprep.mubr.f32.mxu0 0.0
  %1606 = vmatmul.mubr.f32.gmra.mrb[0].mxu0 %v1534
  %v1607 = vpop.f32.mrb[0].mxu0
  %v1608 = vadd.f32 0.0, %v1607
  %v1609 = vpop.f32.mrb[0].mxu0
  %1610 = vdwg.mxu0
  %v1611 = vadd.f32 %v662, %v1603
  %v1612 = vadd.f32 %v667, %v1608
  %v1613 = vxor.u32 %v1611, 2147483648
  %v1614 = vxor.u32 %v1612, 2147483648
  %v1615 = vmul.f32 %v1613, 1.442695
  %v1616 = vpow.pop %v1615
  %v1617 = vmul.f32 %v1614, 1.442695
  %v1618 = vpow.pop %v1617
  %v1619 = vadd.f32 %v1616, 1.0
  %v1620 = vadd.f32 %v1618, 1.0
  %v1621 = vrcp.pop %v1619
  %v1622 = vmul.f32 1.0, %v1621
  %v1623 = vrcp.pop %v1620
  %v1624 = vmul.f32 1.0, %v1623
  %v1625 = vtanh.pop %v1611
  %v1626 = vtanh.pop %v1612
  %v1627 = vmul.f32 %v1622, %v1512
  %v1628 = vmul.f32 %v1624, %v1513
  %1631 = vrot.lane.b32.xlu0 %v1625, 96
  %v1632 = vpop.permute.xlu0 %1631
  %1633 = vrot.lane.b32.xlu0 %v1626, 96
  %v1634 = vpop.permute.xlu0 %1633
  %v1637 = vmul.f32 %v1622, %v1632
  %v1638 = vmul.f32 %v1624, %v1634
  %1641 = vrot.lane.b32.xlu0 %v1637, 16
  %v1642 = vpop.permute.xlu0 %1641
  %1643 = vrot.lane.b32.xlu0 %v1638, 16
  %v1644 = vpop.permute.xlu0 %1643
  %v1647 = vadd.f32 %v1627, %v1642
  %v1648 = vadd.f32 %v1628, %v1644
  %v1649 = vtanh.pop %v1647
  %v1650 = vtanh.pop %v1648
  %1653 = vrot.lane.b32.xlu0 %v1649, 32
  %v1654 = vpop.permute.xlu0 %1653
  %1655 = vrot.lane.b32.xlu0 %v1650, 32
  %v1656 = vpop.permute.xlu0 %1655
  %v1659 = vmul.f32 %v1622, %v1654
  %v1660 = vmul.f32 %v1624, %v1656
  %1663 = vrot.lane.b32.xlu0 %v1659, 80
  %v1664 = vpop.permute.xlu0 %1663
  %1665 = vrot.lane.b32.xlu0 %v1660, 80
  %v1666 = vpop.permute.xlu0 %1665
  %v1667 = vsel %vm722, %v1664, 0
  %v1669 = vsel %vm722, %v1666, 0
  %1671 = vmatprep.subr.mxu0 0.0
  %1672 = vmatpush1.msra.mxu0 %v720
  %1673 = vmatprep.subr.mxu0 0.0
  %1674 = vmatpush1.msra.mxu0 %v721
  %1675 = vmatprep.subr.mxu0 0.0
  %1676 = vmatpush1.msra.mxu0 0.0
  %1677 = vmatprep.subr.mxu0 0.0
  %1678 = vmatpush1.msra.mxu0 0.0
  %1679 = vmatprep.subr.mxu0 0.0
  %1680 = vmatpush1.msra.mxu0 0.0
  %1681 = vmatprep.subr.mxu0 0.0
  %1682 = vmatpush1.msra.mxu0 0.0
  %1683 = vmatprep.subr.mxu0 0.0
  %1684 = vmatpush1.msra.mxu0 0.0
  %1685 = vmatprep.subr.mxu0 0.0
  %1686 = vmatpush1.msra.mxu0 0.0
  %1687 = vmatprep.subr.mxu0 0.0
  %1688 = vmatpush1.msra.mxu0 0.0
  %1689 = vmatprep.subr.mxu0 0.0
  %1690 = vmatpush1.msra.mxu0 0.0
  %1691 = vmatprep.subr.mxu0 0.0
  %1692 = vmatpush1.msra.mxu0 0.0
  %1693 = vmatprep.subr.mxu0 0.0
  %1694 = vmatpush1.msra.mxu0 0.0
  %1695 = vmatprep.subr.mxu0 0.0
  %1696 = vmatpush1.msra.mxu0 0.0
  %1697 = vmatprep.subr.mxu0 0.0
  %1698 = vmatpush1.msra.mxu0 0.0
  %1699 = vmatprep.subr.mxu0 0.0
  %1700 = vmatpush1.msra.mxu0 0.0
  %1701 = vmatprep.subr.mxu0 0.0
  %1702 = vmatpush1.msra.mxu0 0.0
  %1703 = vmatprep.subr.mxu0 0.0
  %1704 = vmatpush1.msra.mxu0 0.0
  %1705 = vmatprep.subr.mxu0 0.0
  %1706 = vmatpush1.msra.mxu0 0.0
  %1707 = vmatprep.subr.mxu0 0.0
  %1708 = vmatpush1.msra.mxu0 0.0
  %1709 = vmatprep.subr.mxu0 0.0
  %1710 = vmatpush1.msra.mxu0 0.0
  %1711 = vmatprep.subr.mxu0 0.0
  %1712 = vmatpush1.msra.mxu0 0.0
  %1713 = vmatprep.subr.mxu0 0.0
  %1714 = vmatpush1.msra.mxu0 0.0
  %1715 = vmatprep.subr.mxu0 0.0
  %1716 = vmatpush1.msra.mxu0 0.0
  %1717 = vmatprep.subr.mxu0 0.0
  %1718 = vmatpush1.msra.mxu0 0.0
  %1719 = vmatprep.subr.mxu0 0.0
  %1720 = vmatpush1.msra.mxu0 0.0
  %1721 = vmatprep.subr.mxu0 0.0
  %1722 = vmatpush1.msra.mxu0 0.0
  %1723 = vmatprep.subr.mxu0 0.0
  %1724 = vmatpush1.msra.mxu0 0.0
  %1725 = vmatprep.subr.mxu0 0.0
  %1726 = vmatpush1.msra.mxu0 0.0
  %1727 = vmatprep.subr.mxu0 0.0
  %1728 = vmatpush1.msra.mxu0 0.0
  %1729 = vmatprep.subr.mxu0 0.0
  %1730 = vmatpush1.msra.mxu0 0.0
  %1731 = vmatprep.subr.mxu0 0.0
  %1732 = vmatpush1.msra.mxu0 0.0
  %1733 = vmatprep.subr.mxu0 0.0
  %1734 = vmatpush1.msra.mxu0 0.0
  %1735 = vmatprep.mubr.f32.mxu0 0.0
  %1736 = vmatmul.mubr.f32.gmra.mrb[0].mxu0 %v1667
  %v1737 = vpop.f32.mrb[0].mxu0
  %v1738 = vadd.f32 0.0, %v1737
  %v1739 = vpop.f32.mrb[0].mxu0
  %1740 = vmatprep.mubr.f32.mxu0 0.0
  %1741 = vmatmul.mubr.f32.gmra.mrb[0].mxu0 %v1669
  %v1742 = vpop.f32.mrb[0].mxu0
  %v1743 = vadd.f32 0.0, %v1742
  %v1744 = vpop.f32.mrb[0].mxu0
  %1745 = vdwg.mxu0
  %v1746 = vadd.f32 %v672, %v1738
  %v1747 = vadd.f32 %v677, %v1743
  %v1748 = vxor.u32 %v1746, 2147483648
  %v1749 = vxor.u32 %v1747, 2147483648
  %v1750 = vmul.f32 %v1748, 1.442695
  %v1751 = vpow.pop %v1750
  %v1752 = vmul.f32 %v1749, 1.442695
  %v1753 = vpow.pop %v1752
  %v1754 = vadd.f32 %v1751, 1.0
  %v1755 = vadd.f32 %v1753, 1.0
  %v1756 = vrcp.pop %v1754
  %v1757 = vmul.f32 1.0, %v1756
  %v1758 = vrcp.pop %v1755
  %v1759 = vmul.f32 1.0, %v1758
  %v1760 = vtanh.pop %v1746
  %v1761 = vtanh.pop %v1747
  %v1762 = vmul.f32 %v1757, %v1647
  %v1763 = vmul.f32 %v1759, %v1648
  %1766 = vrot.lane.b32.xlu0 %v1760, 96
  %v1767 = vpop.permute.xlu0 %1766
  %1768 = vrot.lane.b32.xlu0 %v1761, 96
  %v1769 = vpop.permute.xlu0 %1768
  %v1772 = vmul.f32 %v1757, %v1767
  %v1773 = vmul.f32 %v1759, %v1769
  %1776 = vrot.lane.b32.xlu0 %v1772, 16
  %v1777 = vpop.permute.xlu0 %1776
  %1778 = vrot.lane.b32.xlu0 %v1773, 16
  %v1779 = vpop.permute.xlu0 %1778
  %v1782 = vadd.f32 %v1762, %v1777
  %v1783 = vadd.f32 %v1763, %v1779
  %v1784 = vtanh.pop %v1782
  %v1785 = vtanh.pop %v1783
  %1788 = vrot.lane.b32.xlu0 %v1784, 32
  %v1789 = vpop.permute.xlu0 %1788
  %1790 = vrot.lane.b32.xlu0 %v1785, 32
  %v1791 = vpop.permute.xlu0 %1790
  %v1794 = vmul.f32 %v1757, %v1789
  %v1795 = vmul.f32 %v1759, %v1791
  %1798 = vrot.lane.b32.xlu0 %v1794, 80
  %v1799 = vpop.permute.xlu0 %1798
  %1800 = vrot.lane.b32.xlu0 %v1795, 80
  %v1801 = vpop.permute.xlu0 %1800
  %v1802 = vsel %vm722, %v1799, 0
  %v1804 = vsel %vm722, %v1801, 0
  %1806 = vmatprep.subr.mxu0 0.0
  %1807 = vmatpush1.msra.mxu0 %v720
  %1808 = vmatprep.subr.mxu0 0.0
  %1809 = vmatpush1.msra.mxu0 %v721
  %1810 = vmatprep.subr.mxu0 0.0
  %1811 = vmatpush1.msra.mxu0 0.0
  %1812 = vmatprep.subr.mxu0 0.0
  %1813 = vmatpush1.msra.mxu0 0.0
  %1814 = vmatprep.subr.mxu0 0.0
  %1815 = vmatpush1.msra.mxu0 0.0
  %1816 = vmatprep.subr.mxu0 0.0
  %1817 = vmatpush1.msra.mxu0 0.0
  %1818 = vmatprep.subr.mxu0 0.0
  %1819 = vmatpush1.msra.mxu0 0.0
  %1820 = vmatprep.subr.mxu0 0.0
  %1821 = vmatpush1.msra.mxu0 0.0
  %1822 = vmatprep.subr.mxu0 0.0
  %1823 = vmatpush1.msra.mxu0 0.0
  %1824 = vmatprep.subr.mxu0 0.0
  %1825 = vmatpush1.msra.mxu0 0.0
  %1826 = vmatprep.subr.mxu0 0.0
  %1827 = vmatpush1.msra.mxu0 0.0
  %1828 = vmatprep.subr.mxu0 0.0
  %1829 = vmatpush1.msra.mxu0 0.0
  %1830 = vmatprep.subr.mxu0 0.0
  %1831 = vmatpush1.msra.mxu0 0.0
  %1832 = vmatprep.subr.mxu0 0.0
  %1833 = vmatpush1.msra.mxu0 0.0
  %1834 = vmatprep.subr.mxu0 0.0
  %1835 = vmatpush1.msra.mxu0 0.0
  %1836 = vmatprep.subr.mxu0 0.0
  %1837 = vmatpush1.msra.mxu0 0.0
  %1838 = vmatprep.subr.mxu0 0.0
  %1839 = vmatpush1.msra.mxu0 0.0
  %1840 = vmatprep.subr.mxu0 0.0
  %1841 = vmatpush1.msra.mxu0 0.0
  %1842 = vmatprep.subr.mxu0 0.0
  %1843 = vmatpush1.msra.mxu0 0.0
  %1844 = vmatprep.subr.mxu0 0.0
  %1845 = vmatpush1.msra.mxu0 0.0
  %1846 = vmatprep.subr.mxu0 0.0
  %1847 = vmatpush1.msra.mxu0 0.0
  %1848 = vmatprep.subr.mxu0 0.0
  %1849 = vmatpush1.msra.mxu0 0.0
  %1850 = vmatprep.subr.mxu0 0.0
  %1851 = vmatpush1.msra.mxu0 0.0
  %1852 = vmatprep.subr.mxu0 0.0
  %1853 = vmatpush1.msra.mxu0 0.0
  %1854 = vmatprep.subr.mxu0 0.0
  %1855 = vmatpush1.msra.mxu0 0.0
  %1856 = vmatprep.subr.mxu0 0.0
  %1857 = vmatpush1.msra.mxu0 0.0
  %1858 = vmatprep.subr.mxu0 0.0
  %1859 = vmatpush1.msra.mxu0 0.0
  %1860 = vmatprep.subr.mxu0 0.0
  %1861 = vmatpush1.msra.mxu0 0.0
  %1862 = vmatprep.subr.mxu0 0.0
  %1863 = vmatpush1.msra.mxu0 0.0
  %1864 = vmatprep.subr.mxu0 0.0
  %1865 = vmatpush1.msra.mxu0 0.0
  %1866 = vmatprep.subr.mxu0 0.0
  %1867 = vmatpush1.msra.mxu0 0.0
  %1868 = vmatprep.subr.mxu0 0.0
  %1869 = vmatpush1.msra.mxu0 0.0
  %1870 = vmatprep.mubr.f32.mxu0 0.0
  %1871 = vmatmul.mubr.f32.gmra.mrb[0].mxu0 %v1802
  %v1872 = vpop.f32.mrb[0].mxu0
  %v1873 = vadd.f32 0.0, %v1872
  %v1874 = vpop.f32.mrb[0].mxu0
  %1875 = vmatprep.mubr.f32.mxu0 0.0
  %1876 = vmatmul.mubr.f32.gmra.mrb[0].mxu0 %v1804
  %v1877 = vpop.f32.mrb[0].mxu0
  %v1878 = vadd.f32 0.0, %v1877
  %v1879 = vpop.f32.mrb[0].mxu0
  %1880 = vdwg.mxu0
  %v1881 = vadd.f32 %v682, %v1873
  %v1882 = vadd.f32 %v687, %v1878
  %v1883 = vxor.u32 %v1881, 2147483648
  %v1884 = vxor.u32 %v1882, 2147483648
  %v1885 = vmul.f32 %v1883, 1.442695
  %v1886 = vpow.pop %v1885
  %v1887 = vmul.f32 %v1884, 1.442695
  %v1888 = vpow.pop %v1887
  %v1889 = vadd.f32 %v1886, 1.0
  %v1890 = vadd.f32 %v1888, 1.0
  %v1891 = vrcp.pop %v1889
  %v1892 = vmul.f32 1.0, %v1891
  %v1893 = vrcp.pop %v1890
  %v1894 = vmul.f32 1.0, %v1893
  %v1895 = vtanh.pop %v1881
  %v1896 = vtanh.pop %v1882
  %v1897 = vmul.f32 %v1892, %v1782
  %v1898 = vmul.f32 %v1894, %v1783
  %1901 = vrot.lane.b32.xlu0 %v1895, 96
  %v1902 = vpop.permute.xlu0 %1901
  %1903 = vrot.lane.b32.xlu0 %v1896, 96
  %v1904 = vpop.permute.xlu0 %1903
  %v1907 = vmul.f32 %v1892, %v1902
  %v1908 = vmul.f32 %v1894, %v1904
  %1911 = vrot.lane.b32.xlu0 %v1907, 16
  %v1912 = vpop.permute.xlu0 %1911
  %1913 = vrot.lane.b32.xlu0 %v1908, 16
  %v1914 = vpop.permute.xlu0 %1913
  %v1917 = vadd.f32 %v1897, %v1912
  %v1918 = vadd.f32 %v1898, %v1914
  %v1919 = vtanh.pop %v1917
  %v1920 = vtanh.pop %v1918
  %1923 = vrot.lane.b32.xlu0 %v1919, 32
  %v1924 = vpop.permute.xlu0 %1923
  %1925 = vrot.lane.b32.xlu0 %v1920, 32
  %v1926 = vpop.permute.xlu0 %1925
  %v1929 = vmul.f32 %v1892, %v1924
  %v1930 = vmul.f32 %v1894, %v1926
  %1933 = vrot.lane.b32.xlu0 %v1929, 80
  %v1934 = vpop.permute.xlu0 %1933
  %1935 = vrot.lane.b32.xlu0 %v1930, 80
  %v1936 = vpop.permute.xlu0 %1935
  %v1937 = vsel %vm722, %v1934, 0
  %v1939 = vsel %vm722, %v1936, 0
  %1941 = vmatprep.subr.mxu0 0.0
  %1942 = vmatpush1.msra.mxu0 %v720
  %1943 = vmatprep.subr.mxu0 0.0
  %1944 = vmatpush1.msra.mxu0 %v721
  %1945 = vmatprep.subr.mxu0 0.0
  %1946 = vmatpush1.msra.mxu0 0.0
  %1947 = vmatprep.subr.mxu0 0.0
  %1948 = vmatpush1.msra.mxu0 0.0
  %1949 = vmatprep.subr.mxu0 0.0
  %1950 = vmatpush1.msra.mxu0 0.0
  %1951 = vmatprep.subr.mxu0 0.0
  %1952 = vmatpush1.msra.mxu0 0.0
  %1953 = vmatprep.subr.mxu0 0.0
  %1954 = vmatpush1.msra.mxu0 0.0
  %1955 = vmatprep.subr.mxu0 0.0
  %1956 = vmatpush1.msra.mxu0 0.0
  %1957 = vmatprep.subr.mxu0 0.0
  %1958 = vmatpush1.msra.mxu0 0.0
  %1959 = vmatprep.subr.mxu0 0.0
  %1960 = vmatpush1.msra.mxu0 0.0
  %1961 = vmatprep.subr.mxu0 0.0
  %1962 = vmatpush1.msra.mxu0 0.0
  %1963 = vmatprep.subr.mxu0 0.0
  %1964 = vmatpush1.msra.mxu0 0.0
  %1965 = vmatprep.subr.mxu0 0.0
  %1966 = vmatpush1.msra.mxu0 0.0
  %1967 = vmatprep.subr.mxu0 0.0
  %1968 = vmatpush1.msra.mxu0 0.0
  %1969 = vmatprep.subr.mxu0 0.0
  %1970 = vmatpush1.msra.mxu0 0.0
  %1971 = vmatprep.subr.mxu0 0.0
  %1972 = vmatpush1.msra.mxu0 0.0
  %1973 = vmatprep.subr.mxu0 0.0
  %1974 = vmatpush1.msra.mxu0 0.0
  %1975 = vmatprep.subr.mxu0 0.0
  %1976 = vmatpush1.msra.mxu0 0.0
  %1977 = vmatprep.subr.mxu0 0.0
  %1978 = vmatpush1.msra.mxu0 0.0
  %1979 = vmatprep.subr.mxu0 0.0
  %1980 = vmatpush1.msra.mxu0 0.0
  %1981 = vmatprep.subr.mxu0 0.0
  %1982 = vmatpush1.msra.mxu0 0.0
  %1983 = vmatprep.subr.mxu0 0.0
  %1984 = vmatpush1.msra.mxu0 0.0
  %1985 = vmatprep.subr.mxu0 0.0
  %1986 = vmatpush1.msra.mxu0 0.0
  %1987 = vmatprep.subr.mxu0 0.0
  %1988 = vmatpush1.msra.mxu0 0.0
  %1989 = vmatprep.subr.mxu0 0.0
  %1990 = vmatpush1.msra.mxu0 0.0
  %1991 = vmatprep.subr.mxu0 0.0
  %1992 = vmatpush1.msra.mxu0 0.0
  %1993 = vmatprep.subr.mxu0 0.0
  %1994 = vmatpush1.msra.mxu0 0.0
  %1995 = vmatprep.subr.mxu0 0.0
  %1996 = vmatpush1.msra.mxu0 0.0
  %1997 = vmatprep.subr.mxu0 0.0
  %1998 = vmatpush1.msra.mxu0 0.0
  %1999 = vmatprep.subr.mxu0 0.0
  %2000 = vmatpush1.msra.mxu0 0.0
  %2001 = vmatprep.subr.mxu0 0.0
  %2002 = vmatpush1.msra.mxu0 0.0
  %2003 = vmatprep.subr.mxu0 0.0
  %2004 = vmatpush1.msra.mxu0 0.0
  %2005 = vmatprep.mubr.f32.mxu0 0.0
  %2006 = vmatmul.mubr.f32.gmra.mrb[0].mxu0 %v1937
  %v2007 = vpop.f32.mrb[0].mxu0
  %v2008 = vadd.f32 0.0, %v2007
  %v2009 = vpop.f32.mrb[0].mxu0
  %2010 = vmatprep.mubr.f32.mxu0 0.0
  %2011 = vmatmul.mubr.f32.gmra.mrb[0].mxu0 %v1939
  %v2012 = vpop.f32.mrb[0].mxu0
  %v2013 = vadd.f32 0.0, %v2012
  %v2014 = vpop.f32.mrb[0].mxu0
  %2015 = vdwg.mxu0
  %v2016 = vadd.f32 %v692, %v2008
  %v2017 = vadd.f32 %v697, %v2013
  %v2018 = vxor.u32 %v2016, 2147483648
  %v2019 = vxor.u32 %v2017, 2147483648
  %v2020 = vmul.f32 %v2018, 1.442695
  %v2021 = vpow.pop %v2020
  %v2022 = vmul.f32 %v2019, 1.442695
  %v2023 = vpow.pop %v2022
  %v2024 = vadd.f32 %v2021, 1.0
  %v2025 = vadd.f32 %v2023, 1.0
  %v2026 = vrcp.pop %v2024
  %v2027 = vmul.f32 1.0, %v2026
  %v2028 = vrcp.pop %v2025
  %v2029 = vmul.f32 1.0, %v2028
  %v2030 = vtanh.pop %v2016
  %v2031 = vtanh.pop %v2017
  %v2032 = vmul.f32 %v2027, %v1917
  %v2033 = vmul.f32 %v2029, %v1918
  %2036 = vrot.lane.b32.xlu0 %v2030, 96
  %v2037 = vpop.permute.xlu0 %2036
  %2038 = vrot.lane.b32.xlu0 %v2031, 96
  %v2039 = vpop.permute.xlu0 %2038
  %v2042 = vmul.f32 %v2027, %v2037
  %v2043 = vmul.f32 %v2029, %v2039
  %2046 = vrot.lane.b32.xlu0 %v2042, 16
  %v2047 = vpop.permute.xlu0 %2046
  %2048 = vrot.lane.b32.xlu0 %v2043, 16
  %v2049 = vpop.permute.xlu0 %2048
  %v2052 = vadd.f32 %v2032, %v2047
  %v2053 = vadd.f32 %v2033, %v2049
  %v2054 = vtanh.pop %v2052
  %v2055 = vtanh.pop %v2053
  %2058 = vrot.lane.b32.xlu0 %v2054, 32
  %v2059 = vpop.permute.xlu0 %2058
  %2060 = vrot.lane.b32.xlu0 %v2055, 32
  %v2061 = vpop.permute.xlu0 %2060
  %v2064 = vmul.f32 %v2027, %v2059
  %v2065 = vmul.f32 %v2029, %v2061
  %2068 = vrot.lane.b32.xlu0 %v2064, 80
  %v2069 = vpop.permute.xlu0 %2068
  %2070 = vrot.lane.b32.xlu0 %v2065, 80
  %v2071 = vpop.permute.xlu0 %2070
  %v2072 = vsel %vm722, %v2069, 0
  %v2074 = vsel %vm722, %v2071, 0
  %2076 = vmatprep.subr.mxu0 0.0
  %2077 = vmatpush1.msra.mxu0 %v720
  %2078 = vmatprep.subr.mxu0 0.0
  %2079 = vmatpush1.msra.mxu0 %v721
  %2080 = vmatprep.subr.mxu0 0.0
  %2081 = vmatpush1.msra.mxu0 0.0
  %2082 = vmatprep.subr.mxu0 0.0
  %2083 = vmatpush1.msra.mxu0 0.0
  %2084 = vmatprep.subr.mxu0 0.0
  %2085 = vmatpush1.msra.mxu0 0.0
  %2086 = vmatprep.subr.mxu0 0.0
  %2087 = vmatpush1.msra.mxu0 0.0
  %2088 = vmatprep.subr.mxu0 0.0
  %2089 = vmatpush1.msra.mxu0 0.0
  %2090 = vmatprep.subr.mxu0 0.0
  %2091 = vmatpush1.msra.mxu0 0.0
  %2092 = vmatprep.subr.mxu0 0.0
  %2093 = vmatpush1.msra.mxu0 0.0
  %2094 = vmatprep.subr.mxu0 0.0
  %2095 = vmatpush1.msra.mxu0 0.0
  %2096 = vmatprep.subr.mxu0 0.0
  %2097 = vmatpush1.msra.mxu0 0.0
  %2098 = vmatprep.subr.mxu0 0.0
  %2099 = vmatpush1.msra.mxu0 0.0
  %2100 = vmatprep.subr.mxu0 0.0
  %2101 = vmatpush1.msra.mxu0 0.0
  %2102 = vmatprep.subr.mxu0 0.0
  %2103 = vmatpush1.msra.mxu0 0.0
  %2104 = vmatprep.subr.mxu0 0.0
  %2105 = vmatpush1.msra.mxu0 0.0
  %2106 = vmatprep.subr.mxu0 0.0
  %2107 = vmatpush1.msra.mxu0 0.0
  %2108 = vmatprep.subr.mxu0 0.0
  %2109 = vmatpush1.msra.mxu0 0.0
  %2110 = vmatprep.subr.mxu0 0.0
  %2111 = vmatpush1.msra.mxu0 0.0
  %2112 = vmatprep.subr.mxu0 0.0
  %2113 = vmatpush1.msra.mxu0 0.0
  %2114 = vmatprep.subr.mxu0 0.0
  %2115 = vmatpush1.msra.mxu0 0.0
  %2116 = vmatprep.subr.mxu0 0.0
  %2117 = vmatpush1.msra.mxu0 0.0
  %2118 = vmatprep.subr.mxu0 0.0
  %2119 = vmatpush1.msra.mxu0 0.0
  %2120 = vmatprep.subr.mxu0 0.0
  %2121 = vmatpush1.msra.mxu0 0.0
  %2122 = vmatprep.subr.mxu0 0.0
  %2123 = vmatpush1.msra.mxu0 0.0
  %2124 = vmatprep.subr.mxu0 0.0
  %2125 = vmatpush1.msra.mxu0 0.0
  %2126 = vmatprep.subr.mxu0 0.0
  %2127 = vmatpush1.msra.mxu0 0.0
  %2128 = vmatprep.subr.mxu0 0.0
  %2129 = vmatpush1.msra.mxu0 0.0
  %2130 = vmatprep.subr.mxu0 0.0
  %2131 = vmatpush1.msra.mxu0 0.0
  %2132 = vmatprep.subr.mxu0 0.0
  %2133 = vmatpush1.msra.mxu0 0.0
  %2134 = vmatprep.subr.mxu0 0.0
  %2135 = vmatpush1.msra.mxu0 0.0
  %2136 = vmatprep.subr.mxu0 0.0
  %2137 = vmatpush1.msra.mxu0 0.0
  %2138 = vmatprep.subr.mxu0 0.0
  %2139 = vmatpush1.msra.mxu0 0.0
  %2140 = vmatprep.mubr.f32.mxu0 0.0
  %2141 = vmatmul.mubr.f32.gmra.mrb[0].mxu0 %v2072
  %v2142 = vpop.f32.mrb[0].mxu0
  %v2143 = vadd.f32 0.0, %v2142
  %v2144 = vpop.f32.mrb[0].mxu0
  %2145 = vmatprep.mubr.f32.mxu0 0.0
  %2146 = vmatmul.mubr.f32.gmra.mrb[0].mxu0 %v2074
  %v2147 = vpop.f32.mrb[0].mxu0
  %v2148 = vadd.f32 0.0, %v2147
  %v2149 = vpop.f32.mrb[0].mxu0
  %2150 = vdwg.mxu0
  %v2151 = vadd.f32 %v702, %v2143
  %v2152 = vadd.f32 %v707, %v2148
  %v2153 = vxor.u32 %v2151, 2147483648
  %v2154 = vxor.u32 %v2152, 2147483648
  %v2155 = vmul.f32 %v2153, 1.442695
  %v2156 = vpow.pop %v2155
  %v2157 = vmul.f32 %v2154, 1.442695
  %v2158 = vpow.pop %v2157
  %v2159 = vadd.f32 %v2156, 1.0
  %v2160 = vadd.f32 %v2158, 1.0
  %v2161 = vrcp.pop %v2159
  %v2162 = vmul.f32 1.0, %v2161
  %v2163 = vrcp.pop %v2160
  %v2164 = vmul.f32 1.0, %v2163
  %v2165 = vtanh.pop %v2151
  %v2166 = vtanh.pop %v2152
  %v2167 = vmul.f32 %v2162, %v2052
  %v2168 = vmul.f32 %v2164, %v2053
  %2171 = vrot.lane.b32.xlu0 %v2165, 96
  %v2172 = vpop.permute.xlu0 %2171
  %2173 = vrot.lane.b32.xlu0 %v2166, 96
  %v2174 = vpop.permute.xlu0 %2173
  %v2177 = vmul.f32 %v2162, %v2172
  %v2178 = vmul.f32 %v2164, %v2174
  %2181 = vrot.lane.b32.xlu0 %v2177, 16
  %v2182 = vpop.permute.xlu0 %2181
  %2183 = vrot.lane.b32.xlu0 %v2178, 16
  %v2184 = vpop.permute.xlu0 %2183
  %v2187 = vadd.f32 %v2167, %v2182
  %v2188 = vadd.f32 %v2168, %v2184
  %v2189 = vtanh.pop %v2187
  %v2190 = vtanh.pop %v2188
  %2193 = vrot.lane.b32.xlu0 %v2189, 32
  %v2194 = vpop.permute.xlu0 %2193
  %2195 = vrot.lane.b32.xlu0 %v2190, 32
  %v2196 = vpop.permute.xlu0 %2195
  %v2199 = vmul.f32 %v2162, %v2194
  %v2200 = vmul.f32 %v2164, %v2196
  %2203 = vrot.lane.b32.xlu0 %v2199, 80
  %v2204 = vpop.permute.xlu0 %2203
  %2205 = vrot.lane.b32.xlu0 %v2200, 80
  %v2206 = vpop.permute.xlu0 %2205
  %v2207 = vsel %vm722, %v2204, 0
  %v2209 = vsel %vm722, %v2206, 0
  %2211 = vmatprep.subr.mxu0 0.0
  %2212 = vmatpush1.msra.mxu0 %v720
  %2213 = vmatprep.subr.mxu0 0.0
  %2214 = vmatpush1.msra.mxu0 %v721
  %2215 = vmatprep.subr.mxu0 0.0
  %2216 = vmatpush1.msra.mxu0 0.0
  %2217 = vmatprep.subr.mxu0 0.0
  %2218 = vmatpush1.msra.mxu0 0.0
  %2219 = vmatprep.subr.mxu0 0.0
  %2220 = vmatpush1.msra.mxu0 0.0
  %2221 = vmatprep.subr.mxu0 0.0
  %2222 = vmatpush1.msra.mxu0 0.0
  %2223 = vmatprep.subr.mxu0 0.0
  %2224 = vmatpush1.msra.mxu0 0.0
  %2225 = vmatprep.subr.mxu0 0.0
  %2226 = vmatpush1.msra.mxu0 0.0
  %2227 = vmatprep.subr.mxu0 0.0
  %2228 = vmatpush1.msra.mxu0 0.0
  %2229 = vmatprep.subr.mxu0 0.0
  %2230 = vmatpush1.msra.mxu0 0.0
  %2231 = vmatprep.subr.mxu0 0.0
  %2232 = vmatpush1.msra.mxu0 0.0
  %2233 = vmatprep.subr.mxu0 0.0
  %2234 = vmatpush1.msra.mxu0 0.0
  %2235 = vmatprep.subr.mxu0 0.0
  %2236 = vmatpush1.msra.mxu0 0.0
  %2237 = vmatprep.subr.mxu0 0.0
  %2238 = vmatpush1.msra.mxu0 0.0
  %2239 = vmatprep.subr.mxu0 0.0
  %2240 = vmatpush1.msra.mxu0 0.0
  %2241 = vmatprep.subr.mxu0 0.0
  %2242 = vmatpush1.msra.mxu0 0.0
  %2243 = vmatprep.subr.mxu0 0.0
  %2244 = vmatpush1.msra.mxu0 0.0
  %2245 = vmatprep.subr.mxu0 0.0
  %2246 = vmatpush1.msra.mxu0 0.0
  %2247 = vmatprep.subr.mxu0 0.0
  %2248 = vmatpush1.msra.mxu0 0.0
  %2249 = vmatprep.subr.mxu0 0.0
  %2250 = vmatpush1.msra.mxu0 0.0
  %2251 = vmatprep.subr.mxu0 0.0
  %2252 = vmatpush1.msra.mxu0 0.0
  %2253 = vmatprep.subr.mxu0 0.0
  %2254 = vmatpush1.msra.mxu0 0.0
  %2255 = vmatprep.subr.mxu0 0.0
  %2256 = vmatpush1.msra.mxu0 0.0
  %2257 = vmatprep.subr.mxu0 0.0
  %2258 = vmatpush1.msra.mxu0 0.0
  %2259 = vmatprep.subr.mxu0 0.0
  %2260 = vmatpush1.msra.mxu0 0.0
  %2261 = vmatprep.subr.mxu0 0.0
  %2262 = vmatpush1.msra.mxu0 0.0
  %2263 = vmatprep.subr.mxu0 0.0
  %2264 = vmatpush1.msra.mxu0 0.0
  %2265 = vmatprep.subr.mxu0 0.0
  %2266 = vmatpush1.msra.mxu0 0.0
  %2267 = vmatprep.subr.mxu0 0.0
  %2268 = vmatpush1.msra.mxu0 0.0
  %2269 = vmatprep.subr.mxu0 0.0
  %2270 = vmatpush1.msra.mxu0 0.0
  %2271 = vmatprep.subr.mxu0 0.0
  %2272 = vmatpush1.msra.mxu0 0.0
  %2273 = vmatprep.subr.mxu0 0.0
  %2274 = vmatpush1.msra.mxu0 0.0
  %2275 = vmatprep.mubr.f32.mxu0 0.0
  %2276 = vmatmul.mubr.f32.gmra.mrb[0].mxu0 %v2207
  %v2277 = vpop.f32.mrb[0].mxu0
  %v2278 = vadd.f32 0.0, %v2277
  %v2279 = vpop.f32.mrb[0].mxu0
  %2280 = vmatprep.mubr.f32.mxu0 0.0
  %2281 = vmatmul.mubr.f32.gmra.mrb[0].mxu0 %v2209
  %v2282 = vpop.f32.mrb[0].mxu0
  %v2283 = vadd.f32 0.0, %v2282
  %v2284 = vpop.f32.mrb[0].mxu0
  %2285 = vdwg.mxu0
  %v2286 = vadd.f32 %v712, %v2278
  %v2287 = vadd.f32 %v717, %v2283
  %v2288 = vxor.u32 %v2286, 2147483648
  %v2289 = vxor.u32 %v2287, 2147483648
  %v2290 = vmul.f32 %v2288, 1.442695
  %v2291 = vpow.pop %v2290
  %v2292 = vmul.f32 %v2289, 1.442695
  %v2293 = vpow.pop %v2292
  %v2294 = vadd.f32 %v2291, 1.0
  %v2295 = vadd.f32 %v2293, 1.0
  %v2296 = vrcp.pop %v2294
  %v2297 = vmul.f32 1.0, %v2296
  %v2298 = vrcp.pop %v2295
  %v2299 = vmul.f32 1.0, %v2298
  %v2300 = vtanh.pop %v2286
  %v2301 = vtanh.pop %v2287
  %v2302 = vmul.f32 %v2297, %v2187
  %v2303 = vmul.f32 %v2299, %v2188
  %2306 = vrot.lane.b32.xlu0 %v2300, 96
  %v2307 = vpop.permute.xlu0 %2306
  %2308 = vrot.lane.b32.xlu0 %v2301, 96
  %v2309 = vpop.permute.xlu0 %2308
  %v2312 = vmul.f32 %v2297, %v2307
  %v2313 = vmul.f32 %v2299, %v2309
  %2316 = vrot.lane.b32.xlu0 %v2312, 16
  %v2317 = vpop.permute.xlu0 %2316
  %2318 = vrot.lane.b32.xlu0 %v2313, 16
  %v2319 = vpop.permute.xlu0 %2318
  %v2322 = vadd.f32 %v2302, %v2317
  %v2323 = vadd.f32 %v2303, %v2319
  %v2324 = vtanh.pop %v2322
  %v2325 = vtanh.pop %v2323
  %2328 = vrot.lane.b32.xlu0 %v2324, 32
  %v2329 = vpop.permute.xlu0 %2328
  %2330 = vrot.lane.b32.xlu0 %v2325, 32
  %v2331 = vpop.permute.xlu0 %2330
  %v2334 = vmul.f32 %v2297, %v2329
  %v2335 = vmul.f32 %v2299, %v2331
  %v2336 = vld [vmem:[%s6] sm:$0xff]
  %v2337 = vld [vmem:[%s6 + $0x8] sm:$0xff]
  %v2338 = vld [vmem:[%s7] sm:$0x1]
  %v2340 = vlaneseq
  %v2341 = vshrl.u32 %v2340, 7
  %v2342 = vsub.s32 0, %v2341
  %v2343 = vrot.slane %v2338, %v2342
  %2347 = vrot.lane.b32.xlu0 %v2334, 80
  %v2348 = vpop.permute.xlu0 %2347
  %2349 = vrot.lane.b32.xlu0 %v2335, 80
  %v2350 = vpop.permute.xlu0 %2349
  %v2351 = vsel %vm722, %v2348, 0
  %v2353 = vsel %vm722, %v2350, 0
  %2355 = vmatprep.subr.mxu0 0.0
  %2356 = vmatpush1.msra.mxu0 %v2336
  %2357 = vmatprep.subr.mxu0 0.0
  %2358 = vmatpush1.msra.mxu0 %v2337
  %2359 = vmatprep.subr.mxu0 0.0
  %2360 = vmatpush1.msra.mxu0 0.0
  %2361 = vmatprep.subr.mxu0 0.0
  %2362 = vmatpush1.msra.mxu0 0.0
  %2363 = vmatprep.subr.mxu0 0.0
  %2364 = vmatpush1.msra.mxu0 0.0
  %2365 = vmatprep.subr.mxu0 0.0
  %2366 = vmatpush1.msra.mxu0 0.0
  %2367 = vmatprep.subr.mxu0 0.0
  %2368 = vmatpush1.msra.mxu0 0.0
  %2369 = vmatprep.subr.mxu0 0.0
  %2370 = vmatpush1.msra.mxu0 0.0
  %2371 = vmatprep.subr.mxu0 0.0
  %2372 = vmatpush1.msra.mxu0 0.0
  %2373 = vmatprep.subr.mxu0 0.0
  %2374 = vmatpush1.msra.mxu0 0.0
  %2375 = vmatprep.subr.mxu0 0.0
  %2376 = vmatpush1.msra.mxu0 0.0
  %2377 = vmatprep.subr.mxu0 0.0
  %2378 = vmatpush1.msra.mxu0 0.0
  %2379 = vmatprep.subr.mxu0 0.0
  %2380 = vmatpush1.msra.mxu0 0.0
  %2381 = vmatprep.subr.mxu0 0.0
  %2382 = vmatpush1.msra.mxu0 0.0
  %2383 = vmatprep.subr.mxu0 0.0
  %2384 = vmatpush1.msra.mxu0 0.0
  %2385 = vmatprep.subr.mxu0 0.0
  %2386 = vmatpush1.msra.mxu0 0.0
  %2387 = vmatprep.subr.mxu0 0.0
  %2388 = vmatpush1.msra.mxu0 0.0
  %2389 = vmatprep.subr.mxu0 0.0
  %2390 = vmatpush1.msra.mxu0 0.0
  %2391 = vmatprep.subr.mxu0 0.0
  %2392 = vmatpush1.msra.mxu0 0.0
  %2393 = vmatprep.subr.mxu0 0.0
  %2394 = vmatpush1.msra.mxu0 0.0
  %2395 = vmatprep.subr.mxu0 0.0
  %2396 = vmatpush1.msra.mxu0 0.0
  %2397 = vmatprep.subr.mxu0 0.0
  %2398 = vmatpush1.msra.mxu0 0.0
  %2399 = vmatprep.subr.mxu0 0.0
  %2400 = vmatpush1.msra.mxu0 0.0
  %2401 = vmatprep.subr.mxu0 0.0
  %2402 = vmatpush1.msra.mxu0 0.0
  %2403 = vmatprep.subr.mxu0 0.0
  %2404 = vmatpush1.msra.mxu0 0.0
  %2405 = vmatprep.subr.mxu0 0.0
  %2406 = vmatpush1.msra.mxu0 0.0
  %2407 = vmatprep.subr.mxu0 0.0
  %2408 = vmatpush1.msra.mxu0 0.0
  %2409 = vmatprep.subr.mxu0 0.0
  %2410 = vmatpush1.msra.mxu0 0.0
  %2411 = vmatprep.subr.mxu0 0.0
  %2412 = vmatpush1.msra.mxu0 0.0
  %2413 = vmatprep.subr.mxu0 0.0
  %2414 = vmatpush1.msra.mxu0 0.0
  %2415 = vmatprep.subr.mxu0 0.0
  %2416 = vmatpush1.msra.mxu0 0.0
  %2417 = vmatprep.subr.mxu0 0.0
  %2418 = vmatpush1.msra.mxu0 0.0
  %2419 = vmatprep.mubr.f32.mxu0 0.0
  %2420 = vmatmul.mubr.f32.gmra.mrb[0].mxu0 %v857
  %v2421 = vpop.f32.mrb[0].mxu0
  %v2422 = vadd.f32 %v2343, %v2421
  %v2423 = vpop.f32.mrb[0].mxu0
  %2424 = vmatprep.mubr.f32.mxu0 0.0
  %2425 = vmatmul.mubr.f32.gmra.mrb[0].mxu0 %v859
  %v2426 = vpop.f32.mrb[0].mxu0
  %v2427 = vadd.f32 %v2343, %v2426
  %v2428 = vpop.f32.mrb[0].mxu0
  %2429 = vmatprep.mubr.f32.mxu0 0.0
  %2430 = vmatmul.mubr.f32.gmra.mrb[0].mxu0 %v992
  %v2431 = vpop.f32.mrb[0].mxu0
  %v2432 = vadd.f32 %v2343, %v2431
  %v2433 = vpop.f32.mrb[0].mxu0
  %2434 = vmatprep.mubr.f32.mxu0 0.0
  %2435 = vmatmul.mubr.f32.gmra.mrb[0].mxu0 %v994
  %v2436 = vpop.f32.mrb[0].mxu0
  %v2437 = vadd.f32 %v2343, %v2436
  %v2438 = vpop.f32.mrb[0].mxu0
  %2439 = vmatprep.mubr.f32.mxu0 0.0
  %2440 = vmatmul.mubr.f32.gmra.mrb[0].mxu0 %v1127
  %v2441 = vpop.f32.mrb[0].mxu0
  %v2442 = vadd.f32 %v2343, %v2441
  %v2443 = vpop.f32.mrb[0].mxu0
  %2444 = vmatprep.mubr.f32.mxu0 0.0
  %2445 = vmatmul.mubr.f32.gmra.mrb[0].mxu0 %v1129
  %v2446 = vpop.f32.mrb[0].mxu0
  %v2447 = vadd.f32 %v2343, %v2446
  %v2448 = vpop.f32.mrb[0].mxu0
  %2449 = vmatprep.mubr.f32.mxu0 0.0
  %2450 = vmatmul.mubr.f32.gmra.mrb[0].mxu0 %v1262
  %v2451 = vpop.f32.mrb[0].mxu0
  %v2452 = vadd.f32 %v2343, %v2451
  %v2453 = vpop.f32.mrb[0].mxu0
  %2454 = vmatprep.mubr.f32.mxu0 0.0
  %2455 = vmatmul.mubr.f32.gmra.mrb[0].mxu0 %v1264
  %v2456 = vpop.f32.mrb[0].mxu0
  %v2457 = vadd.f32 %v2343, %v2456
  %v2458 = vpop.f32.mrb[0].mxu0
  %2459 = vmatprep.mubr.f32.mxu0 0.0
  %2460 = vmatmul.mubr.f32.gmra.mrb[0].mxu0 %v1397
  %v2461 = vpop.f32.mrb[0].mxu0
  %v2462 = vadd.f32 %v2343, %v2461
  %v2463 = vpop.f32.mrb[0].mxu0
  %2464 = vmatprep.mubr.f32.mxu0 0.0
  %2465 = vmatmul.mubr.f32.gmra.mrb[0].mxu0 %v1399
  %v2466 = vpop.f32.mrb[0].mxu0
  %v2467 = vadd.f32 %v2343, %v2466
  %v2468 = vpop.f32.mrb[0].mxu0
  %2469 = vmatprep.mubr.f32.mxu0 0.0
  %2470 = vmatmul.mubr.f32.gmra.mrb[0].mxu0 %v1532
  %v2471 = vpop.f32.mrb[0].mxu0
  %v2472 = vadd.f32 %v2343, %v2471
  %v2473 = vpop.f32.mrb[0].mxu0
  %2474 = vmatprep.mubr.f32.mxu0 0.0
  %2475 = vmatmul.mubr.f32.gmra.mrb[0].mxu0 %v1534
  %v2476 = vpop.f32.mrb[0].mxu0
  %v2477 = vadd.f32 %v2343, %v2476
  %v2478 = vpop.f32.mrb[0].mxu0
  %2479 = vmatprep.mubr.f32.mxu0 0.0
  %2480 = vmatmul.mubr.f32.gmra.mrb[0].mxu0 %v1667
  %v2481 = vpop.f32.mrb[0].mxu0
  %v2482 = vadd.f32 %v2343, %v2481
  %v2483 = vpop.f32.mrb[0].mxu0
  %2484 = vmatprep.mubr.f32.mxu0 0.0
  %2485 = vmatmul.mubr.f32.gmra.mrb[0].mxu0 %v1669
  %v2486 = vpop.f32.mrb[0].mxu0
  %v2487 = vadd.f32 %v2343, %v2486
  %v2488 = vpop.f32.mrb[0].mxu0
  %2489 = vmatprep.mubr.f32.mxu0 0.0
  %2490 = vmatmul.mubr.f32.gmra.mrb[0].mxu0 %v1802
  %v2491 = vpop.f32.mrb[0].mxu0
  %v2492 = vadd.f32 %v2343, %v2491
  %v2493 = vpop.f32.mrb[0].mxu0
  %2494 = vmatprep.mubr.f32.mxu0 0.0
  %2495 = vmatmul.mubr.f32.gmra.mrb[0].mxu0 %v1804
  %v2496 = vpop.f32.mrb[0].mxu0
  %v2497 = vadd.f32 %v2343, %v2496
  %v2498 = vpop.f32.mrb[0].mxu0
  %2499 = vmatprep.mubr.f32.mxu0 0.0
  %2500 = vmatmul.mubr.f32.gmra.mrb[0].mxu0 %v1937
  %v2501 = vpop.f32.mrb[0].mxu0
  %v2502 = vadd.f32 %v2343, %v2501
  %v2503 = vpop.f32.mrb[0].mxu0
  %2504 = vmatprep.mubr.f32.mxu0 0.0
  %2505 = vmatmul.mubr.f32.gmra.mrb[0].mxu0 %v1939
  %v2506 = vpop.f32.mrb[0].mxu0
  %v2507 = vadd.f32 %v2343, %v2506
  %v2508 = vpop.f32.mrb[0].mxu0
  %2509 = vmatprep.mubr.f32.mxu0 0.0
  %2510 = vmatmul.mubr.f32.gmra.mrb[0].mxu0 %v2072
  %v2511 = vpop.f32.mrb[0].mxu0
  %v2512 = vadd.f32 %v2343, %v2511
  %v2513 = vpop.f32.mrb[0].mxu0
  %2514 = vmatprep.mubr.f32.mxu0 0.0
  %2515 = vmatmul.mubr.f32.gmra.mrb[0].mxu0 %v2074
  %v2516 = vpop.f32.mrb[0].mxu0
  %v2517 = vadd.f32 %v2343, %v2516
  %v2518 = vpop.f32.mrb[0].mxu0
  %2519 = vmatprep.mubr.f32.mxu0 0.0
  %2520 = vmatmul.mubr.f32.gmra.mrb[0].mxu0 %v2207
  %v2521 = vpop.f32.mrb[0].mxu0
  %v2522 = vadd.f32 %v2343, %v2521
  %v2523 = vpop.f32.mrb[0].mxu0
  %2524 = vmatprep.mubr.f32.mxu0 0.0
  %2525 = vmatmul.mubr.f32.gmra.mrb[0].mxu0 %v2209
  %v2526 = vpop.f32.mrb[0].mxu0
  %v2527 = vadd.f32 %v2343, %v2526
  %v2528 = vpop.f32.mrb[0].mxu0
  %2529 = vmatprep.mubr.f32.mxu0 0.0
  %2530 = vmatmul.mubr.f32.gmra.mrb[0].mxu0 %v2351
  %v2531 = vpop.f32.mrb[0].mxu0
  %v2532 = vadd.f32 %v2343, %v2531
  %v2533 = vpop.f32.mrb[0].mxu0
  %2534 = vmatprep.mubr.f32.mxu0 0.0
  %2535 = vmatmul.mubr.f32.gmra.mrb[0].mxu0 %v2353
  %v2536 = vpop.f32.mrb[0].mxu0
  %v2537 = vadd.f32 %v2343, %v2536
  %v2538 = vpop.f32.mrb[0].mxu0
  %2539 = vdwg.mxu0
  %v2540 = vadd.f32 %v50, %v2422
  %v2541 = vadd.f32 %v51, %v2427
  %v2542 = vadd.f32 %v52, %v2432
  %v2543 = vadd.f32 %v53, %v2437
  %v2544 = vadd.f32 %v54, %v2442
  %v2545 = vadd.f32 %v55, %v2447
  %v2546 = vadd.f32 %v56, %v2452
  %v2547 = vadd.f32 %v57, %v2457
  %v2548 = vadd.f32 %v58, %v2462
  %v2549 = vadd.f32 %v59, %v2467
  %v2550 = vadd.f32 %v60, %v2472
  %v2551 = vadd.f32 %v61, %v2477
  %v2552 = vadd.f32 %v62, %v2482
  %v2553 = vadd.f32 %v63, %v2487
  %v2554 = vadd.f32 %v64, %v2492
  %v2555 = vadd.f32 %v65, %v2497
  %v2556 = vadd.f32 %v66, %v2502
  %v2557 = vadd.f32 %v67, %v2507
  %v2558 = vadd.f32 %v68, %v2512
  %v2559 = vadd.f32 %v69, %v2517
  %v2560 = vadd.f32 %v70, %v2522
  %v2561 = vadd.f32 %v71, %v2527
  %v2562 = vadd.f32 %v72, %v2532
  %v2563 = vadd.f32 %v73, %v2537
  %v2576 = vrot.slane %v2542, 7
  %vm2577 = vcmask 1041409
  %v2578 = vsel %vm2577, %v2576, %v2540
  %v2579 = vrot.slane %v2544, 6
  %vm2580 = vcmask 1042434
  %v2581 = vsel %vm2580, %v2579, %v2578
  %v2582 = vrot.slane %v2546, 5
  %vm2583 = vcmask 1043459
  %v2584 = vsel %vm2583, %v2582, %v2581
  %v2585 = vrot.slane %v2548, 4
  %vm2586 = vcmask 1044484
  %v2587 = vsel %vm2586, %v2585, %v2584
  %v2588 = vrot.slane %v2550, 3
  %vm2589 = vcmask 1045509
  %v2590 = vsel %vm2589, %v2588, %v2587
  %v2591 = vrot.slane %v2552, 2
  %vm2592 = vcmask 1046534
  %v2593 = vsel %vm2592, %v2591, %v2590
  %v2594 = vrot.slane %v2554, 1
  %vm2595 = vcmask 1047559
  %v2596 = vsel %vm2595, %v2594, %v2593
  %v2597 = vrot.slane %v2558, 7
  %v2598 = vsel %vm2577, %v2597, %v2556
  %v2599 = vrot.slane %v2560, 6
  %v2600 = vsel %vm2580, %v2599, %v2598
  %v2601 = vrot.slane %v2562, 5
  %v2602 = vsel %vm2583, %v2601, %v2600
  %v2605 = vrot.slane %v2540, 3
  %v2606 = vrot.slane %v2542, 2
  %v2607 = vsel %vm2589, %v2606, %v2605
  %v2608 = vrot.slane %v2544, 1
  %v2609 = vsel %vm2592, %v2608, %v2607
  %v2610 = vsel %vm2595, %v2546, %v2609
  %v2611 = vrot.slane %v2548, 7
  %v2612 = vrot.slane %v2550, 6
  %v2613 = vsel %vm2577, %v2612, %v2611
  %v2614 = vrot.slane %v2552, 5
  %v2615 = vsel %vm2580, %v2614, %v2613
  %v2616 = vrot.slane %v2554, 4
  %v2617 = vsel %vm2583, %v2616, %v2615
  %v2618 = vrot.slane %v2556, 3
  %v2619 = vsel %vm2586, %v2618, %v2617
  %v2620 = vrot.slane %v2558, 2
  %v2621 = vsel %vm2589, %v2620, %v2619
  %v2622 = vrot.slane %v2560, 1
  %v2623 = vsel %vm2592, %v2622, %v2621
  %v2624 = vsel %vm2595, %v2562, %v2623
  %v2627 = vrot.slane %v2540, 1
  %v2628 = vsel %vm2577, %v2542, %v2627
  %v2629 = vrot.slane %v2544, 7
  %v2630 = vsel %vm2580, %v2629, %v2628
  %v2631 = vrot.slane %v2546, 6
  %v2632 = vsel %vm2583, %v2631, %v2630
  %v2633 = vrot.slane %v2548, 5
  %v2634 = vsel %vm2586, %v2633, %v2632
  %v2635 = vrot.slane %v2550, 4
  %v2636 = vsel %vm2589, %v2635, %v2634
  %v2637 = vrot.slane %v2552, 3
  %v2638 = vsel %vm2592, %v2637, %v2636
  %v2639 = vrot.slane %v2554, 2
  %v2640 = vsel %vm2595, %v2639, %v2638
  %v2641 = vrot.slane %v2556, 1
  %v2642 = vsel %vm2577, %v2558, %v2641
  %v2643 = vrot.slane %v2560, 7
  %v2644 = vsel %vm2580, %v2643, %v2642
  %v2645 = vrot.slane %v2562, 6
  %v2646 = vsel %vm2583, %v2645, %v2644
  %v2661 = vrot.slane %v2541, 4
  %v2662 = vrot.slane %v2543, 3
  %v2663 = vsel %vm2589, %v2662, %v2661
  %v2664 = vrot.slane %v2545, 2
  %v2665 = vsel %vm2592, %v2664, %v2663
  %v2666 = vrot.slane %v2547, 1
  %v2667 = vsel %vm2595, %v2666, %v2665
  %v2668 = vrot.slane %v2551, 7
  %v2669 = vsel %vm2577, %v2668, %v2549
  %v2670 = vrot.slane %v2553, 6
  %v2671 = vsel %vm2580, %v2670, %v2669
  %v2672 = vrot.slane %v2555, 5
  %v2673 = vsel %vm2583, %v2672, %v2671
  %v2674 = vrot.slane %v2557, 4
  %v2675 = vsel %vm2586, %v2674, %v2673
  %v2676 = vrot.slane %v2559, 3
  %v2677 = vsel %vm2589, %v2676, %v2675
  %v2678 = vrot.slane %v2561, 2
  %v2679 = vsel %vm2592, %v2678, %v2677
  %v2680 = vrot.slane %v2563, 1
  %v2681 = vsel %vm2595, %v2680, %v2679
  %v2684 = vrot.slane %v2540, 2
  %v2685 = vrot.slane %v2542, 1
  %v2686 = vsel %vm2577, %v2685, %v2684
  %v2687 = vsel %vm2580, %v2544, %v2686
  %v2688 = vrot.slane %v2546, 7
  %v2689 = vsel %vm2583, %v2688, %v2687
  %v2690 = vrot.slane %v2548, 6
  %v2691 = vsel %vm2586, %v2690, %v2689
  %v2692 = vrot.slane %v2550, 5
  %v2693 = vsel %vm2589, %v2692, %v2691
  %v2694 = vrot.slane %v2552, 4
  %v2695 = vsel %vm2592, %v2694, %v2693
  %v2696 = vrot.slane %v2554, 3
  %v2697 = vsel %vm2595, %v2696, %v2695
  %v2698 = vrot.slane %v2556, 2
  %v2699 = vrot.slane %v2558, 1
  %v2700 = vsel %vm2577, %v2699, %v2698
  %v2701 = vsel %vm2580, %v2560, %v2700
  %v2702 = vrot.slane %v2562, 7
  %v2703 = vsel %vm2583, %v2702, %v2701
  %v2706 = vrot.slane %v2541, 5
  %v2707 = vrot.slane %v2543, 4
  %v2708 = vsel %vm2589, %v2707, %v2706
  %v2709 = vrot.slane %v2545, 3
  %v2710 = vsel %vm2592, %v2709, %v2708
  %v2711 = vrot.slane %v2547, 2
  %v2712 = vsel %vm2595, %v2711, %v2710
  %v2713 = vrot.slane %v2549, 1
  %v2714 = vsel %vm2577, %v2551, %v2713
  %v2715 = vrot.slane %v2553, 7
  %v2716 = vsel %vm2580, %v2715, %v2714
  %v2717 = vrot.slane %v2555, 6
  %v2718 = vsel %vm2583, %v2717, %v2716
  %v2719 = vrot.slane %v2557, 5
  %v2720 = vsel %vm2586, %v2719, %v2718
  %v2721 = vrot.slane %v2559, 4
  %v2722 = vsel %vm2589, %v2721, %v2720
  %v2723 = vrot.slane %v2561, 3
  %v2724 = vsel %vm2592, %v2723, %v2722
  %v2725 = vrot.slane %v2563, 2
  %v2726 = vsel %vm2595, %v2725, %v2724
  %v2729 = vsel %vm2577, %v2606, %v2605
  %v2730 = vsel %vm2580, %v2608, %v2729
  %v2731 = vsel %vm2583, %v2546, %v2730
  %v2732 = vsel %vm2586, %v2611, %v2731
  %v2733 = vsel %vm2589, %v2612, %v2732
  %v2734 = vsel %vm2592, %v2614, %v2733
  %v2735 = vsel %vm2595, %v2616, %v2734
  %v2736 = vsel %vm2577, %v2620, %v2618
  %v2737 = vsel %vm2580, %v2622, %v2736
  %v2738 = vsel %vm2583, %v2562, %v2737
  %v2741 = vrot.slane %v2541, 6
  %v2742 = vrot.slane %v2543, 5
  %v2743 = vsel %vm2589, %v2742, %v2741
  %v2744 = vrot.slane %v2545, 4
  %v2745 = vsel %vm2592, %v2744, %v2743
  %v2746 = vrot.slane %v2547, 3
  %v2747 = vsel %vm2595, %v2746, %v2745
  %v2748 = vrot.slane %v2549, 2
  %v2749 = vrot.slane %v2551, 1
  %v2750 = vsel %vm2577, %v2749, %v2748
  %v2751 = vsel %vm2580, %v2553, %v2750
  %v2752 = vrot.slane %v2555, 7
  %v2753 = vsel %vm2583, %v2752, %v2751
  %v2754 = vrot.slane %v2557, 6
  %v2755 = vsel %vm2586, %v2754, %v2753
  %v2756 = vrot.slane %v2559, 5
  %v2757 = vsel %vm2589, %v2756, %v2755
  %v2758 = vrot.slane %v2561, 4
  %v2759 = vsel %vm2592, %v2758, %v2757
  %v2760 = vrot.slane %v2563, 3
  %v2761 = vsel %vm2595, %v2760, %v2759
  %v2764 = vrot.slane %v2540, 4
  %v2765 = vrot.slane %v2542, 3
  %v2766 = vsel %vm2577, %v2765, %v2764
  %v2767 = vrot.slane %v2544, 2
  %v2768 = vsel %vm2580, %v2767, %v2766
  %v2769 = vrot.slane %v2546, 1
  %v2770 = vsel %vm2583, %v2769, %v2768
  %v2771 = vsel %vm2586, %v2548, %v2770
  %v2772 = vrot.slane %v2550, 7
  %v2773 = vsel %vm2589, %v2772, %v2771
  %v2774 = vrot.slane %v2552, 6
  %v2775 = vsel %vm2592, %v2774, %v2773
  %v2776 = vrot.slane %v2554, 5
  %v2777 = vsel %vm2595, %v2776, %v2775
  %v2778 = vrot.slane %v2556, 4
  %v2779 = vrot.slane %v2558, 3
  %v2780 = vsel %vm2577, %v2779, %v2778
  %v2781 = vrot.slane %v2560, 2
  %v2782 = vsel %vm2580, %v2781, %v2780
  %v2783 = vrot.slane %v2562, 1
  %v2784 = vsel %vm2583, %v2783, %v2782
  %v2787 = vrot.slane %v2541, 7
  %v2788 = vrot.slane %v2543, 6
  %v2789 = vsel %vm2589, %v2788, %v2787
  %v2790 = vrot.slane %v2545, 5
  %v2791 = vsel %vm2592, %v2790, %v2789
  %v2792 = vrot.slane %v2547, 4
  %v2793 = vsel %vm2595, %v2792, %v2791
  %v2794 = vrot.slane %v2549, 3
  %v2795 = vrot.slane %v2551, 2
  %v2796 = vsel %vm2577, %v2795, %v2794
  %v2797 = vrot.slane %v2553, 1
  %v2798 = vsel %vm2580, %v2797, %v2796
  %v2799 = vsel %vm2583, %v2555, %v2798
  %v2800 = vrot.slane %v2557, 7
  %v2801 = vsel %vm2586, %v2800, %v2799
  %v2802 = vrot.slane %v2559, 6
  %v2803 = vsel %vm2589, %v2802, %v2801
  %v2804 = vrot.slane %v2561, 5
  %v2805 = vsel %vm2592, %v2804, %v2803
  %v2806 = vrot.slane %v2563, 4
  %v2807 = vsel %vm2595, %v2806, %v2805
  %v2810 = vrot.slane %v2540, 5
  %v2811 = vrot.slane %v2542, 4
  %v2812 = vsel %vm2577, %v2811, %v2810
  %v2813 = vrot.slane %v2544, 3
  %v2814 = vsel %vm2580, %v2813, %v2812
  %v2815 = vrot.slane %v2546, 2
  %v2816 = vsel %vm2583, %v2815, %v2814
  %v2817 = vrot.slane %v2548, 1
  %v2818 = vsel %vm2586, %v2817, %v2816
  %v2819 = vsel %vm2589, %v2550, %v2818
  %v2820 = vrot.slane %v2552, 7
  %v2821 = vsel %vm2592, %v2820, %v2819
  %v2822 = vrot.slane %v2554, 6
  %v2823 = vsel %vm2595, %v2822, %v2821
  %v2824 = vrot.slane %v2556, 5
  %v2825 = vrot.slane %v2558, 4
  %v2826 = vsel %vm2577, %v2825, %v2824
  %v2827 = vrot.slane %v2560, 3
  %v2828 = vsel %vm2580, %v2827, %v2826
  %v2829 = vrot.slane %v2562, 2
  %v2830 = vsel %vm2583, %v2829, %v2828
  %v2833 = vrot.slane %v2543, 7
  %v2834 = vsel %vm2589, %v2833, %v2541
  %v2835 = vrot.slane %v2545, 6
  %v2836 = vsel %vm2592, %v2835, %v2834
  %v2837 = vrot.slane %v2547, 5
  %v2838 = vsel %vm2595, %v2837, %v2836
  %v2839 = vrot.slane %v2549, 4
  %v2840 = vrot.slane %v2551, 3
  %v2841 = vsel %vm2577, %v2840, %v2839
  %v2842 = vrot.slane %v2553, 2
  %v2843 = vsel %vm2580, %v2842, %v2841
  %v2844 = vrot.slane %v2555, 1
  %v2845 = vsel %vm2583, %v2844, %v2843
  %v2846 = vsel %vm2586, %v2557, %v2845
  %v2847 = vrot.slane %v2559, 7
  %v2848 = vsel %vm2589, %v2847, %v2846
  %v2849 = vrot.slane %v2561, 6
  %v2850 = vsel %vm2592, %v2849, %v2848
  %v2851 = vrot.slane %v2563, 5
  %v2852 = vsel %vm2595, %v2851, %v2850
  %v2855 = vrot.slane %v2540, 6
  %v2856 = vrot.slane %v2542, 5
  %v2857 = vsel %vm2577, %v2856, %v2855
  %v2858 = vrot.slane %v2544, 4
  %v2859 = vsel %vm2580, %v2858, %v2857
  %v2860 = vrot.slane %v2546, 3
  %v2861 = vsel %vm2583, %v2860, %v2859
  %v2862 = vrot.slane %v2548, 2
  %v2863 = vsel %vm2586, %v2862, %v2861
  %v2864 = vrot.slane %v2550, 1
  %v2865 = vsel %vm2589, %v2864, %v2863
  %v2866 = vsel %vm2592, %v2552, %v2865
  %v2867 = vrot.slane %v2554, 7
  %v2868 = vsel %vm2595, %v2867, %v2866
  %v2869 = vrot.slane %v2556, 6
  %v2870 = vrot.slane %v2558, 5
  %v2871 = vsel %vm2577, %v2870, %v2869
  %v2872 = vrot.slane %v2560, 4
  %v2873 = vsel %vm2580, %v2872, %v2871
  %v2874 = vrot.slane %v2562, 3
  %v2875 = vsel %vm2583, %v2874, %v2873
  %v2878 = vrot.slane %v2541, 1
  %v2879 = vsel %vm2589, %v2543, %v2878
  %v2880 = vrot.slane %v2545, 7
  %v2881 = vsel %vm2592, %v2880, %v2879
  %v2882 = vrot.slane %v2547, 6
  %v2883 = vsel %vm2595, %v2882, %v2881
  %v2884 = vrot.slane %v2549, 5
  %v2885 = vrot.slane %v2551, 4
  %v2886 = vsel %vm2577, %v2885, %v2884
  %v2887 = vrot.slane %v2553, 3
  %v2888 = vsel %vm2580, %v2887, %v2886
  %v2889 = vrot.slane %v2555, 2
  %v2890 = vsel %vm2583, %v2889, %v2888
  %v2891 = vrot.slane %v2557, 1
  %v2892 = vsel %vm2586, %v2891, %v2890
  %v2893 = vsel %vm2589, %v2559, %v2892
  %v2894 = vrot.slane %v2561, 7
  %v2895 = vsel %vm2592, %v2894, %v2893
  %v2896 = vrot.slane %v2563, 6
  %v2897 = vsel %vm2595, %v2896, %v2895
  %vm2900 = vcmask 1043456
  %v2901 = vsel %vm2900, %v2602, %v2610
  %v2902 = vsel %vm2900, %v2646, %v2667
  %v2903 = vsel %vm2900, %v2703, %v2712
  %v2904 = vsel %vm2900, %v2738, %v2747
  %v2905 = vsel %vm2900, %v2784, %v2793
  %v2906 = vsel %vm2900, %v2830, %v2838
  %v2907 = vsel %vm2900, %v2875, %v2883
  %v2908 = vsel %vm74, %v2596, 0.0
  %2909 = vadd.xlane.f32.xlu0 %v2908
  %v2910 = vpop.xlane.xlu0 %2909
  %v2911 = vsel %vm74, %v2901, 0.0
  %2912 = vadd.xlane.f32.xlu0 %v2911
  %v2913 = vpop.xlane.xlu0 %2912
  %v2914 = vsel %vm74, %v2624, 0.0
  %2915 = vadd.xlane.f32.xlu0 %v2914
  %v2916 = vpop.xlane.xlu0 %2915
  %v2917 = vsel %vm74, %v2640, 0.0
  %2918 = vadd.xlane.f32.xlu0 %v2917
  %v2919 = vpop.xlane.xlu0 %2918
  %v2920 = vsel %vm74, %v2902, 0.0
  %2921 = vadd.xlane.f32.xlu0 %v2920
  %v2922 = vpop.xlane.xlu0 %2921
  %v2923 = vsel %vm74, %v2681, 0.0
  %2924 = vadd.xlane.f32.xlu0 %v2923
  %v2925 = vpop.xlane.xlu0 %2924
  %v2926 = vsel %vm74, %v2697, 0.0
  %2927 = vadd.xlane.f32.xlu0 %v2926
  %v2928 = vpop.xlane.xlu0 %2927
  %v2929 = vsel %vm74, %v2903, 0.0
  %2930 = vadd.xlane.f32.xlu0 %v2929
  %v2931 = vpop.xlane.xlu0 %2930
  %v2932 = vsel %vm74, %v2726, 0.0
  %2933 = vadd.xlane.f32.xlu0 %v2932
  %v2934 = vpop.xlane.xlu0 %2933
  %v2935 = vsel %vm74, %v2735, 0.0
  %2936 = vadd.xlane.f32.xlu0 %v2935
  %v2937 = vpop.xlane.xlu0 %2936
  %v2938 = vsel %vm74, %v2904, 0.0
  %2939 = vadd.xlane.f32.xlu0 %v2938
  %v2940 = vpop.xlane.xlu0 %2939
  %v2941 = vsel %vm74, %v2761, 0.0
  %2942 = vadd.xlane.f32.xlu0 %v2941
  %v2943 = vpop.xlane.xlu0 %2942
  %v2944 = vsel %vm74, %v2777, 0.0
  %2945 = vadd.xlane.f32.xlu0 %v2944
  %v2946 = vpop.xlane.xlu0 %2945
  %v2947 = vsel %vm74, %v2905, 0.0
  %2948 = vadd.xlane.f32.xlu0 %v2947
  %v2949 = vpop.xlane.xlu0 %2948
  %v2950 = vsel %vm74, %v2807, 0.0
  %2951 = vadd.xlane.f32.xlu0 %v2950
  %v2952 = vpop.xlane.xlu0 %2951
  %v2953 = vsel %vm74, %v2823, 0.0
  %2954 = vadd.xlane.f32.xlu0 %v2953
  %v2955 = vpop.xlane.xlu0 %2954
  %v2956 = vsel %vm74, %v2906, 0.0
  %2957 = vadd.xlane.f32.xlu0 %v2956
  %v2958 = vpop.xlane.xlu0 %2957
  %v2959 = vsel %vm74, %v2852, 0.0
  %2960 = vadd.xlane.f32.xlu0 %v2959
  %v2961 = vpop.xlane.xlu0 %2960
  %v2962 = vsel %vm74, %v2868, 0.0
  %2963 = vadd.xlane.f32.xlu0 %v2962
  %v2964 = vpop.xlane.xlu0 %2963
  %v2965 = vsel %vm74, %v2907, 0.0
  %2966 = vadd.xlane.f32.xlu0 %v2965
  %v2967 = vpop.xlane.xlu0 %2966
  %v2968 = vsel %vm74, %v2897, 0.0
  %2969 = vadd.xlane.f32.xlu0 %v2968
  %v2970 = vpop.xlane.xlu0 %2969
  %v2971 = vmul.f32 %v2910, %v147
  %v2972 = vmul.f32 %v2913, %v147
  %v2973 = vmul.f32 %v2916, %v147
  %v2974 = vmul.f32 %v2919, %v147
  %v2975 = vmul.f32 %v2922, %v147
  %v2976 = vmul.f32 %v2925, %v147
  %v2977 = vmul.f32 %v2928, %v147
  %v2978 = vmul.f32 %v2931, %v147
  %v2979 = vmul.f32 %v2934, %v147
  %v2980 = vmul.f32 %v2937, %v147
  %v2981 = vmul.f32 %v2940, %v147
  %v2982 = vmul.f32 %v2943, %v147
  %v2983 = vmul.f32 %v2946, %v147
  %v2984 = vmul.f32 %v2949, %v147
  %v2985 = vmul.f32 %v2952, %v147
  %v2986 = vmul.f32 %v2955, %v147
  %v2987 = vmul.f32 %v2958, %v147
  %v2988 = vmul.f32 %v2961, %v147
  %v2989 = vmul.f32 %v2964, %v147
  %v2990 = vmul.f32 %v2967, %v147
  %v2991 = vmul.f32 %v2970, %v147
  %v2992 = vadd.f32 %v2971, %v2974
  %v2993 = vadd.f32 %v2992, %v2977
  %v2994 = vadd.f32 %v2993, %v2980
  %v2995 = vadd.f32 %v2994, %v2983
  %v2996 = vadd.f32 %v2995, %v2986
  %v2997 = vadd.f32 %v2996, %v2989
  %v2998 = vadd.f32 %v2972, %v2975
  %v2999 = vadd.f32 %v2998, %v2978
  %v3000 = vadd.f32 %v2999, %v2981
  %v3001 = vadd.f32 %v3000, %v2984
  %v3002 = vadd.f32 %v3001, %v2987
  %v3003 = vadd.f32 %v3002, %v2990
  %v3004 = vadd.f32 %v2973, %v2976
  %v3005 = vadd.f32 %v3004, %v2979
  %v3006 = vadd.f32 %v3005, %v2982
  %v3007 = vadd.f32 %v3006, %v2985
  %v3008 = vadd.f32 %v3007, %v2988
  %v3009 = vadd.f32 %v3008, %v2991
  %v3010 = vrcp.pop 7.0
  %v3011 = vmul.f32 %v2997, %v3010
  %v3012 = vmul.f32 %v3003, %v3010
  %v3013 = vmul.f32 %v3009, %v3010
  %v3014 = vsub.f32 %v2596, %v3011
  %v3015 = vsub.f32 %v2901, %v3012
  %v3016 = vsub.f32 %v2624, %v3013
  %v3017 = vsub.f32 %v2640, %v3011
  %v3018 = vsub.f32 %v2902, %v3012
  %v3019 = vsub.f32 %v2681, %v3013
  %v3020 = vsub.f32 %v2697, %v3011
  %v3021 = vsub.f32 %v2903, %v3012
  %v3022 = vsub.f32 %v2726, %v3013
  %v3023 = vsub.f32 %v2735, %v3011
  %v3024 = vsub.f32 %v2904, %v3012
  %v3025 = vsub.f32 %v2761, %v3013
  %v3026 = vsub.f32 %v2777, %v3011
  %v3027 = vsub.f32 %v2905, %v3012
  %v3028 = vsub.f32 %v2807, %v3013
  %v3029 = vsub.f32 %v2823, %v3011
  %v3030 = vsub.f32 %v2906, %v3012
  %v3031 = vsub.f32 %v2852, %v3013
  %v3032 = vsub.f32 %v2868, %v3011
  %v3033 = vsub.f32 %v2907, %v3012
  %v3034 = vsub.f32 %v2897, %v3013
  %v3035 = vmul.f32 %v3014, %v3014
  %v3036 = vmul.f32 %v3015, %v3015
  %v3037 = vmul.f32 %v3016, %v3016
  %v3038 = vmul.f32 %v3017, %v3017
  %v3039 = vmul.f32 %v3018, %v3018
  %v3040 = vmul.f32 %v3019, %v3019
  %v3041 = vmul.f32 %v3020, %v3020
  %v3042 = vmul.f32 %v3021, %v3021
  %v3043 = vmul.f32 %v3022, %v3022
  %v3044 = vmul.f32 %v3023, %v3023
  %v3045 = vmul.f32 %v3024, %v3024
  %v3046 = vmul.f32 %v3025, %v3025
  %v3047 = vmul.f32 %v3026, %v3026
  %v3048 = vmul.f32 %v3027, %v3027
  %v3049 = vmul.f32 %v3028, %v3028
  %v3050 = vmul.f32 %v3029, %v3029
  %v3051 = vmul.f32 %v3030, %v3030
  %v3052 = vmul.f32 %v3031, %v3031
  %v3053 = vmul.f32 %v3032, %v3032
  %v3054 = vmul.f32 %v3033, %v3033
  %v3055 = vmul.f32 %v3034, %v3034
  %v3056 = vsel %vm74, %v3035, 0.0
  %3057 = vadd.xlane.f32.xlu0 %v3056
  %v3058 = vpop.xlane.xlu0 %3057
  %v3059 = vsel %vm74, %v3036, 0.0
  %3060 = vadd.xlane.f32.xlu0 %v3059
  %v3061 = vpop.xlane.xlu0 %3060
  %v3062 = vsel %vm74, %v3037, 0.0
  %3063 = vadd.xlane.f32.xlu0 %v3062
  %v3064 = vpop.xlane.xlu0 %3063
  %v3065 = vsel %vm74, %v3038, 0.0
  %3066 = vadd.xlane.f32.xlu0 %v3065
  %v3067 = vpop.xlane.xlu0 %3066
  %v3068 = vsel %vm74, %v3039, 0.0
  %3069 = vadd.xlane.f32.xlu0 %v3068
  %v3070 = vpop.xlane.xlu0 %3069
  %v3071 = vsel %vm74, %v3040, 0.0
  %3072 = vadd.xlane.f32.xlu0 %v3071
  %v3073 = vpop.xlane.xlu0 %3072
  %v3074 = vsel %vm74, %v3041, 0.0
  %3075 = vadd.xlane.f32.xlu0 %v3074
  %v3076 = vpop.xlane.xlu0 %3075
  %v3077 = vsel %vm74, %v3042, 0.0
  %3078 = vadd.xlane.f32.xlu0 %v3077
  %v3079 = vpop.xlane.xlu0 %3078
  %v3080 = vsel %vm74, %v3043, 0.0
  %3081 = vadd.xlane.f32.xlu0 %v3080
  %v3082 = vpop.xlane.xlu0 %3081
  %v3083 = vsel %vm74, %v3044, 0.0
  %3084 = vadd.xlane.f32.xlu0 %v3083
  %v3085 = vpop.xlane.xlu0 %3084
  %v3086 = vsel %vm74, %v3045, 0.0
  %3087 = vadd.xlane.f32.xlu0 %v3086
  %v3088 = vpop.xlane.xlu0 %3087
  %v3089 = vsel %vm74, %v3046, 0.0
  %3090 = vadd.xlane.f32.xlu0 %v3089
  %v3091 = vpop.xlane.xlu0 %3090
  %v3092 = vsel %vm74, %v3047, 0.0
  %3093 = vadd.xlane.f32.xlu0 %v3092
  %v3094 = vpop.xlane.xlu0 %3093
  %v3095 = vsel %vm74, %v3048, 0.0
  %3096 = vadd.xlane.f32.xlu0 %v3095
  %v3097 = vpop.xlane.xlu0 %3096
  %v3098 = vsel %vm74, %v3049, 0.0
  %3099 = vadd.xlane.f32.xlu0 %v3098
  %v3100 = vpop.xlane.xlu0 %3099
  %v3101 = vsel %vm74, %v3050, 0.0
  %3102 = vadd.xlane.f32.xlu0 %v3101
  %v3103 = vpop.xlane.xlu0 %3102
  %v3104 = vsel %vm74, %v3051, 0.0
  %3105 = vadd.xlane.f32.xlu0 %v3104
  %v3106 = vpop.xlane.xlu0 %3105
  %v3107 = vsel %vm74, %v3052, 0.0
  %3108 = vadd.xlane.f32.xlu0 %v3107
  %v3109 = vpop.xlane.xlu0 %3108
  %v3110 = vsel %vm74, %v3053, 0.0
  %3111 = vadd.xlane.f32.xlu0 %v3110
  %v3112 = vpop.xlane.xlu0 %3111
  %v3113 = vsel %vm74, %v3054, 0.0
  %3114 = vadd.xlane.f32.xlu0 %v3113
  %v3115 = vpop.xlane.xlu0 %3114
  %v3116 = vsel %vm74, %v3055, 0.0
  %3117 = vadd.xlane.f32.xlu0 %v3116
  %v3118 = vpop.xlane.xlu0 %3117
  %v3119 = vmul.f32 %v3058, %v147
  %v3120 = vmul.f32 %v3061, %v147
  %v3121 = vmul.f32 %v3064, %v147
  %v3122 = vmul.f32 %v3067, %v147
  %v3123 = vmul.f32 %v3070, %v147
  %v3124 = vmul.f32 %v3073, %v147
  %v3125 = vmul.f32 %v3076, %v147
  %v3126 = vmul.f32 %v3079, %v147
  %v3127 = vmul.f32 %v3082, %v147
  %v3128 = vmul.f32 %v3085, %v147
  %v3129 = vmul.f32 %v3088, %v147
  %v3130 = vmul.f32 %v3091, %v147
  %v3131 = vmul.f32 %v3094, %v147
  %v3132 = vmul.f32 %v3097, %v147
  %v3133 = vmul.f32 %v3100, %v147
  %v3134 = vmul.f32 %v3103, %v147
  %v3135 = vmul.f32 %v3106, %v147
  %v3136 = vmul.f32 %v3109, %v147
  %v3137 = vmul.f32 %v3112, %v147
  %v3138 = vmul.f32 %v3115, %v147
  %v3139 = vmul.f32 %v3118, %v147
  %v3140 = vadd.f32 %v3119, %v3122
  %v3141 = vadd.f32 %v3140, %v3125
  %v3142 = vadd.f32 %v3141, %v3128
  %v3143 = vadd.f32 %v3142, %v3131
  %v3144 = vadd.f32 %v3143, %v3134
  %v3145 = vadd.f32 %v3144, %v3137
  %v3146 = vadd.f32 %v3120, %v3123
  %v3147 = vadd.f32 %v3146, %v3126
  %v3148 = vadd.f32 %v3147, %v3129
  %v3149 = vadd.f32 %v3148, %v3132
  %v3150 = vadd.f32 %v3149, %v3135
  %v3151 = vadd.f32 %v3150, %v3138
  %v3152 = vadd.f32 %v3121, %v3124
  %v3153 = vadd.f32 %v3152, %v3127
  %v3154 = vadd.f32 %v3153, %v3130
  %v3155 = vadd.f32 %v3154, %v3133
  %v3156 = vadd.f32 %v3155, %v3136
  %v3157 = vadd.f32 %v3156, %v3139
  %v3158 = vmul.f32 %v3145, %v3010
  %v3159 = vmul.f32 %v3151, %v3010
  %v3160 = vmul.f32 %v3157, %v3010
  %v3161 = vadd.f32 %v3158, 1.1920929e-07
  %v3162 = vadd.f32 %v3159, 1.1920929e-07
  %v3163 = vadd.f32 %v3160, 1.1920929e-07
  %v3164 = vrsqrt.pop %v3161
  %v3165 = vrsqrt.pop %v3162
  %v3166 = vrsqrt.pop %v3163
  %v3167 = vmul.f32 %v3014, %v3164
  %v3168 = vmul.f32 %v3015, %v3165
  %v3169 = vmul.f32 %v3016, %v3166
  %v3170 = vmul.f32 %v3017, %v3164
  %v3171 = vmul.f32 %v3018, %v3165
  %v3172 = vmul.f32 %v3019, %v3166
  %v3173 = vmul.f32 %v3020, %v3164
  %v3174 = vmul.f32 %v3021, %v3165
  %v3175 = vmul.f32 %v3022, %v3166
  %v3176 = vmul.f32 %v3023, %v3164
  %v3177 = vmul.f32 %v3024, %v3165
  %v3178 = vmul.f32 %v3025, %v3166
  %v3179 = vmul.f32 %v3026, %v3164
  %v3180 = vmul.f32 %v3027, %v3165
  %v3181 = vmul.f32 %v3028, %v3166
  %v3182 = vmul.f32 %v3029, %v3164
  %v3183 = vmul.f32 %v3030, %v3165
  %v3184 = vmul.f32 %v3031, %v3166
  %v3185 = vmul.f32 %v3032, %v3164
  %v3186 = vmul.f32 %v3033, %v3165
  %v3187 = vmul.f32 %v3034, %v3166
  %v3188 = vld [vmem:[%s8] sm:$0x1]
  %v3190 = vlaneseq
  %v3191 = vshrl.u32 %v3190, 7
  %v3192 = vsub.s32 0, %v3191
  %v3193 = vrot.slane %v3188, %v3192
  %v3195 = vmul.f32 %v3167, %v3193
  %v3196 = vmul.f32 %v3168, %v3193
  %v3197 = vmul.f32 %v3169, %v3193
  %v3198 = vmul.f32 %v3170, %v3193
  %v3199 = vmul.f32 %v3171, %v3193
  %v3200 = vmul.f32 %v3172, %v3193
  %v3201 = vmul.f32 %v3173, %v3193
  %v3202 = vmul.f32 %v3174, %v3193
  %v3203 = vmul.f32 %v3175, %v3193
  %v3204 = vmul.f32 %v3176, %v3193
  %v3205 = vmul.f32 %v3177, %v3193
  %v3206 = vmul.f32 %v3178, %v3193
  %v3207 = vmul.f32 %v3179, %v3193
  %v3208 = vmul.f32 %v3180, %v3193
  %v3209 = vmul.f32 %v3181, %v3193
  %v3210 = vmul.f32 %v3182, %v3193
  %v3211 = vmul.f32 %v3183, %v3193
  %v3212 = vmul.f32 %v3184, %v3193
  %v3213 = vmul.f32 %v3185, %v3193
  %v3214 = vmul.f32 %v3186, %v3193
  %v3215 = vmul.f32 %v3187, %v3193
  %v3216 = vld [vmem:[%s9] sm:$0x1]
  %v3218 = vlaneseq
  %v3219 = vshrl.u32 %v3218, 7
  %v3220 = vsub.s32 0, %v3219
  %v3221 = vrot.slane %v3216, %v3220
  %v3223 = vadd.f32 %v3195, %v3221
  %v3224 = vadd.f32 %v3196, %v3221
  %v3225 = vadd.f32 %v3197, %v3221
  %v3226 = vadd.f32 %v3198, %v3221
  %v3227 = vadd.f32 %v3199, %v3221
  %v3228 = vadd.f32 %v3200, %v3221
  %v3229 = vadd.f32 %v3201, %v3221
  %v3230 = vadd.f32 %v3202, %v3221
  %v3231 = vadd.f32 %v3203, %v3221
  %v3232 = vadd.f32 %v3204, %v3221
  %v3233 = vadd.f32 %v3205, %v3221
  %v3234 = vadd.f32 %v3206, %v3221
  %v3235 = vadd.f32 %v3207, %v3221
  %v3236 = vadd.f32 %v3208, %v3221
  %v3237 = vadd.f32 %v3209, %v3221
  %v3238 = vadd.f32 %v3210, %v3221
  %v3239 = vadd.f32 %v3211, %v3221
  %v3240 = vadd.f32 %v3212, %v3221
  %v3241 = vadd.f32 %v3213, %v3221
  %v3242 = vadd.f32 %v3214, %v3221
  %v3243 = vadd.f32 %v3215, %v3221
  %3265 = vrot.lane.b32.xlu0 %v3241, 8
  %v3266 = vpop.permute.xlu0 %3265
  %3267 = vrot.lane.b32.xlu0 %v3242, 8
  %v3268 = vpop.permute.xlu0 %3267
  %3269 = vrot.lane.b32.xlu0 %v3243, 8
  %v3270 = vpop.permute.xlu0 %3269
  %3271 = vrot.lane.b32.xlu0 %v3238, 8
  %v3272 = vpop.permute.xlu0 %3271
  %3273 = vrot.lane.b32.xlu0 %v3239, 8
  %v3274 = vpop.permute.xlu0 %3273
  %3275 = vrot.lane.b32.xlu0 %v3240, 8
  %v3276 = vpop.permute.xlu0 %3275
  %3277 = vrot.lane.b32.xlu0 %v3235, 8
  %v3278 = vpop.permute.xlu0 %3277
  %3279 = vrot.lane.b32.xlu0 %v3236, 8
  %v3280 = vpop.permute.xlu0 %3279
  %3281 = vrot.lane.b32.xlu0 %v3237, 8
  %v3282 = vpop.permute.xlu0 %3281
  %3283 = vrot.lane.b32.xlu0 %v3232, 8
  %v3284 = vpop.permute.xlu0 %3283
  %3285 = vrot.lane.b32.xlu0 %v3233, 8
  %v3286 = vpop.permute.xlu0 %3285
  %3287 = vrot.lane.b32.xlu0 %v3234, 8
  %v3288 = vpop.permute.xlu0 %3287
  %3289 = vrot.lane.b32.xlu0 %v3229, 8
  %v3290 = vpop.permute.xlu0 %3289
  %3291 = vrot.lane.b32.xlu0 %v3230, 8
  %v3292 = vpop.permute.xlu0 %3291
  %3293 = vrot.lane.b32.xlu0 %v3231, 8
  %v3294 = vpop.permute.xlu0 %3293
  %3295 = vrot.lane.b32.xlu0 %v3226, 8
  %v3296 = vpop.permute.xlu0 %3295
  %3297 = vrot.lane.b32.xlu0 %v3227, 8
  %v3298 = vpop.permute.xlu0 %3297
  %3299 = vrot.lane.b32.xlu0 %v3228, 8
  %v3300 = vpop.permute.xlu0 %3299
  %3301 = vrot.lane.b32.xlu0 %v3223, 8
  %v3302 = vpop.permute.xlu0 %3301
  %3303 = vrot.lane.b32.xlu0 %v3224, 8
  %v3304 = vpop.permute.xlu0 %3303
  %3305 = vrot.lane.b32.xlu0 %v3225, 8
  %v3306 = vpop.permute.xlu0 %3305
  %v3328 = vsel %vm74, %v3223, %v3266
  %v3329 = vsel %vm74, %v3224, %v3268
  %v3330 = vsel %vm74, %v3225, %v3270
  %v3331 = vsel %vm74, %v3226, %v3272
  %v3332 = vsel %vm74, %v3227, %v3274
  %v3333 = vsel %vm74, %v3228, %v3276
  %v3334 = vsel %vm74, %v3229, %v3278
  %v3335 = vsel %vm74, %v3230, %v3280
  %v3336 = vsel %vm74, %v3231, %v3282
  %v3337 = vsel %vm74, %v3232, %v3284
  %v3338 = vsel %vm74, %v3233, %v3286
  %v3339 = vsel %vm74, %v3234, %v3288
  %v3340 = vsel %vm74, %v3235, %v3290
  %v3341 = vsel %vm74, %v3236, %v3292
  %v3342 = vsel %vm74, %v3237, %v3294
  %v3343 = vsel %vm74, %v3238, %v3296
  %v3344 = vsel %vm74, %v3239, %v3298
  %v3345 = vsel %vm74, %v3240, %v3300
  %v3346 = vsel %vm74, %v3241, %v3302
  %v3347 = vsel %vm74, %v3242, %v3304
  %v3348 = vsel %vm74, %v3243, %v3306
  %v3349 = vld [vmem:[%s10] sm:$0xff]
  %v3350 = vld [vmem:[%s10 + $0x8] sm:$0xff]
  %v3351 = vld [vmem:[%s12] sm:$0x1]
  %v3353 = vlaneseq
  %v3354 = vshrl.u32 %v3353, 7
  %v3355 = vsub.s32 0, %v3354
  %v3356 = vrot.slane %v3351, %v3355
  %v3359 = vsel %vm722, %v3328, 0
  %v3362 = vsel %vm722, %v3329, 0
  %v3365 = vsel %vm722, %v3330, 0
  %v3368 = vsel %vm722, %v3331, 0
  %v3371 = vsel %vm722, %v3332, 0
  %v3374 = vsel %vm722, %v3333, 0
  %v3377 = vsel %vm722, %v3334, 0
  %v3380 = vsel %vm722, %v3335, 0
  %v3383 = vsel %vm722, %v3336, 0
  %v3386 = vsel %vm722, %v3337, 0
  %v3389 = vsel %vm722, %v3338, 0
  %v3392 = vsel %vm722, %v3339, 0
  %v3395 = vsel %vm722, %v3340, 0
  %v3398 = vsel %vm722, %v3341, 0
  %v3401 = vsel %vm722, %v3342, 0
  %v3404 = vsel %vm722, %v3343, 0
  %v3407 = vsel %vm722, %v3344, 0
  %v3410 = vsel %vm722, %v3345, 0
  %v3413 = vsel %vm722, %v3346, 0
  %v3416 = vsel %vm722, %v3347, 0
  %v3419 = vsel %vm722, %v3348, 0
  %3421 = vmatprep.subr.mxu0 0.0
  %3422 = vmatpush1.msra.mxu0 %v3349
  %3423 = vmatprep.subr.mxu0 0.0
  %3424 = vmatpush1.msra.mxu0 %v3350
  %3425 = vmatprep.subr.mxu0 0.0
  %3426 = vmatpush1.msra.mxu0 0.0
  %3427 = vmatprep.subr.mxu0 0.0
  %3428 = vmatpush1.msra.mxu0 0.0
  %3429 = vmatprep.subr.mxu0 0.0
  %3430 = vmatpush1.msra.mxu0 0.0
  %3431 = vmatprep.subr.mxu0 0.0
  %3432 = vmatpush1.msra.mxu0 0.0
  %3433 = vmatprep.subr.mxu0 0.0
  %3434 = vmatpush1.msra.mxu0 0.0
  %3435 = vmatprep.subr.mxu0 0.0
  %3436 = vmatpush1.msra.mxu0 0.0
  %3437 = vmatprep.subr.mxu0 0.0
  %3438 = vmatpush1.msra.mxu0 0.0
  %3439 = vmatprep.subr.mxu0 0.0
  %3440 = vmatpush1.msra.mxu0 0.0
  %3441 = vmatprep.subr.mxu0 0.0
  %3442 = vmatpush1.msra.mxu0 0.0
  %3443 = vmatprep.subr.mxu0 0.0
  %3444 = vmatpush1.msra.mxu0 0.0
  %3445 = vmatprep.subr.mxu0 0.0
  %3446 = vmatpush1.msra.mxu0 0.0
  %3447 = vmatprep.subr.mxu0 0.0
  %3448 = vmatpush1.msra.mxu0 0.0
  %3449 = vmatprep.subr.mxu0 0.0
  %3450 = vmatpush1.msra.mxu0 0.0
  %3451 = vmatprep.subr.mxu0 0.0
  %3452 = vmatpush1.msra.mxu0 0.0
  %3453 = vmatprep.subr.mxu0 0.0
  %3454 = vmatpush1.msra.mxu0 0.0
  %3455 = vmatprep.subr.mxu0 0.0
  %3456 = vmatpush1.msra.mxu0 0.0
  %3457 = vmatprep.subr.mxu0 0.0
  %3458 = vmatpush1.msra.mxu0 0.0
  %3459 = vmatprep.subr.mxu0 0.0
  %3460 = vmatpush1.msra.mxu0 0.0
  %3461 = vmatprep.subr.mxu0 0.0
  %3462 = vmatpush1.msra.mxu0 0.0
  %3463 = vmatprep.subr.mxu0 0.0
  %3464 = vmatpush1.msra.mxu0 0.0
  %3465 = vmatprep.subr.mxu0 0.0
  %3466 = vmatpush1.msra.mxu0 0.0
  %3467 = vmatprep.subr.mxu0 0.0
  %3468 = vmatpush1.msra.mxu0 0.0
  %3469 = vmatprep.subr.mxu0 0.0
  %3470 = vmatpush1.msra.mxu0 0.0
  %3471 = vmatprep.subr.mxu0 0.0
  %3472 = vmatpush1.msra.mxu0 0.0
  %3473 = vmatprep.subr.mxu0 0.0
  %3474 = vmatpush1.msra.mxu0 0.0
  %3475 = vmatprep.subr.mxu0 0.0
  %3476 = vmatpush1.msra.mxu0 0.0
  %3477 = vmatprep.subr.mxu0 0.0
  %3478 = vmatpush1.msra.mxu0 0.0
  %3479 = vmatprep.subr.mxu0 0.0
  %3480 = vmatpush1.msra.mxu0 0.0
  %3481 = vmatprep.subr.mxu0 0.0
  %3482 = vmatpush1.msra.mxu0 0.0
  %3483 = vmatprep.subr.mxu0 0.0
  %3484 = vmatpush1.msra.mxu0 0.0
  %3485 = vmatprep.mubr.f32.mxu0 0.0
  %3486 = vmatmul.mubr.f32.gmra.mrb[0].mxu0 %v3359
  %v3487 = vpop.f32.mrb[0].mxu0
  %v3488 = vadd.f32 %v3356, %v3487
  %v3489 = vpop.f32.mrb[0].mxu0
  %3490 = vmatprep.mubr.f32.mxu0 0.0
  %3491 = vmatmul.mubr.f32.gmra.mrb[0].mxu0 %v3362
  %v3492 = vpop.f32.mrb[0].mxu0
  %v3493 = vadd.f32 %v3356, %v3492
  %v3494 = vpop.f32.mrb[0].mxu0
  %3495 = vmatprep.mubr.f32.mxu0 0.0
  %3496 = vmatmul.mubr.f32.gmra.mrb[0].mxu0 %v3365
  %v3497 = vpop.f32.mrb[0].mxu0
  %v3498 = vadd.f32 %v3356, %v3497
  %v3499 = vpop.f32.mrb[0].mxu0
  %3500 = vmatprep.mubr.f32.mxu0 0.0
  %3501 = vmatmul.mubr.f32.gmra.mrb[0].mxu0 %v3368
  %v3502 = vpop.f32.mrb[0].mxu0
  %v3503 = vadd.f32 %v3356, %v3502
  %v3504 = vpop.f32.mrb[0].mxu0
  %3505 = vmatprep.mubr.f32.mxu0 0.0
  %3506 = vmatmul.mubr.f32.gmra.mrb[0].mxu0 %v3371
  %v3507 = vpop.f32.mrb[0].mxu0
  %v3508 = vadd.f32 %v3356, %v3507
  %v3509 = vpop.f32.mrb[0].mxu0
  %3510 = vmatprep.mubr.f32.mxu0 0.0
  %3511 = vmatmul.mubr.f32.gmra.mrb[0].mxu0 %v3374
  %v3512 = vpop.f32.mrb[0].mxu0
  %v3513 = vadd.f32 %v3356, %v3512
  %v3514 = vpop.f32.mrb[0].mxu0
  %3515 = vmatprep.mubr.f32.mxu0 0.0
  %3516 = vmatmul.mubr.f32.gmra.mrb[0].mxu0 %v3377
  %v3517 = vpop.f32.mrb[0].mxu0
  %v3518 = vadd.f32 %v3356, %v3517
  %v3519 = vpop.f32.mrb[0].mxu0
  %3520 = vmatprep.mubr.f32.mxu0 0.0
  %3521 = vmatmul.mubr.f32.gmra.mrb[0].mxu0 %v3380
  %v3522 = vpop.f32.mrb[0].mxu0
  %v3523 = vadd.f32 %v3356, %v3522
  %v3524 = vpop.f32.mrb[0].mxu0
  %3525 = vmatprep.mubr.f32.mxu0 0.0
  %3526 = vmatmul.mubr.f32.gmra.mrb[0].mxu0 %v3383
  %v3527 = vpop.f32.mrb[0].mxu0
  %v3528 = vadd.f32 %v3356, %v3527
  %v3529 = vpop.f32.mrb[0].mxu0
  %3530 = vmatprep.mubr.f32.mxu0 0.0
  %3531 = vmatmul.mubr.f32.gmra.mrb[0].mxu0 %v3386
  %v3532 = vpop.f32.mrb[0].mxu0
  %v3533 = vadd.f32 %v3356, %v3532
  %v3534 = vpop.f32.mrb[0].mxu0
  %3535 = vmatprep.mubr.f32.mxu0 0.0
  %3536 = vmatmul.mubr.f32.gmra.mrb[0].mxu0 %v3389
  %v3537 = vpop.f32.mrb[0].mxu0
  %v3538 = vadd.f32 %v3356, %v3537
  %v3539 = vpop.f32.mrb[0].mxu0
  %3540 = vmatprep.mubr.f32.mxu0 0.0
  %3541 = vmatmul.mubr.f32.gmra.mrb[0].mxu0 %v3392
  %v3542 = vpop.f32.mrb[0].mxu0
  %v3543 = vadd.f32 %v3356, %v3542
  %v3544 = vpop.f32.mrb[0].mxu0
  %3545 = vmatprep.mubr.f32.mxu0 0.0
  %3546 = vmatmul.mubr.f32.gmra.mrb[0].mxu0 %v3395
  %v3547 = vpop.f32.mrb[0].mxu0
  %v3548 = vadd.f32 %v3356, %v3547
  %v3549 = vpop.f32.mrb[0].mxu0
  %3550 = vmatprep.mubr.f32.mxu0 0.0
  %3551 = vmatmul.mubr.f32.gmra.mrb[0].mxu0 %v3398
  %v3552 = vpop.f32.mrb[0].mxu0
  %v3553 = vadd.f32 %v3356, %v3552
  %v3554 = vpop.f32.mrb[0].mxu0
  %3555 = vmatprep.mubr.f32.mxu0 0.0
  %3556 = vmatmul.mubr.f32.gmra.mrb[0].mxu0 %v3401
  %v3557 = vpop.f32.mrb[0].mxu0
  %v3558 = vadd.f32 %v3356, %v3557
  %v3559 = vpop.f32.mrb[0].mxu0
  %3560 = vmatprep.mubr.f32.mxu0 0.0
  %3561 = vmatmul.mubr.f32.gmra.mrb[0].mxu0 %v3404
  %v3562 = vpop.f32.mrb[0].mxu0
  %v3563 = vadd.f32 %v3356, %v3562
  %v3564 = vpop.f32.mrb[0].mxu0
  %3565 = vmatprep.mubr.f32.mxu0 0.0
  %3566 = vmatmul.mubr.f32.gmra.mrb[0].mxu0 %v3407
  %v3567 = vpop.f32.mrb[0].mxu0
  %v3568 = vadd.f32 %v3356, %v3567
  %v3569 = vpop.f32.mrb[0].mxu0
  %3570 = vmatprep.mubr.f32.mxu0 0.0
  %3571 = vmatmul.mubr.f32.gmra.mrb[0].mxu0 %v3410
  %v3572 = vpop.f32.mrb[0].mxu0
  %v3573 = vadd.f32 %v3356, %v3572
  %v3574 = vpop.f32.mrb[0].mxu0
  %3575 = vmatprep.mubr.f32.mxu0 0.0
  %3576 = vmatmul.mubr.f32.gmra.mrb[0].mxu0 %v3413
  %v3577 = vpop.f32.mrb[0].mxu0
  %v3578 = vadd.f32 %v3356, %v3577
  %v3579 = vpop.f32.mrb[0].mxu0
  %3580 = vmatprep.mubr.f32.mxu0 0.0
  %3581 = vmatmul.mubr.f32.gmra.mrb[0].mxu0 %v3416
  %v3582 = vpop.f32.mrb[0].mxu0
  %v3583 = vadd.f32 %v3356, %v3582
  %v3584 = vpop.f32.mrb[0].mxu0
  %3585 = vmatprep.mubr.f32.mxu0 0.0
  %3586 = vmatmul.mubr.f32.gmra.mrb[0].mxu0 %v3419
  %v3587 = vpop.f32.mrb[0].mxu0
  %v3588 = vadd.f32 %v3356, %v3587
  %v3589 = vpop.f32.mrb[0].mxu0
  %3590 = vdwg.mxu0
  %v3591 = vld [vmem:[%s11] sm:$0xff]
  %v3592 = vld [vmem:[%s11 + $0x8] sm:$0xff]
  %v3593 = vld [vmem:[%s11 + $0x10] sm:$0xff]
  %v3594 = vld [vmem:[%s11 + $0x18] sm:$0xff]
  %vm3595 = vcmask 261120
  %v3596 = vsel %vm3595, 0.0, 0
  %3598 = vmatprep.subr.mxu0 0.0
  %3599 = vmatpush1.msra.mxu0 %v3591
  %3600 = vmatprep.subr.mxu0 0.0
  %3601 = vmatpush1.msra.mxu0 %v3592
  %3602 = vmatprep.subr.mxu0 0.0
  %3603 = vmatpush1.msra.mxu0 %v3593
  %3604 = vmatprep.subr.mxu0 0.0
  %3605 = vmatpush1.msra.mxu0 %v3594
  %3606 = vmatprep.subr.mxu0 0.0
  %3607 = vmatpush1.msra.mxu0 0.0
  %3608 = vmatprep.subr.mxu0 0.0
  %3609 = vmatpush1.msra.mxu0 0.0
  %3610 = vmatprep.subr.mxu0 0.0
  %3611 = vmatpush1.msra.mxu0 0.0
  %3612 = vmatprep.subr.mxu0 0.0
  %3613 = vmatpush1.msra.mxu0 0.0
  %3614 = vmatprep.subr.mxu0 0.0
  %3615 = vmatpush1.msra.mxu0 0.0
  %3616 = vmatprep.subr.mxu0 0.0
  %3617 = vmatpush1.msra.mxu0 0.0
  %3618 = vmatprep.subr.mxu0 0.0
  %3619 = vmatpush1.msra.mxu0 0.0
  %3620 = vmatprep.subr.mxu0 0.0
  %3621 = vmatpush1.msra.mxu0 0.0
  %3622 = vmatprep.subr.mxu0 0.0
  %3623 = vmatpush1.msra.mxu0 0.0
  %3624 = vmatprep.subr.mxu0 0.0
  %3625 = vmatpush1.msra.mxu0 0.0
  %3626 = vmatprep.subr.mxu0 0.0
  %3627 = vmatpush1.msra.mxu0 0.0
  %3628 = vmatprep.subr.mxu0 0.0
  %3629 = vmatpush1.msra.mxu0 0.0
  %3630 = vmatprep.subr.mxu0 0.0
  %3631 = vmatpush1.msra.mxu0 0.0
  %3632 = vmatprep.subr.mxu0 0.0
  %3633 = vmatpush1.msra.mxu0 0.0
  %3634 = vmatprep.subr.mxu0 0.0
  %3635 = vmatpush1.msra.mxu0 0.0
  %3636 = vmatprep.subr.mxu0 0.0
  %3637 = vmatpush1.msra.mxu0 0.0
  %3638 = vmatprep.subr.mxu0 0.0
  %3639 = vmatpush1.msra.mxu0 0.0
  %3640 = vmatprep.subr.mxu0 0.0
  %3641 = vmatpush1.msra.mxu0 0.0
  %3642 = vmatprep.subr.mxu0 0.0
  %3643 = vmatpush1.msra.mxu0 0.0
  %3644 = vmatprep.subr.mxu0 0.0
  %3645 = vmatpush1.msra.mxu0 0.0
  %3646 = vmatprep.subr.mxu0 0.0
  %3647 = vmatpush1.msra.mxu0 0.0
  %3648 = vmatprep.subr.mxu0 0.0
  %3649 = vmatpush1.msra.mxu0 0.0
  %3650 = vmatprep.subr.mxu0 0.0
  %3651 = vmatpush1.msra.mxu0 0.0
  %3652 = vmatprep.subr.mxu0 0.0
  %3653 = vmatpush1.msra.mxu0 0.0
  %3654 = vmatprep.subr.mxu0 0.0
  %3655 = vmatpush1.msra.mxu0 0.0
  %3656 = vmatprep.subr.mxu0 0.0
  %3657 = vmatpush1.msra.mxu0 0.0
  %3658 = vmatprep.subr.mxu0 0.0
  %3659 = vmatpush1.msra.mxu0 0.0
  %3660 = vmatprep.subr.mxu0 0.0
  %3661 = vmatpush1.msra.mxu0 0.0
  %3662 = vmatprep.mubr.f32.mxu0 0.0
  %3663 = vmatmul.mubr.f32.gmra.mrb[0].mxu0 %v3596
  %v3664 = vpop.f32.mrb[0].mxu0
  %v3665 = vadd.f32 0.0, %v3664
  %v3666 = vpop.f32.mrb[0].mxu0
  %3667 = vmatprep.mubr.f32.mxu0 0.0
  %3668 = vmatmul.mubr.f32.gmra.mrb[0].mxu0 %v3596
  %v3669 = vpop.f32.mrb[0].mxu0
  %v3670 = vadd.f32 0.0, %v3669
  %v3671 = vpop.f32.mrb[0].mxu0
  %3672 = vmatprep.mubr.f32.mxu0 0.0
  %3673 = vmatmul.mubr.f32.gmra.mrb[0].mxu0 %v3596
  %v3674 = vpop.f32.mrb[0].mxu0
  %v3675 = vadd.f32 0.0, %v3674
  %v3676 = vpop.f32.mrb[0].mxu0
  %3677 = vdwg.mxu0
  %v3678 = vadd.f32 %v3488, %v3665
  %v3679 = vadd.f32 %v3493, %v3670
  %v3680 = vadd.f32 %v3498, %v3675
  %v3681 = vxor.u32 %v3678, 2147483648
  %v3682 = vxor.u32 %v3679, 2147483648
  %v3683 = vxor.u32 %v3680, 2147483648
  %v3684 = vmul.f32 %v3681, 1.442695
  %v3685 = vpow.pop %v3684
  %v3686 = vmul.f32 %v3682, 1.442695
  %v3687 = vpow.pop %v3686
  %v3688 = vmul.f32 %v3683, 1.442695
  %v3689 = vpow.pop %v3688
  %v3690 = vadd.f32 %v3685, 1.0
  %v3691 = vadd.f32 %v3687, 1.0
  %v3692 = vadd.f32 %v3689, 1.0
  %v3693 = vrcp.pop %v3690
  %v3694 = vmul.f32 1.0, %v3693
  %v3695 = vrcp.pop %v3691
  %v3696 = vmul.f32 1.0, %v3695
  %v3697 = vrcp.pop %v3692
  %v3698 = vmul.f32 1.0, %v3697
  %v3699 = vtanh.pop %v3678
  %v3700 = vtanh.pop %v3679
  %v3701 = vtanh.pop %v3680
  %v3702 = vmul.f32 %v3694, 0.0
  %v3703 = vmul.f32 %v3696, 0.0
  %v3704 = vmul.f32 %v3698, 0.0
  %3708 = vrot.lane.b32.xlu0 %v3699, 64
  %v3709 = vpop.permute.xlu0 %3708
  %3710 = vrot.lane.b32.xlu0 %v3700, 64
  %v3711 = vpop.permute.xlu0 %3710
  %3712 = vrot.lane.b32.xlu0 %v3701, 64
  %v3713 = vpop.permute.xlu0 %3712
  %v3717 = vmul.f32 %v3694, %v3709
  %v3718 = vmul.f32 %v3696, %v3711
  %v3719 = vmul.f32 %v3698, %v3713
  %3723 = vrot.lane.b32.xlu0 %v3717, 32
  %v3724 = vpop.permute.xlu0 %3723
  %3725 = vrot.lane.b32.xlu0 %v3718, 32
  %v3726 = vpop.permute.xlu0 %3725
  %3727 = vrot.lane.b32.xlu0 %v3719, 32
  %v3728 = vpop.permute.xlu0 %3727
  %v3732 = vadd.f32 %v3702, %v3724
  %v3733 = vadd.f32 %v3703, %v3726
  %v3734 = vadd.f32 %v3704, %v3728
  %v3735 = vtanh.pop %v3732
  %v3736 = vtanh.pop %v3733
  %v3737 = vtanh.pop %v3734
  %3741 = vrot.lane.b32.xlu0 %v3735, 64
  %v3742 = vpop.permute.xlu0 %3741
  %3743 = vrot.lane.b32.xlu0 %v3736, 64
  %v3744 = vpop.permute.xlu0 %3743
  %3745 = vrot.lane.b32.xlu0 %v3737, 64
  %v3746 = vpop.permute.xlu0 %3745
  %v3750 = vmul.f32 %v3694, %v3742
  %v3751 = vmul.f32 %v3696, %v3744
  %v3752 = vmul.f32 %v3698, %v3746
  %3756 = vrot.lane.b32.xlu0 %v3750, 32
  %v3757 = vpop.permute.xlu0 %3756
  %3758 = vrot.lane.b32.xlu0 %v3751, 32
  %v3759 = vpop.permute.xlu0 %3758
  %3760 = vrot.lane.b32.xlu0 %v3752, 32
  %v3761 = vpop.permute.xlu0 %3760
  %v3762 = vsel %vm3595, %v3757, 0
  %v3764 = vsel %vm3595, %v3759, 0
  %v3766 = vsel %vm3595, %v3761, 0
  %3768 = vmatprep.subr.mxu0 0.0
  %3769 = vmatpush1.msra.mxu0 %v3591
  %3770 = vmatprep.subr.mxu0 0.0
  %3771 = vmatpush1.msra.mxu0 %v3592
  %3772 = vmatprep.subr.mxu0 0.0
  %3773 = vmatpush1.msra.mxu0 %v3593
  %3774 = vmatprep.subr.mxu0 0.0
  %3775 = vmatpush1.msra.mxu0 %v3594
  %3776 = vmatprep.subr.mxu0 0.0
  %3777 = vmatpush1.msra.mxu0 0.0
  %3778 = vmatprep.subr.mxu0 0.0
  %3779 = vmatpush1.msra.mxu0 0.0
  %3780 = vmatprep.subr.mxu0 0.0
  %3781 = vmatpush1.msra.mxu0 0.0
  %3782 = vmatprep.subr.mxu0 0.0
  %3783 = vmatpush1.msra.mxu0 0.0
  %3784 = vmatprep.subr.mxu0 0.0
  %3785 = vmatpush1.msra.mxu0 0.0
  %3786 = vmatprep.subr.mxu0 0.0
  %3787 = vmatpush1.msra.mxu0 0.0
  %3788 = vmatprep.subr.mxu0 0.0
  %3789 = vmatpush1.msra.mxu0 0.0
  %3790 = vmatprep.subr.mxu0 0.0
  %3791 = vmatpush1.msra.mxu0 0.0
  %3792 = vmatprep.subr.mxu0 0.0
  %3793 = vmatpush1.msra.mxu0 0.0
  %3794 = vmatprep.subr.mxu0 0.0
  %3795 = vmatpush1.msra.mxu0 0.0
  %3796 = vmatprep.subr.mxu0 0.0
  %3797 = vmatpush1.msra.mxu0 0.0
  %3798 = vmatprep.subr.mxu0 0.0
  %3799 = vmatpush1.msra.mxu0 0.0
  %3800 = vmatprep.subr.mxu0 0.0
  %3801 = vmatpush1.msra.mxu0 0.0
  %3802 = vmatprep.subr.mxu0 0.0
  %3803 = vmatpush1.msra.mxu0 0.0
  %3804 = vmatprep.subr.mxu0 0.0
  %3805 = vmatpush1.msra.mxu0 0.0
  %3806 = vmatprep.subr.mxu0 0.0
  %3807 = vmatpush1.msra.mxu0 0.0
  %3808 = vmatprep.subr.mxu0 0.0
  %3809 = vmatpush1.msra.mxu0 0.0
  %3810 = vmatprep.subr.mxu0 0.0
  %3811 = vmatpush1.msra.mxu0 0.0
  %3812 = vmatprep.subr.mxu0 0.0
  %3813 = vmatpush1.msra.mxu0 0.0
  %3814 = vmatprep.subr.mxu0 0.0
  %3815 = vmatpush1.msra.mxu0 0.0
  %3816 = vmatprep.subr.mxu0 0.0
  %3817 = vmatpush1.msra.mxu0 0.0
  %3818 = vmatprep.subr.mxu0 0.0
  %3819 = vmatpush1.msra.mxu0 0.0
  %3820 = vmatprep.subr.mxu0 0.0
  %3821 = vmatpush1.msra.mxu0 0.0
  %3822 = vmatprep.subr.mxu0 0.0
  %3823 = vmatpush1.msra.mxu0 0.0
  %3824 = vmatprep.subr.mxu0 0.0
  %3825 = vmatpush1.msra.mxu0 0.0
  %3826 = vmatprep.subr.mxu0 0.0
  %3827 = vmatpush1.msra.mxu0 0.0
  %3828 = vmatprep.subr.mxu0 0.0
  %3829 = vmatpush1.msra.mxu0 0.0
  %3830 = vmatprep.subr.mxu0 0.0
  %3831 = vmatpush1.msra.mxu0 0.0
  %3832 = vmatprep.mubr.f32.mxu0 0.0
  %3833 = vmatmul.mubr.f32.gmra.mrb[0].mxu0 %v3762
  %v3834 = vpop.f32.mrb[0].mxu0
  %v3835 = vadd.f32 0.0, %v3834
  %v3836 = vpop.f32.mrb[0].mxu0
  %3837 = vmatprep.mubr.f32.mxu0 0.0
  %3838 = vmatmul.mubr.f32.gmra.mrb[0].mxu0 %v3764
  %v3839 = vpop.f32.mrb[0].mxu0
  %v3840 = vadd.f32 0.0, %v3839
  %v3841 = vpop.f32.mrb[0].mxu0
  %3842 = vmatprep.mubr.f32.mxu0 0.0
  %3843 = vmatmul.mubr.f32.gmra.mrb[0].mxu0 %v3766
  %v3844 = vpop.f32.mrb[0].mxu0
  %v3845 = vadd.f32 0.0, %v3844
  %v3846 = vpop.f32.mrb[0].mxu0
  %3847 = vdwg.mxu0
  %v3848 = vadd.f32 %v3503, %v3835
  %v3849 = vadd.f32 %v3508, %v3840
  %v3850 = vadd.f32 %v3513, %v3845
  %v3851 = vxor.u32 %v3848, 2147483648
  %v3852 = vxor.u32 %v3849, 2147483648
  %v3853 = vxor.u32 %v3850, 2147483648
  %v3854 = vmul.f32 %v3851, 1.442695
  %v3855 = vpow.pop %v3854
  %v3856 = vmul.f32 %v3852, 1.442695
  %v3857 = vpow.pop %v3856
  %v3858 = vmul.f32 %v3853, 1.442695
  %v3859 = vpow.pop %v3858
  %v3860 = vadd.f32 %v3855, 1.0
  %v3861 = vadd.f32 %v3857, 1.0
  %v3862 = vadd.f32 %v3859, 1.0
  %v3863 = vrcp.pop %v3860
  %v3864 = vmul.f32 1.0, %v3863
  %v3865 = vrcp.pop %v3861
  %v3866 = vmul.f32 1.0, %v3865
  %v3867 = vrcp.pop %v3862
  %v3868 = vmul.f32 1.0, %v3867
  %v3869 = vtanh.pop %v3848
  %v3870 = vtanh.pop %v3849
  %v3871 = vtanh.pop %v3850
  %v3872 = vmul.f32 %v3864, %v3732
  %v3873 = vmul.f32 %v3866, %v3733
  %v3874 = vmul.f32 %v3868, %v3734
  %3878 = vrot.lane.b32.xlu0 %v3869, 64
  %v3879 = vpop.permute.xlu0 %3878
  %3880 = vrot.lane.b32.xlu0 %v3870, 64
  %v3881 = vpop.permute.xlu0 %3880
  %3882 = vrot.lane.b32.xlu0 %v3871, 64
  %v3883 = vpop.permute.xlu0 %3882
  %v3887 = vmul.f32 %v3864, %v3879
  %v3888 = vmul.f32 %v3866, %v3881
  %v3889 = vmul.f32 %v3868, %v3883
  %3893 = vrot.lane.b32.xlu0 %v3887, 32
  %v3894 = vpop.permute.xlu0 %3893
  %3895 = vrot.lane.b32.xlu0 %v3888, 32
  %v3896 = vpop.permute.xlu0 %3895
  %3897 = vrot.lane.b32.xlu0 %v3889, 32
  %v3898 = vpop.permute.xlu0 %3897
  %v3902 = vadd.f32 %v3872, %v3894
  %v3903 = vadd.f32 %v3873, %v3896
  %v3904 = vadd.f32 %v3874, %v3898
  %v3905 = vtanh.pop %v3902
  %v3906 = vtanh.pop %v3903
  %v3907 = vtanh.pop %v3904
  %3911 = vrot.lane.b32.xlu0 %v3905, 64
  %v3912 = vpop.permute.xlu0 %3911
  %3913 = vrot.lane.b32.xlu0 %v3906, 64
  %v3914 = vpop.permute.xlu0 %3913
  %3915 = vrot.lane.b32.xlu0 %v3907, 64
  %v3916 = vpop.permute.xlu0 %3915
  %v3920 = vmul.f32 %v3864, %v3912
  %v3921 = vmul.f32 %v3866, %v3914
  %v3922 = vmul.f32 %v3868, %v3916
  %3926 = vrot.lane.b32.xlu0 %v3920, 32
  %v3927 = vpop.permute.xlu0 %3926
  %3928 = vrot.lane.b32.xlu0 %v3921, 32
  %v3929 = vpop.permute.xlu0 %3928
  %3930 = vrot.lane.b32.xlu0 %v3922, 32
  %v3931 = vpop.permute.xlu0 %3930
  %v3932 = vsel %vm3595, %v3927, 0
  %v3934 = vsel %vm3595, %v3929, 0
  %v3936 = vsel %vm3595, %v3931, 0
  %3938 = vmatprep.subr.mxu0 0.0
  %3939 = vmatpush1.msra.mxu0 %v3591
  %3940 = vmatprep.subr.mxu0 0.0
  %3941 = vmatpush1.msra.mxu0 %v3592
  %3942 = vmatprep.subr.mxu0 0.0
  %3943 = vmatpush1.msra.mxu0 %v3593
  %3944 = vmatprep.subr.mxu0 0.0
  %3945 = vmatpush1.msra.mxu0 %v3594
  %3946 = vmatprep.subr.mxu0 0.0
  %3947 = vmatpush1.msra.mxu0 0.0
  %3948 = vmatprep.subr.mxu0 0.0
  %3949 = vmatpush1.msra.mxu0 0.0
  %3950 = vmatprep.subr.mxu0 0.0
  %3951 = vmatpush1.msra.mxu0 0.0
  %3952 = vmatprep.subr.mxu0 0.0
  %3953 = vmatpush1.msra.mxu0 0.0
  %3954 = vmatprep.subr.mxu0 0.0
  %3955 = vmatpush1.msra.mxu0 0.0
  %3956 = vmatprep.subr.mxu0 0.0
  %3957 = vmatpush1.msra.mxu0 0.0
  %3958 = vmatprep.subr.mxu0 0.0
  %3959 = vmatpush1.msra.mxu0 0.0
  %3960 = vmatprep.subr.mxu0 0.0
  %3961 = vmatpush1.msra.mxu0 0.0
  %3962 = vmatprep.subr.mxu0 0.0
  %3963 = vmatpush1.msra.mxu0 0.0
  %3964 = vmatprep.subr.mxu0 0.0
  %3965 = vmatpush1.msra.mxu0 0.0
  %3966 = vmatprep.subr.mxu0 0.0
  %3967 = vmatpush1.msra.mxu0 0.0
  %3968 = vmatprep.subr.mxu0 0.0
  %3969 = vmatpush1.msra.mxu0 0.0
  %3970 = vmatprep.subr.mxu0 0.0
  %3971 = vmatpush1.msra.mxu0 0.0
  %3972 = vmatprep.subr.mxu0 0.0
  %3973 = vmatpush1.msra.mxu0 0.0
  %3974 = vmatprep.subr.mxu0 0.0
  %3975 = vmatpush1.msra.mxu0 0.0
  %3976 = vmatprep.subr.mxu0 0.0
  %3977 = vmatpush1.msra.mxu0 0.0
  %3978 = vmatprep.subr.mxu0 0.0
  %3979 = vmatpush1.msra.mxu0 0.0
  %3980 = vmatprep.subr.mxu0 0.0
  %3981 = vmatpush1.msra.mxu0 0.0
  %3982 = vmatprep.subr.mxu0 0.0
  %3983 = vmatpush1.msra.mxu0 0.0
  %3984 = vmatprep.subr.mxu0 0.0
  %3985 = vmatpush1.msra.mxu0 0.0
  %3986 = vmatprep.subr.mxu0 0.0
  %3987 = vmatpush1.msra.mxu0 0.0
  %3988 = vmatprep.subr.mxu0 0.0
  %3989 = vmatpush1.msra.mxu0 0.0
  %3990 = vmatprep.subr.mxu0 0.0
  %3991 = vmatpush1.msra.mxu0 0.0
  %3992 = vmatprep.subr.mxu0 0.0
  %3993 = vmatpush1.msra.mxu0 0.0
  %3994 = vmatprep.subr.mxu0 0.0
  %3995 = vmatpush1.msra.mxu0 0.0
  %3996 = vmatprep.subr.mxu0 0.0
  %3997 = vmatpush1.msra.mxu0 0.0
  %3998 = vmatprep.subr.mxu0 0.0
  %3999 = vmatpush1.msra.mxu0 0.0
  %4000 = vmatprep.subr.mxu0 0.0
  %4001 = vmatpush1.msra.mxu0 0.0
  %4002 = vmatprep.mubr.f32.mxu0 0.0
  %4003 = vmatmul.mubr.f32.gmra.mrb[0].mxu0 %v3932
  %v4004 = vpop.f32.mrb[0].mxu0
  %v4005 = vadd.f32 0.0, %v4004
  %v4006 = vpop.f32.mrb[0].mxu0
  %4007 = vmatprep.mubr.f32.mxu0 0.0
  %4008 = vmatmul.mubr.f32.gmra.mrb[0].mxu0 %v3934
  %v4009 = vpop.f32.mrb[0].mxu0
  %v4010 = vadd.f32 0.0, %v4009
  %v4011 = vpop.f32.mrb[0].mxu0
  %4012 = vmatprep.mubr.f32.mxu0 0.0
  %4013 = vmatmul.mubr.f32.gmra.mrb[0].mxu0 %v3936
  %v4014 = vpop.f32.mrb[0].mxu0
  %v4015 = vadd.f32 0.0, %v4014
  %v4016 = vpop.f32.mrb[0].mxu0
  %4017 = vdwg.mxu0
  %v4018 = vadd.f32 %v3518, %v4005
  %v4019 = vadd.f32 %v3523, %v4010
  %v4020 = vadd.f32 %v3528, %v4015
  %v4021 = vxor.u32 %v4018, 2147483648
  %v4022 = vxor.u32 %v4019, 2147483648
  %v4023 = vxor.u32 %v4020, 2147483648
  %v4024 = vmul.f32 %v4021, 1.442695
  %v4025 = vpow.pop %v4024
  %v4026 = vmul.f32 %v4022, 1.442695
  %v4027 = vpow.pop %v4026
  %v4028 = vmul.f32 %v4023, 1.442695
  %v4029 = vpow.pop %v4028
  %v4030 = vadd.f32 %v4025, 1.0
  %v4031 = vadd.f32 %v4027, 1.0
  %v4032 = vadd.f32 %v4029, 1.0
  %v4033 = vrcp.pop %v4030
  %v4034 = vmul.f32 1.0, %v4033
  %v4035 = vrcp.pop %v4031
  %v4036 = vmul.f32 1.0, %v4035
  %v4037 = vrcp.pop %v4032
  %v4038 = vmul.f32 1.0, %v4037
  %v4039 = vtanh.pop %v4018
  %v4040 = vtanh.pop %v4019
  %v4041 = vtanh.pop %v4020
  %v4042 = vmul.f32 %v4034, %v3902
  %v4043 = vmul.f32 %v4036, %v3903
  %v4044 = vmul.f32 %v4038, %v3904
  %4048 = vrot.lane.b32.xlu0 %v4039, 64
  %v4049 = vpop.permute.xlu0 %4048
  %4050 = vrot.lane.b32.xlu0 %v4040, 64
  %v4051 = vpop.permute.xlu0 %4050
  %4052 = vrot.lane.b32.xlu0 %v4041, 64
  %v4053 = vpop.permute.xlu0 %4052
  %v4057 = vmul.f32 %v4034, %v4049
  %v4058 = vmul.f32 %v4036, %v4051
  %v4059 = vmul.f32 %v4038, %v4053
  %4063 = vrot.lane.b32.xlu0 %v4057, 32
  %v4064 = vpop.permute.xlu0 %4063
  %4065 = vrot.lane.b32.xlu0 %v4058, 32
  %v4066 = vpop.permute.xlu0 %4065
  %4067 = vrot.lane.b32.xlu0 %v4059, 32
  %v4068 = vpop.permute.xlu0 %4067
  %v4072 = vadd.f32 %v4042, %v4064
  %v4073 = vadd.f32 %v4043, %v4066
  %v4074 = vadd.f32 %v4044, %v4068
  %v4075 = vtanh.pop %v4072
  %v4076 = vtanh.pop %v4073
  %v4077 = vtanh.pop %v4074
  %4081 = vrot.lane.b32.xlu0 %v4075, 64
  %v4082 = vpop.permute.xlu0 %4081
  %4083 = vrot.lane.b32.xlu0 %v4076, 64
  %v4084 = vpop.permute.xlu0 %4083
  %4085 = vrot.lane.b32.xlu0 %v4077, 64
  %v4086 = vpop.permute.xlu0 %4085
  %v4090 = vmul.f32 %v4034, %v4082
  %v4091 = vmul.f32 %v4036, %v4084
  %v4092 = vmul.f32 %v4038, %v4086
  %4096 = vrot.lane.b32.xlu0 %v4090, 32
  %v4097 = vpop.permute.xlu0 %4096
  %4098 = vrot.lane.b32.xlu0 %v4091, 32
  %v4099 = vpop.permute.xlu0 %4098
  %4100 = vrot.lane.b32.xlu0 %v4092, 32
  %v4101 = vpop.permute.xlu0 %4100
  %v4102 = vsel %vm3595, %v4097, 0
  %v4104 = vsel %vm3595, %v4099, 0
  %v4106 = vsel %vm3595, %v4101, 0
  %4108 = vmatprep.subr.mxu0 0.0
  %4109 = vmatpush1.msra.mxu0 %v3591
  %4110 = vmatprep.subr.mxu0 0.0
  %4111 = vmatpush1.msra.mxu0 %v3592
  %4112 = vmatprep.subr.mxu0 0.0
  %4113 = vmatpush1.msra.mxu0 %v3593
  %4114 = vmatprep.subr.mxu0 0.0
  %4115 = vmatpush1.msra.mxu0 %v3594
  %4116 = vmatprep.subr.mxu0 0.0
  %4117 = vmatpush1.msra.mxu0 0.0
  %4118 = vmatprep.subr.mxu0 0.0
  %4119 = vmatpush1.msra.mxu0 0.0
  %4120 = vmatprep.subr.mxu0 0.0
  %4121 = vmatpush1.msra.mxu0 0.0
  %4122 = vmatprep.subr.mxu0 0.0
  %4123 = vmatpush1.msra.mxu0 0.0
  %4124 = vmatprep.subr.mxu0 0.0
  %4125 = vmatpush1.msra.mxu0 0.0
  %4126 = vmatprep.subr.mxu0 0.0
  %4127 = vmatpush1.msra.mxu0 0.0
  %4128 = vmatprep.subr.mxu0 0.0
  %4129 = vmatpush1.msra.mxu0 0.0
  %4130 = vmatprep.subr.mxu0 0.0
  %4131 = vmatpush1.msra.mxu0 0.0
  %4132 = vmatprep.subr.mxu0 0.0
  %4133 = vmatpush1.msra.mxu0 0.0
  %4134 = vmatprep.subr.mxu0 0.0
  %4135 = vmatpush1.msra.mxu0 0.0
  %4136 = vmatprep.subr.mxu0 0.0
  %4137 = vmatpush1.msra.mxu0 0.0
  %4138 = vmatprep.subr.mxu0 0.0
  %4139 = vmatpush1.msra.mxu0 0.0
  %4140 = vmatprep.subr.mxu0 0.0
  %4141 = vmatpush1.msra.mxu0 0.0
  %4142 = vmatprep.subr.mxu0 0.0
  %4143 = vmatpush1.msra.mxu0 0.0
  %4144 = vmatprep.subr.mxu0 0.0
  %4145 = vmatpush1.msra.mxu0 0.0
  %4146 = vmatprep.subr.mxu0 0.0
  %4147 = vmatpush1.msra.mxu0 0.0
  %4148 = vmatprep.subr.mxu0 0.0
  %4149 = vmatpush1.msra.mxu0 0.0
  %4150 = vmatprep.subr.mxu0 0.0
  %4151 = vmatpush1.msra.mxu0 0.0
  %4152 = vmatprep.subr.mxu0 0.0
  %4153 = vmatpush1.msra.mxu0 0.0
  %4154 = vmatprep.subr.mxu0 0.0
  %4155 = vmatpush1.msra.mxu0 0.0
  %4156 = vmatprep.subr.mxu0 0.0
  %4157 = vmatpush1.msra.mxu0 0.0
  %4158 = vmatprep.subr.mxu0 0.0
  %4159 = vmatpush1.msra.mxu0 0.0
  %4160 = vmatprep.subr.mxu0 0.0
  %4161 = vmatpush1.msra.mxu0 0.0
  %4162 = vmatprep.subr.mxu0 0.0
  %4163 = vmatpush1.msra.mxu0 0.0
  %4164 = vmatprep.subr.mxu0 0.0
  %4165 = vmatpush1.msra.mxu0 0.0
  %4166 = vmatprep.subr.mxu0 0.0
  %4167 = vmatpush1.msra.mxu0 0.0
  %4168 = vmatprep.subr.mxu0 0.0
  %4169 = vmatpush1.msra.mxu0 0.0
  %4170 = vmatprep.subr.mxu0 0.0
  %4171 = vmatpush1.msra.mxu0 0.0
  %4172 = vmatprep.mubr.f32.mxu0 0.0
  %4173 = vmatmul.mubr.f32.gmra.mrb[0].mxu0 %v4102
  %v4174 = vpop.f32.mrb[0].mxu0
  %v4175 = vadd.f32 0.0, %v4174
  %v4176 = vpop.f32.mrb[0].mxu0
  %4177 = vmatprep.mubr.f32.mxu0 0.0
  %4178 = vmatmul.mubr.f32.gmra.mrb[0].mxu0 %v4104
  %v4179 = vpop.f32.mrb[0].mxu0
  %v4180 = vadd.f32 0.0, %v4179
  %v4181 = vpop.f32.mrb[0].mxu0
  %4182 = vmatprep.mubr.f32.mxu0 0.0
  %4183 = vmatmul.mubr.f32.gmra.mrb[0].mxu0 %v4106
  %v4184 = vpop.f32.mrb[0].mxu0
  %v4185 = vadd.f32 0.0, %v4184
  %v4186 = vpop.f32.mrb[0].mxu0
  %4187 = vdwg.mxu0
  %v4188 = vadd.f32 %v3533, %v4175
  %v4189 = vadd.f32 %v3538, %v4180
  %v4190 = vadd.f32 %v3543, %v4185
  %v4191 = vxor.u32 %v4188, 2147483648
  %v4192 = vxor.u32 %v4189, 2147483648
  %v4193 = vxor.u32 %v4190, 2147483648
  %v4194 = vmul.f32 %v4191, 1.442695
  %v4195 = vpow.pop %v4194
  %v4196 = vmul.f32 %v4192, 1.442695
  %v4197 = vpow.pop %v4196
  %v4198 = vmul.f32 %v4193, 1.442695
  %v4199 = vpow.pop %v4198
  %v4200 = vadd.f32 %v4195, 1.0
  %v4201 = vadd.f32 %v4197, 1.0
  %v4202 = vadd.f32 %v4199, 1.0
  %v4203 = vrcp.pop %v4200
  %v4204 = vmul.f32 1.0, %v4203
  %v4205 = vrcp.pop %v4201
  %v4206 = vmul.f32 1.0, %v4205
  %v4207 = vrcp.pop %v4202
  %v4208 = vmul.f32 1.0, %v4207
  %v4209 = vtanh.pop %v4188
  %v4210 = vtanh.pop %v4189
  %v4211 = vtanh.pop %v4190
  %v4212 = vmul.f32 %v4204, %v4072
  %v4213 = vmul.f32 %v4206, %v4073
  %v4214 = vmul.f32 %v4208, %v4074
  %4218 = vrot.lane.b32.xlu0 %v4209, 64
  %v4219 = vpop.permute.xlu0 %4218
  %4220 = vrot.lane.b32.xlu0 %v4210, 64
  %v4221 = vpop.permute.xlu0 %4220
  %4222 = vrot.lane.b32.xlu0 %v4211, 64
  %v4223 = vpop.permute.xlu0 %4222
  %v4227 = vmul.f32 %v4204, %v4219
  %v4228 = vmul.f32 %v4206, %v4221
  %v4229 = vmul.f32 %v4208, %v4223
  %4233 = vrot.lane.b32.xlu0 %v4227, 32
  %v4234 = vpop.permute.xlu0 %4233
  %4235 = vrot.lane.b32.xlu0 %v4228, 32
  %v4236 = vpop.permute.xlu0 %4235
  %4237 = vrot.lane.b32.xlu0 %v4229, 32
  %v4238 = vpop.permute.xlu0 %4237
  %v4242 = vadd.f32 %v4212, %v4234
  %v4243 = vadd.f32 %v4213, %v4236
  %v4244 = vadd.f32 %v4214, %v4238
  %v4245 = vtanh.pop %v4242
  %v4246 = vtanh.pop %v4243
  %v4247 = vtanh.pop %v4244
  %4251 = vrot.lane.b32.xlu0 %v4245, 64
  %v4252 = vpop.permute.xlu0 %4251
  %4253 = vrot.lane.b32.xlu0 %v4246, 64
  %v4254 = vpop.permute.xlu0 %4253
  %4255 = vrot.lane.b32.xlu0 %v4247, 64
  %v4256 = vpop.permute.xlu0 %4255
  %v4260 = vmul.f32 %v4204, %v4252
  %v4261 = vmul.f32 %v4206, %v4254
  %v4262 = vmul.f32 %v4208, %v4256
  %4266 = vrot.lane.b32.xlu0 %v4260, 32
  %v4267 = vpop.permute.xlu0 %4266
  %4268 = vrot.lane.b32.xlu0 %v4261, 32
  %v4269 = vpop.permute.xlu0 %4268
  %4270 = vrot.lane.b32.xlu0 %v4262, 32
  %v4271 = vpop.permute.xlu0 %4270
  %v4272 = vsel %vm3595, %v4267, 0
  %v4274 = vsel %vm3595, %v4269, 0
  %v4276 = vsel %vm3595, %v4271, 0
  %4278 = vmatprep.subr.mxu0 0.0
  %4279 = vmatpush1.msra.mxu0 %v3591
  %4280 = vmatprep.subr.mxu0 0.0
  %4281 = vmatpush1.msra.mxu0 %v3592
  %4282 = vmatprep.subr.mxu0 0.0
  %4283 = vmatpush1.msra.mxu0 %v3593
  %4284 = vmatprep.subr.mxu0 0.0
  %4285 = vmatpush1.msra.mxu0 %v3594
  %4286 = vmatprep.subr.mxu0 0.0
  %4287 = vmatpush1.msra.mxu0 0.0
  %4288 = vmatprep.subr.mxu0 0.0
  %4289 = vmatpush1.msra.mxu0 0.0
  %4290 = vmatprep.subr.mxu0 0.0
  %4291 = vmatpush1.msra.mxu0 0.0
  %4292 = vmatprep.subr.mxu0 0.0
  %4293 = vmatpush1.msra.mxu0 0.0
  %4294 = vmatprep.subr.mxu0 0.0
  %4295 = vmatpush1.msra.mxu0 0.0
  %4296 = vmatprep.subr.mxu0 0.0
  %4297 = vmatpush1.msra.mxu0 0.0
  %4298 = vmatprep.subr.mxu0 0.0
  %4299 = vmatpush1.msra.mxu0 0.0
  %4300 = vmatprep.subr.mxu0 0.0
  %4301 = vmatpush1.msra.mxu0 0.0
  %4302 = vmatprep.subr.mxu0 0.0
  %4303 = vmatpush1.msra.mxu0 0.0
  %4304 = vmatprep.subr.mxu0 0.0
  %4305 = vmatpush1.msra.mxu0 0.0
  %4306 = vmatprep.subr.mxu0 0.0
  %4307 = vmatpush1.msra.mxu0 0.0
  %4308 = vmatprep.subr.mxu0 0.0
  %4309 = vmatpush1.msra.mxu0 0.0
  %4310 = vmatprep.subr.mxu0 0.0
  %4311 = vmatpush1.msra.mxu0 0.0
  %4312 = vmatprep.subr.mxu0 0.0
  %4313 = vmatpush1.msra.mxu0 0.0
  %4314 = vmatprep.subr.mxu0 0.0
  %4315 = vmatpush1.msra.mxu0 0.0
  %4316 = vmatprep.subr.mxu0 0.0
  %4317 = vmatpush1.msra.mxu0 0.0
  %4318 = vmatprep.subr.mxu0 0.0
  %4319 = vmatpush1.msra.mxu0 0.0
  %4320 = vmatprep.subr.mxu0 0.0
  %4321 = vmatpush1.msra.mxu0 0.0
  %4322 = vmatprep.subr.mxu0 0.0
  %4323 = vmatpush1.msra.mxu0 0.0
  %4324 = vmatprep.subr.mxu0 0.0
  %4325 = vmatpush1.msra.mxu0 0.0
  %4326 = vmatprep.subr.mxu0 0.0
  %4327 = vmatpush1.msra.mxu0 0.0
  %4328 = vmatprep.subr.mxu0 0.0
  %4329 = vmatpush1.msra.mxu0 0.0
  %4330 = vmatprep.subr.mxu0 0.0
  %4331 = vmatpush1.msra.mxu0 0.0
  %4332 = vmatprep.subr.mxu0 0.0
  %4333 = vmatpush1.msra.mxu0 0.0
  %4334 = vmatprep.subr.mxu0 0.0
  %4335 = vmatpush1.msra.mxu0 0.0
  %4336 = vmatprep.subr.mxu0 0.0
  %4337 = vmatpush1.msra.mxu0 0.0
  %4338 = vmatprep.subr.mxu0 0.0
  %4339 = vmatpush1.msra.mxu0 0.0
  %4340 = vmatprep.subr.mxu0 0.0
  %4341 = vmatpush1.msra.mxu0 0.0
  %4342 = vmatprep.mubr.f32.mxu0 0.0
  %4343 = vmatmul.mubr.f32.gmra.mrb[0].mxu0 %v4272
  %v4344 = vpop.f32.mrb[0].mxu0
  %v4345 = vadd.f32 0.0, %v4344
  %v4346 = vpop.f32.mrb[0].mxu0
  %4347 = vmatprep.mubr.f32.mxu0 0.0
  %4348 = vmatmul.mubr.f32.gmra.mrb[0].mxu0 %v4274
  %v4349 = vpop.f32.mrb[0].mxu0
  %v4350 = vadd.f32 0.0, %v4349
  %v4351 = vpop.f32.mrb[0].mxu0
  %4352 = vmatprep.mubr.f32.mxu0 0.0
  %4353 = vmatmul.mubr.f32.gmra.mrb[0].mxu0 %v4276
  %v4354 = vpop.f32.mrb[0].mxu0
  %v4355 = vadd.f32 0.0, %v4354
  %v4356 = vpop.f32.mrb[0].mxu0
  %4357 = vdwg.mxu0
  %v4358 = vadd.f32 %v3548, %v4345
  %v4359 = vadd.f32 %v3553, %v4350
  %v4360 = vadd.f32 %v3558, %v4355
  %v4361 = vxor.u32 %v4358, 2147483648
  %v4362 = vxor.u32 %v4359, 2147483648
  %v4363 = vxor.u32 %v4360, 2147483648
  %v4364 = vmul.f32 %v4361, 1.442695
  %v4365 = vpow.pop %v4364
  %v4366 = vmul.f32 %v4362, 1.442695
  %v4367 = vpow.pop %v4366
  %v4368 = vmul.f32 %v4363, 1.442695
  %v4369 = vpow.pop %v4368
  %v4370 = vadd.f32 %v4365, 1.0
  %v4371 = vadd.f32 %v4367, 1.0
  %v4372 = vadd.f32 %v4369, 1.0
  %v4373 = vrcp.pop %v4370
  %v4374 = vmul.f32 1.0, %v4373
  %v4375 = vrcp.pop %v4371
  %v4376 = vmul.f32 1.0, %v4375
  %v4377 = vrcp.pop %v4372
  %v4378 = vmul.f32 1.0, %v4377
  %v4379 = vtanh.pop %v4358
  %v4380 = vtanh.pop %v4359
  %v4381 = vtanh.pop %v4360
  %v4382 = vmul.f32 %v4374, %v4242
  %v4383 = vmul.f32 %v4376, %v4243
  %v4384 = vmul.f32 %v4378, %v4244
  %4388 = vrot.lane.b32.xlu0 %v4379, 64
  %v4389 = vpop.permute.xlu0 %4388
  %4390 = vrot.lane.b32.xlu0 %v4380, 64
  %v4391 = vpop.permute.xlu0 %4390
  %4392 = vrot.lane.b32.xlu0 %v4381, 64
  %v4393 = vpop.permute.xlu0 %4392
  %v4397 = vmul.f32 %v4374, %v4389
  %v4398 = vmul.f32 %v4376, %v4391
  %v4399 = vmul.f32 %v4378, %v4393
  %4403 = vrot.lane.b32.xlu0 %v4397, 32
  %v4404 = vpop.permute.xlu0 %4403
  %4405 = vrot.lane.b32.xlu0 %v4398, 32
  %v4406 = vpop.permute.xlu0 %4405
  %4407 = vrot.lane.b32.xlu0 %v4399, 32
  %v4408 = vpop.permute.xlu0 %4407
  %v4412 = vadd.f32 %v4382, %v4404
  %v4413 = vadd.f32 %v4383, %v4406
  %v4414 = vadd.f32 %v4384, %v4408
  %v4415 = vtanh.pop %v4412
  %v4416 = vtanh.pop %v4413
  %v4417 = vtanh.pop %v4414
  %4421 = vrot.lane.b32.xlu0 %v4415, 64
  %v4422 = vpop.permute.xlu0 %4421
  %4423 = vrot.lane.b32.xlu0 %v4416, 64
  %v4424 = vpop.permute.xlu0 %4423
  %4425 = vrot.lane.b32.xlu0 %v4417, 64
  %v4426 = vpop.permute.xlu0 %4425
  %v4430 = vmul.f32 %v4374, %v4422
  %v4431 = vmul.f32 %v4376, %v4424
  %v4432 = vmul.f32 %v4378, %v4426
  %4436 = vrot.lane.b32.xlu0 %v4430, 32
  %v4437 = vpop.permute.xlu0 %4436
  %4438 = vrot.lane.b32.xlu0 %v4431, 32
  %v4439 = vpop.permute.xlu0 %4438
  %4440 = vrot.lane.b32.xlu0 %v4432, 32
  %v4441 = vpop.permute.xlu0 %4440
  %v4442 = vsel %vm3595, %v4437, 0
  %v4444 = vsel %vm3595, %v4439, 0
  %v4446 = vsel %vm3595, %v4441, 0
  %4448 = vmatprep.subr.mxu0 0.0
  %4449 = vmatpush1.msra.mxu0 %v3591
  %4450 = vmatprep.subr.mxu0 0.0
  %4451 = vmatpush1.msra.mxu0 %v3592
  %4452 = vmatprep.subr.mxu0 0.0
  %4453 = vmatpush1.msra.mxu0 %v3593
  %4454 = vmatprep.subr.mxu0 0.0
  %4455 = vmatpush1.msra.mxu0 %v3594
  %4456 = vmatprep.subr.mxu0 0.0
  %4457 = vmatpush1.msra.mxu0 0.0
  %4458 = vmatprep.subr.mxu0 0.0
  %4459 = vmatpush1.msra.mxu0 0.0
  %4460 = vmatprep.subr.mxu0 0.0
  %4461 = vmatpush1.msra.mxu0 0.0
  %4462 = vmatprep.subr.mxu0 0.0
  %4463 = vmatpush1.msra.mxu0 0.0
  %4464 = vmatprep.subr.mxu0 0.0
  %4465 = vmatpush1.msra.mxu0 0.0
  %4466 = vmatprep.subr.mxu0 0.0
  %4467 = vmatpush1.msra.mxu0 0.0
  %4468 = vmatprep.subr.mxu0 0.0
  %4469 = vmatpush1.msra.mxu0 0.0
  %4470 = vmatprep.subr.mxu0 0.0
  %4471 = vmatpush1.msra.mxu0 0.0
  %4472 = vmatprep.subr.mxu0 0.0
  %4473 = vmatpush1.msra.mxu0 0.0
  %4474 = vmatprep.subr.mxu0 0.0
  %4475 = vmatpush1.msra.mxu0 0.0
  %4476 = vmatprep.subr.mxu0 0.0
  %4477 = vmatpush1.msra.mxu0 0.0
  %4478 = vmatprep.subr.mxu0 0.0
  %4479 = vmatpush1.msra.mxu0 0.0
  %4480 = vmatprep.subr.mxu0 0.0
  %4481 = vmatpush1.msra.mxu0 0.0
  %4482 = vmatprep.subr.mxu0 0.0
  %4483 = vmatpush1.msra.mxu0 0.0
  %4484 = vmatprep.subr.mxu0 0.0
  %4485 = vmatpush1.msra.mxu0 0.0
  %4486 = vmatprep.subr.mxu0 0.0
  %4487 = vmatpush1.msra.mxu0 0.0
  %4488 = vmatprep.subr.mxu0 0.0
  %4489 = vmatpush1.msra.mxu0 0.0
  %4490 = vmatprep.subr.mxu0 0.0
  %4491 = vmatpush1.msra.mxu0 0.0
  %4492 = vmatprep.subr.mxu0 0.0
  %4493 = vmatpush1.msra.mxu0 0.0
  %4494 = vmatprep.subr.mxu0 0.0
  %4495 = vmatpush1.msra.mxu0 0.0
  %4496 = vmatprep.subr.mxu0 0.0
  %4497 = vmatpush1.msra.mxu0 0.0
  %4498 = vmatprep.subr.mxu0 0.0
  %4499 = vmatpush1.msra.mxu0 0.0
  %4500 = vmatprep.subr.mxu0 0.0
  %4501 = vmatpush1.msra.mxu0 0.0
  %4502 = vmatprep.subr.mxu0 0.0
  %4503 = vmatpush1.msra.mxu0 0.0
  %4504 = vmatprep.subr.mxu0 0.0
  %4505 = vmatpush1.msra.mxu0 0.0
  %4506 = vmatprep.subr.mxu0 0.0
  %4507 = vmatpush1.msra.mxu0 0.0
  %4508 = vmatprep.subr.mxu0 0.0
  %4509 = vmatpush1.msra.mxu0 0.0
  %4510 = vmatprep.subr.mxu0 0.0
  %4511 = vmatpush1.msra.mxu0 0.0
  %4512 = vmatprep.mubr.f32.mxu0 0.0
  %4513 = vmatmul.mubr.f32.gmra.mrb[0].mxu0 %v4442
  %v4514 = vpop.f32.mrb[0].mxu0
  %v4515 = vadd.f32 0.0, %v4514
  %v4516 = vpop.f32.mrb[0].mxu0
  %4517 = vmatprep.mubr.f32.mxu0 0.0
  %4518 = vmatmul.mubr.f32.gmra.mrb[0].mxu0 %v4444
  %v4519 = vpop.f32.mrb[0].mxu0
  %v4520 = vadd.f32 0.0, %v4519
  %v4521 = vpop.f32.mrb[0].mxu0
  %4522 = vmatprep.mubr.f32.mxu0 0.0
  %4523 = vmatmul.mubr.f32.gmra.mrb[0].mxu0 %v4446
  %v4524 = vpop.f32.mrb[0].mxu0
  %v4525 = vadd.f32 0.0, %v4524
  %v4526 = vpop.f32.mrb[0].mxu0
  %4527 = vdwg.mxu0
  %v4528 = vadd.f32 %v3563, %v4515
  %v4529 = vadd.f32 %v3568, %v4520
  %v4530 = vadd.f32 %v3573, %v4525
  %v4531 = vxor.u32 %v4528, 2147483648
  %v4532 = vxor.u32 %v4529, 2147483648
  %v4533 = vxor.u32 %v4530, 2147483648
  %v4534 = vmul.f32 %v4531, 1.442695
  %v4535 = vpow.pop %v4534
  %v4536 = vmul.f32 %v4532, 1.442695
  %v4537 = vpow.pop %v4536
  %v4538 = vmul.f32 %v4533, 1.442695
  %v4539 = vpow.pop %v4538
  %v4540 = vadd.f32 %v4535, 1.0
  %v4541 = vadd.f32 %v4537, 1.0
  %v4542 = vadd.f32 %v4539, 1.0
  %v4543 = vrcp.pop %v4540
  %v4544 = vmul.f32 1.0, %v4543
  %v4545 = vrcp.pop %v4541
  %v4546 = vmul.f32 1.0, %v4545
  %v4547 = vrcp.pop %v4542
  %v4548 = vmul.f32 1.0, %v4547
  %v4549 = vtanh.pop %v4528
  %v4550 = vtanh.pop %v4529
  %v4551 = vtanh.pop %v4530
  %v4552 = vmul.f32 %v4544, %v4412
  %v4553 = vmul.f32 %v4546, %v4413
  %v4554 = vmul.f32 %v4548, %v4414
  %4558 = vrot.lane.b32.xlu0 %v4549, 64
  %v4559 = vpop.permute.xlu0 %4558
  %4560 = vrot.lane.b32.xlu0 %v4550, 64
  %v4561 = vpop.permute.xlu0 %4560
  %4562 = vrot.lane.b32.xlu0 %v4551, 64
  %v4563 = vpop.permute.xlu0 %4562
  %v4567 = vmul.f32 %v4544, %v4559
  %v4568 = vmul.f32 %v4546, %v4561
  %v4569 = vmul.f32 %v4548, %v4563
  %4573 = vrot.lane.b32.xlu0 %v4567, 32
  %v4574 = vpop.permute.xlu0 %4573
  %4575 = vrot.lane.b32.xlu0 %v4568, 32
  %v4576 = vpop.permute.xlu0 %4575
  %4577 = vrot.lane.b32.xlu0 %v4569, 32
  %v4578 = vpop.permute.xlu0 %4577
  %v4582 = vadd.f32 %v4552, %v4574
  %v4583 = vadd.f32 %v4553, %v4576
  %v4584 = vadd.f32 %v4554, %v4578
  %v4585 = vtanh.pop %v4582
  %v4586 = vtanh.pop %v4583
  %v4587 = vtanh.pop %v4584
  %4591 = vrot.lane.b32.xlu0 %v4585, 64
  %v4592 = vpop.permute.xlu0 %4591
  %4593 = vrot.lane.b32.xlu0 %v4586, 64
  %v4594 = vpop.permute.xlu0 %4593
  %4595 = vrot.lane.b32.xlu0 %v4587, 64
  %v4596 = vpop.permute.xlu0 %4595
  %v4600 = vmul.f32 %v4544, %v4592
  %v4601 = vmul.f32 %v4546, %v4594
  %v4602 = vmul.f32 %v4548, %v4596
  %4606 = vrot.lane.b32.xlu0 %v4600, 32
  %v4607 = vpop.permute.xlu0 %4606
  %4608 = vrot.lane.b32.xlu0 %v4601, 32
  %v4609 = vpop.permute.xlu0 %4608
  %4610 = vrot.lane.b32.xlu0 %v4602, 32
  %v4611 = vpop.permute.xlu0 %4610
  %v4612 = vsel %vm3595, %v4607, 0
  %v4614 = vsel %vm3595, %v4609, 0
  %v4616 = vsel %vm3595, %v4611, 0
  %4618 = vmatprep.subr.mxu0 0.0
  %4619 = vmatpush1.msra.mxu0 %v3591
  %4620 = vmatprep.subr.mxu0 0.0
  %4621 = vmatpush1.msra.mxu0 %v3592
  %4622 = vmatprep.subr.mxu0 0.0
  %4623 = vmatpush1.msra.mxu0 %v3593
  %4624 = vmatprep.subr.mxu0 0.0
  %4625 = vmatpush1.msra.mxu0 %v3594
  %4626 = vmatprep.subr.mxu0 0.0
  %4627 = vmatpush1.msra.mxu0 0.0
  %4628 = vmatprep.subr.mxu0 0.0
  %4629 = vmatpush1.msra.mxu0 0.0
  %4630 = vmatprep.subr.mxu0 0.0
  %4631 = vmatpush1.msra.mxu0 0.0
  %4632 = vmatprep.subr.mxu0 0.0
  %4633 = vmatpush1.msra.mxu0 0.0
  %4634 = vmatprep.subr.mxu0 0.0
  %4635 = vmatpush1.msra.mxu0 0.0
  %4636 = vmatprep.subr.mxu0 0.0
  %4637 = vmatpush1.msra.mxu0 0.0
  %4638 = vmatprep.subr.mxu0 0.0
  %4639 = vmatpush1.msra.mxu0 0.0
  %4640 = vmatprep.subr.mxu0 0.0
  %4641 = vmatpush1.msra.mxu0 0.0
  %4642 = vmatprep.subr.mxu0 0.0
  %4643 = vmatpush1.msra.mxu0 0.0
  %4644 = vmatprep.subr.mxu0 0.0
  %4645 = vmatpush1.msra.mxu0 0.0
  %4646 = vmatprep.subr.mxu0 0.0
  %4647 = vmatpush1.msra.mxu0 0.0
  %4648 = vmatprep.subr.mxu0 0.0
  %4649 = vmatpush1.msra.mxu0 0.0
  %4650 = vmatprep.subr.mxu0 0.0
  %4651 = vmatpush1.msra.mxu0 0.0
  %4652 = vmatprep.subr.mxu0 0.0
  %4653 = vmatpush1.msra.mxu0 0.0
  %4654 = vmatprep.subr.mxu0 0.0
  %4655 = vmatpush1.msra.mxu0 0.0
  %4656 = vmatprep.subr.mxu0 0.0
  %4657 = vmatpush1.msra.mxu0 0.0
  %4658 = vmatprep.subr.mxu0 0.0
  %4659 = vmatpush1.msra.mxu0 0.0
  %4660 = vmatprep.subr.mxu0 0.0
  %4661 = vmatpush1.msra.mxu0 0.0
  %4662 = vmatprep.subr.mxu0 0.0
  %4663 = vmatpush1.msra.mxu0 0.0
  %4664 = vmatprep.subr.mxu0 0.0
  %4665 = vmatpush1.msra.mxu0 0.0
  %4666 = vmatprep.subr.mxu0 0.0
  %4667 = vmatpush1.msra.mxu0 0.0
  %4668 = vmatprep.subr.mxu0 0.0
  %4669 = vmatpush1.msra.mxu0 0.0
  %4670 = vmatprep.subr.mxu0 0.0
  %4671 = vmatpush1.msra.mxu0 0.0
  %4672 = vmatprep.subr.mxu0 0.0
  %4673 = vmatpush1.msra.mxu0 0.0
  %4674 = vmatprep.subr.mxu0 0.0
  %4675 = vmatpush1.msra.mxu0 0.0
  %4676 = vmatprep.subr.mxu0 0.0
  %4677 = vmatpush1.msra.mxu0 0.0
  %4678 = vmatprep.subr.mxu0 0.0
  %4679 = vmatpush1.msra.mxu0 0.0
  %4680 = vmatprep.subr.mxu0 0.0
  %4681 = vmatpush1.msra.mxu0 0.0
  %4682 = vmatprep.mubr.f32.mxu0 0.0
  %4683 = vmatmul.mubr.f32.gmra.mrb[0].mxu0 %v4612
  %v4684 = vpop.f32.mrb[0].mxu0
  %v4685 = vadd.f32 0.0, %v4684
  %v4686 = vpop.f32.mrb[0].mxu0
  %4687 = vmatprep.mubr.f32.mxu0 0.0
  %4688 = vmatmul.mubr.f32.gmra.mrb[0].mxu0 %v4614
  %v4689 = vpop.f32.mrb[0].mxu0
  %v4690 = vadd.f32 0.0, %v4689
  %v4691 = vpop.f32.mrb[0].mxu0
  %4692 = vmatprep.mubr.f32.mxu0 0.0
  %4693 = vmatmul.mubr.f32.gmra.mrb[0].mxu0 %v4616
  %v4694 = vpop.f32.mrb[0].mxu0
  %v4695 = vadd.f32 0.0, %v4694
  %v4696 = vpop.f32.mrb[0].mxu0
  %4697 = vdwg.mxu0
  %v4698 = vadd.f32 %v3578, %v4685
  %v4699 = vadd.f32 %v3583, %v4690
  %v4700 = vadd.f32 %v3588, %v4695
  %v4701 = vxor.u32 %v4698, 2147483648
  %v4702 = vxor.u32 %v4699, 2147483648
  %v4703 = vxor.u32 %v4700, 2147483648
  %v4704 = vmul.f32 %v4701, 1.442695
  %v4705 = vpow.pop %v4704
  %v4706 = vmul.f32 %v4702, 1.442695
  %v4707 = vpow.pop %v4706
  %v4708 = vmul.f32 %v4703, 1.442695
  %v4709 = vpow.pop %v4708
  %v4710 = vadd.f32 %v4705, 1.0
  %v4711 = vadd.f32 %v4707, 1.0
  %v4712 = vadd.f32 %v4709, 1.0
  %v4713 = vrcp.pop %v4710
  %v4714 = vmul.f32 1.0, %v4713
  %v4715 = vrcp.pop %v4711
  %v4716 = vmul.f32 1.0, %v4715
  %v4717 = vrcp.pop %v4712
  %v4718 = vmul.f32 1.0, %v4717
  %v4719 = vtanh.pop %v4698
  %v4720 = vtanh.pop %v4699
  %v4721 = vtanh.pop %v4700
  %v4722 = vmul.f32 %v4714, %v4582
  %v4723 = vmul.f32 %v4716, %v4583
  %v4724 = vmul.f32 %v4718, %v4584
  %4728 = vrot.lane.b32.xlu0 %v4719, 64
  %v4729 = vpop.permute.xlu0 %4728
  %4730 = vrot.lane.b32.xlu0 %v4720, 64
  %v4731 = vpop.permute.xlu0 %4730
  %4732 = vrot.lane.b32.xlu0 %v4721, 64
  %v4733 = vpop.permute.xlu0 %4732
  %v4737 = vmul.f32 %v4714, %v4729
  %v4738 = vmul.f32 %v4716, %v4731
  %v4739 = vmul.f32 %v4718, %v4733
  %4743 = vrot.lane.b32.xlu0 %v4737, 32
  %v4744 = vpop.permute.xlu0 %4743
  %4745 = vrot.lane.b32.xlu0 %v4738, 32
  %v4746 = vpop.permute.xlu0 %4745
  %4747 = vrot.lane.b32.xlu0 %v4739, 32
  %v4748 = vpop.permute.xlu0 %4747
  %v4752 = vadd.f32 %v4722, %v4744
  %v4753 = vadd.f32 %v4723, %v4746
  %v4754 = vadd.f32 %v4724, %v4748
  %v4755 = vtanh.pop %v4752
  %v4756 = vtanh.pop %v4753
  %v4757 = vtanh.pop %v4754
  %4761 = vrot.lane.b32.xlu0 %v4755, 64
  %v4762 = vpop.permute.xlu0 %4761
  %4763 = vrot.lane.b32.xlu0 %v4756, 64
  %v4764 = vpop.permute.xlu0 %4763
  %4765 = vrot.lane.b32.xlu0 %v4757, 64
  %v4766 = vpop.permute.xlu0 %4765
  %v4770 = vmul.f32 %v4714, %v4762
  %v4771 = vmul.f32 %v4716, %v4764
  %v4772 = vmul.f32 %v4718, %v4766
  %v4773 = vld [vmem:[%s13] sm:$0xff]
  %v4774 = vld [vmem:[%s13 + $0x8] sm:$0xff]
  %v4775 = vld [vmem:[%s13 + $0x10] sm:$0xff]
  %v4776 = vld [vmem:[%s13 + $0x18] sm:$0xff]
  %4780 = vrot.lane.b32.xlu0 %v4770, 32
  %v4781 = vpop.permute.xlu0 %4780
  %4782 = vrot.lane.b32.xlu0 %v4771, 32
  %v4783 = vpop.permute.xlu0 %4782
  %4784 = vrot.lane.b32.xlu0 %v4772, 32
  %v4785 = vpop.permute.xlu0 %4784
  %v4786 = vsel %vm3595, %v4781, 0
  %v4788 = vsel %vm3595, %v4783, 0
  %v4790 = vsel %vm3595, %v4785, 0
  %4792 = vmatprep.subr.mxu0 0.0
  %4793 = vmatpush1.msra.mxu0 %v4773
  %4794 = vmatprep.subr.mxu0 0.0
  %4795 = vmatpush1.msra.mxu0 %v4774
  %4796 = vmatprep.subr.mxu0 0.0
  %4797 = vmatpush1.msra.mxu0 %v4775
  %4798 = vmatprep.subr.mxu0 0.0
  %4799 = vmatpush1.msra.mxu0 %v4776
  %4800 = vmatprep.subr.mxu0 0.0
  %4801 = vmatpush1.msra.mxu0 0.0
  %4802 = vmatprep.subr.mxu0 0.0
  %4803 = vmatpush1.msra.mxu0 0.0
  %4804 = vmatprep.subr.mxu0 0.0
  %4805 = vmatpush1.msra.mxu0 0.0
  %4806 = vmatprep.subr.mxu0 0.0
  %4807 = vmatpush1.msra.mxu0 0.0
  %4808 = vmatprep.subr.mxu0 0.0
  %4809 = vmatpush1.msra.mxu0 0.0
  %4810 = vmatprep.subr.mxu0 0.0
  %4811 = vmatpush1.msra.mxu0 0.0
  %4812 = vmatprep.subr.mxu0 0.0
  %4813 = vmatpush1.msra.mxu0 0.0
  %4814 = vmatprep.subr.mxu0 0.0
  %4815 = vmatpush1.msra.mxu0 0.0
  %4816 = vmatprep.subr.mxu0 0.0
  %4817 = vmatpush1.msra.mxu0 0.0
  %4818 = vmatprep.subr.mxu0 0.0
  %4819 = vmatpush1.msra.mxu0 0.0
  %4820 = vmatprep.subr.mxu0 0.0
  %4821 = vmatpush1.msra.mxu0 0.0
  %4822 = vmatprep.subr.mxu0 0.0
  %4823 = vmatpush1.msra.mxu0 0.0
  %4824 = vmatprep.subr.mxu0 0.0
  %4825 = vmatpush1.msra.mxu0 0.0
  %4826 = vmatprep.subr.mxu0 0.0
  %4827 = vmatpush1.msra.mxu0 0.0
  %4828 = vmatprep.subr.mxu0 0.0
  %4829 = vmatpush1.msra.mxu0 0.0
  %4830 = vmatprep.subr.mxu0 0.0
  %4831 = vmatpush1.msra.mxu0 0.0
  %4832 = vmatprep.subr.mxu0 0.0
  %4833 = vmatpush1.msra.mxu0 0.0
  %4834 = vmatprep.subr.mxu0 0.0
  %4835 = vmatpush1.msra.mxu0 0.0
  %4836 = vmatprep.subr.mxu0 0.0
  %4837 = vmatpush1.msra.mxu0 0.0
  %4838 = vmatprep.subr.mxu0 0.0
  %4839 = vmatpush1.msra.mxu0 0.0
  %4840 = vmatprep.subr.mxu0 0.0
  %4841 = vmatpush1.msra.mxu0 0.0
  %4842 = vmatprep.subr.mxu0 0.0
  %4843 = vmatpush1.msra.mxu0 0.0
  %4844 = vmatprep.subr.mxu0 0.0
  %4845 = vmatpush1.msra.mxu0 0.0
  %4846 = vmatprep.subr.mxu0 0.0
  %4847 = vmatpush1.msra.mxu0 0.0
  %4848 = vmatprep.subr.mxu0 0.0
  %4849 = vmatpush1.msra.mxu0 0.0
  %4850 = vmatprep.subr.mxu0 0.0
  %4851 = vmatpush1.msra.mxu0 0.0
  %4852 = vmatprep.subr.mxu0 0.0
  %4853 = vmatpush1.msra.mxu0 0.0
  %4854 = vmatprep.subr.mxu0 0.0
  %4855 = vmatpush1.msra.mxu0 0.0
  %4856 = vmatprep.mubr.f32.mxu0 0.0
  %4857 = vmatmul.mubr.f32.gmra.mrb[0].mxu0 %v3762
  %v4858 = vpop.f32.mrb[0].mxu0
  %v4859 = vadd.f32 0.0, %v4858
  %v4860 = vpop.f32.mrb[0].mxu0
  %4861 = vmatprep.mubr.f32.mxu0 0.0
  %4862 = vmatmul.mubr.f32.gmra.mrb[0].mxu0 %v3764
  %v4863 = vpop.f32.mrb[0].mxu0
  %v4864 = vadd.f32 0.0, %v4863
  %v4865 = vpop.f32.mrb[0].mxu0
  %4866 = vmatprep.mubr.f32.mxu0 0.0
  %4867 = vmatmul.mubr.f32.gmra.mrb[0].mxu0 %v3766
  %v4868 = vpop.f32.mrb[0].mxu0
  %v4869 = vadd.f32 0.0, %v4868
  %v4870 = vpop.f32.mrb[0].mxu0
  %4871 = vmatprep.mubr.f32.mxu0 0.0
  %4872 = vmatmul.mubr.f32.gmra.mrb[0].mxu0 %v3932
  %v4873 = vpop.f32.mrb[0].mxu0
  %v4874 = vadd.f32 0.0, %v4873
  %v4875 = vpop.f32.mrb[0].mxu0
  %4876 = vmatprep.mubr.f32.mxu0 0.0
  %4877 = vmatmul.mubr.f32.gmra.mrb[0].mxu0 %v3934
  %v4878 = vpop.f32.mrb[0].mxu0
  %v4879 = vadd.f32 0.0, %v4878
  %v4880 = vpop.f32.mrb[0].mxu0
  %4881 = vmatprep.mubr.f32.mxu0 0.0
  %4882 = vmatmul.mubr.f32.gmra.mrb[0].mxu0 %v3936
  %v4883 = vpop.f32.mrb[0].mxu0
  %v4884 = vadd.f32 0.0, %v4883
  %v4885 = vpop.f32.mrb[0].mxu0
  %4886 = vmatprep.mubr.f32.mxu0 0.0
  %4887 = vmatmul.mubr.f32.gmra.mrb[0].mxu0 %v4102
  %v4888 = vpop.f32.mrb[0].mxu0
  %v4889 = vadd.f32 0.0, %v4888
  %v4890 = vpop.f32.mrb[0].mxu0
  %4891 = vmatprep.mubr.f32.mxu0 0.0
  %4892 = vmatmul.mubr.f32.gmra.mrb[0].mxu0 %v4104
  %v4893 = vpop.f32.mrb[0].mxu0
  %v4894 = vadd.f32 0.0, %v4893
  %v4895 = vpop.f32.mrb[0].mxu0
  %4896 = vmatprep.mubr.f32.mxu0 0.0
  %4897 = vmatmul.mubr.f32.gmra.mrb[0].mxu0 %v4106
  %v4898 = vpop.f32.mrb[0].mxu0
  %v4899 = vadd.f32 0.0, %v4898
  %v4900 = vpop.f32.mrb[0].mxu0
  %4901 = vmatprep.mubr.f32.mxu0 0.0
  %4902 = vmatmul.mubr.f32.gmra.mrb[0].mxu0 %v4272
  %v4903 = vpop.f32.mrb[0].mxu0
  %v4904 = vadd.f32 0.0, %v4903
  %v4905 = vpop.f32.mrb[0].mxu0
  %4906 = vmatprep.mubr.f32.mxu0 0.0
  %4907 = vmatmul.mubr.f32.gmra.mrb[0].mxu0 %v4274
  %v4908 = vpop.f32.mrb[0].mxu0
  %v4909 = vadd.f32 0.0, %v4908
  %v4910 = vpop.f32.mrb[0].mxu0
  %4911 = vmatprep.mubr.f32.mxu0 0.0
  %4912 = vmatmul.mubr.f32.gmra.mrb[0].mxu0 %v4276
  %v4913 = vpop.f32.mrb[0].mxu0
  %v4914 = vadd.f32 0.0, %v4913
  %v4915 = vpop.f32.mrb[0].mxu0
  %4916 = vmatprep.mubr.f32.mxu0 0.0
  %4917 = vmatmul.mubr.f32.gmra.mrb[0].mxu0 %v4442
  %v4918 = vpop.f32.mrb[0].mxu0
  %v4919 = vadd.f32 0.0, %v4918
  %v4920 = vpop.f32.mrb[0].mxu0
  %4921 = vmatprep.mubr.f32.mxu0 0.0
  %4922 = vmatmul.mubr.f32.gmra.mrb[0].mxu0 %v4444
  %v4923 = vpop.f32.mrb[0].mxu0
  %v4924 = vadd.f32 0.0, %v4923
  %v4925 = vpop.f32.mrb[0].mxu0
  %4926 = vmatprep.mubr.f32.mxu0 0.0
  %4927 = vmatmul.mubr.f32.gmra.mrb[0].mxu0 %v4446
  %v4928 = vpop.f32.mrb[0].mxu0
  %v4929 = vadd.f32 0.0, %v4928
  %v4930 = vpop.f32.mrb[0].mxu0
  %4931 = vmatprep.mubr.f32.mxu0 0.0
  %4932 = vmatmul.mubr.f32.gmra.mrb[0].mxu0 %v4612
  %v4933 = vpop.f32.mrb[0].mxu0
  %v4934 = vadd.f32 0.0, %v4933
  %v4935 = vpop.f32.mrb[0].mxu0
  %4936 = vmatprep.mubr.f32.mxu0 0.0
  %4937 = vmatmul.mubr.f32.gmra.mrb[0].mxu0 %v4614
  %v4938 = vpop.f32.mrb[0].mxu0
  %v4939 = vadd.f32 0.0, %v4938
  %v4940 = vpop.f32.mrb[0].mxu0
  %4941 = vmatprep.mubr.f32.mxu0 0.0
  %4942 = vmatmul.mubr.f32.gmra.mrb[0].mxu0 %v4616
  %v4943 = vpop.f32.mrb[0].mxu0
  %v4944 = vadd.f32 0.0, %v4943
  %v4945 = vpop.f32.mrb[0].mxu0
  %4946 = vmatprep.mubr.f32.mxu0 0.0
  %4947 = vmatmul.mubr.f32.gmra.mrb[0].mxu0 %v4786
  %v4948 = vpop.f32.mrb[0].mxu0
  %v4949 = vadd.f32 0.0, %v4948
  %v4950 = vpop.f32.mrb[0].mxu0
  %4951 = vmatprep.mubr.f32.mxu0 0.0
  %4952 = vmatmul.mubr.f32.gmra.mrb[0].mxu0 %v4788
  %v4953 = vpop.f32.mrb[0].mxu0
  %v4954 = vadd.f32 0.0, %v4953
  %v4955 = vpop.f32.mrb[0].mxu0
  %4956 = vmatprep.mubr.f32.mxu0 0.0
  %4957 = vmatmul.mubr.f32.gmra.mrb[0].mxu0 %v4790
  %v4958 = vpop.f32.mrb[0].mxu0
  %v4959 = vadd.f32 0.0, %v4958
  %v4960 = vpop.f32.mrb[0].mxu0
  %4961 = vdwg.mxu0
  %4983 = vrot.lane.b32.xlu0 %v4949, 120
  %v4984 = vpop.permute.xlu0 %4983
  %4985 = vrot.lane.b32.xlu0 %v4954, 120
  %v4986 = vpop.permute.xlu0 %4985
  %4987 = vrot.lane.b32.xlu0 %v4959, 120
  %v4988 = vpop.permute.xlu0 %4987
  %4989 = vrot.lane.b32.xlu0 %v4934, 120
  %v4990 = vpop.permute.xlu0 %4989
  %4991 = vrot.lane.b32.xlu0 %v4939, 120
  %v4992 = vpop.permute.xlu0 %4991
  %4993 = vrot.lane.b32.xlu0 %v4944, 120
  %v4994 = vpop.permute.xlu0 %4993
  %4995 = vrot.lane.b32.xlu0 %v4919, 120
  %v4996 = vpop.permute.xlu0 %4995
  %4997 = vrot.lane.b32.xlu0 %v4924, 120
  %v4998 = vpop.permute.xlu0 %4997
  %4999 = vrot.lane.b32.xlu0 %v4929, 120
  %v5000 = vpop.permute.xlu0 %4999
  %5001 = vrot.lane.b32.xlu0 %v4904, 120
  %v5002 = vpop.permute.xlu0 %5001
  %5003 = vrot.lane.b32.xlu0 %v4909, 120
  %v5004 = vpop.permute.xlu0 %5003
  %5005 = vrot.lane.b32.xlu0 %v4914, 120
  %v5006 = vpop.permute.xlu0 %5005
  %5007 = vrot.lane.b32.xlu0 %v4889, 120
  %v5008 = vpop.permute.xlu0 %5007
  %5009 = vrot.lane.b32.xlu0 %v4894, 120
  %v5010 = vpop.permute.xlu0 %5009
  %5011 = vrot.lane.b32.xlu0 %v4899, 120
  %v5012 = vpop.permute.xlu0 %5011
  %5013 = vrot.lane.b32.xlu0 %v4874, 120
  %v5014 = vpop.permute.xlu0 %5013
  %5015 = vrot.lane.b32.xlu0 %v4879, 120
  %v5016 = vpop.permute.xlu0 %5015
  %5017 = vrot.lane.b32.xlu0 %v4884, 120
  %v5018 = vpop.permute.xlu0 %5017
  %5019 = vrot.lane.b32.xlu0 %v4859, 120
  %v5020 = vpop.permute.xlu0 %5019
  %5021 = vrot.lane.b32.xlu0 %v4864, 120
  %v5022 = vpop.permute.xlu0 %5021
  %5023 = vrot.lane.b32.xlu0 %v4869, 120
  %v5024 = vpop.permute.xlu0 %5023
  %v5046 = vadd.f32 %v4859, %v4984
  %v5047 = vadd.f32 %v4864, %v4986
  %v5048 = vadd.f32 %v4869, %v4988
  %v5049 = vadd.f32 %v4874, %v4990
  %v5050 = vadd.f32 %v4879, %v4992
  %v5051 = vadd.f32 %v4884, %v4994
  %v5052 = vadd.f32 %v4889, %v4996
  %v5053 = vadd.f32 %v4894, %v4998
  %v5054 = vadd.f32 %v4899, %v5000
  %v5055 = vadd.f32 %v4904, %v5002
  %v5056 = vadd.f32 %v4909, %v5004
  %v5057 = vadd.f32 %v4914, %v5006
  %v5058 = vadd.f32 %v4919, %v5008
  %v5059 = vadd.f32 %v4924, %v5010
  %v5060 = vadd.f32 %v4929, %v5012
  %v5061 = vadd.f32 %v4934, %v5014
  %v5062 = vadd.f32 %v4939, %v5016
  %v5063 = vadd.f32 %v4944, %v5018
  %v5064 = vadd.f32 %v4949, %v5020
  %v5065 = vadd.f32 %v4954, %v5022
  %v5066 = vadd.f32 %v4959, %v5024
  %v5067 = vld [vmem:[%s14] sm:$0x1]
  %v5069 = vlaneseq
  %v5070 = vshrl.u32 %v5069, 7
  %v5071 = vsub.s32 0, %v5070
  %v5072 = vrot.slane %v5067, %v5071
  %v5074 = vadd.f32 %v5046, %v5072
  %v5075 = vadd.f32 %v5047, %v5072
  %v5076 = vadd.f32 %v5048, %v5072
  %v5077 = vadd.f32 %v5049, %v5072
  %v5078 = vadd.f32 %v5050, %v5072
  %v5079 = vadd.f32 %v5051, %v5072
  %v5080 = vadd.f32 %v5052, %v5072
  %v5081 = vadd.f32 %v5053, %v5072
  %v5082 = vadd.f32 %v5054, %v5072
  %v5083 = vadd.f32 %v5055, %v5072
  %v5084 = vadd.f32 %v5056, %v5072
  %v5085 = vadd.f32 %v5057, %v5072
  %v5086 = vadd.f32 %v5058, %v5072
  %v5087 = vadd.f32 %v5059, %v5072
  %v5088 = vadd.f32 %v5060, %v5072
  %v5089 = vadd.f32 %v5061, %v5072
  %v5090 = vadd.f32 %v5062, %v5072
  %v5091 = vadd.f32 %v5063, %v5072
  %v5092 = vadd.f32 %v5064, %v5072
  %v5093 = vadd.f32 %v5065, %v5072
  %v5094 = vadd.f32 %v5066, %v5072
  %v5095 = vadd.f32 %v2596, %v5074
  %v5096 = vadd.f32 %v2901, %v5075
  %v5097 = vadd.f32 %v2624, %v5076
  %v5098 = vadd.f32 %v2640, %v5077
  %v5099 = vadd.f32 %v2902, %v5078
  %v5100 = vadd.f32 %v2681, %v5079
  %v5101 = vadd.f32 %v2697, %v5080
  %v5102 = vadd.f32 %v2903, %v5081
  %v5103 = vadd.f32 %v2726, %v5082
  %v5104 = vadd.f32 %v2735, %v5083
  %v5105 = vadd.f32 %v2904, %v5084
  %v5106 = vadd.f32 %v2761, %v5085
  %v5107 = vadd.f32 %v2777, %v5086
  %v5108 = vadd.f32 %v2905, %v5087
  %v5109 = vadd.f32 %v2807, %v5088
  %v5110 = vadd.f32 %v2823, %v5089
  %v5111 = vadd.f32 %v2906, %v5090
  %v5112 = vadd.f32 %v2852, %v5091
  %v5113 = vadd.f32 %v2868, %v5092
  %v5114 = vadd.f32 %v2907, %v5093
  %v5115 = vadd.f32 %v2897, %v5094
  %5116 = vst.msk [vmem:[%s15] sm:$0xff] %vm74, %v5095
  %5117 = vst.msk [vmem:[%s15 + $0x8] sm:$0xff] %vm74, %v5096
  %5118 = vst.msk [vmem:[%s15 + $0x10] sm:$0xff] %vm74, %v5097
  %5119 = vst.msk [vmem:[%s15 + $0x18] sm:$0xff] %vm74, %v5098
  %5120 = vst.msk [vmem:[%s15 + $0x20] sm:$0xff] %vm74, %v5099
  %5121 = vst.msk [vmem:[%s15 + $0x28] sm:$0xff] %vm74, %v5100
  %5122 = vst.msk [vmem:[%s15 + $0x30] sm:$0xff] %vm74, %v5101
  %5123 = vst.msk [vmem:[%s15 + $0x38] sm:$0xff] %vm74, %v5102
  %5124 = vst.msk [vmem:[%s15 + $0x40] sm:$0xff] %vm74, %v5103
  %5125 = vst.msk [vmem:[%s15 + $0x48] sm:$0xff] %vm74, %v5104
  %5126 = vst.msk [vmem:[%s15 + $0x50] sm:$0xff] %vm74, %v5105
  %5127 = vst.msk [vmem:[%s15 + $0x58] sm:$0xff] %vm74, %v5106
  %5128 = vst.msk [vmem:[%s15 + $0x60] sm:$0xff] %vm74, %v5107
  %5129 = vst.msk [vmem:[%s15 + $0x68] sm:$0xff] %vm74, %v5108
  %5130 = vst.msk [vmem:[%s15 + $0x70] sm:$0xff] %vm74, %v5109
  %5131 = vst.msk [vmem:[%s15 + $0x78] sm:$0xff] %vm74, %v5110
  %5132 = vst.msk [vmem:[%s15 + $0x80] sm:$0xff] %vm74, %v5111
  %5133 = vst.msk [vmem:[%s15 + $0x88] sm:$0xff] %vm74, %v5112
  %5134 = vst.msk [vmem:[%s15 + $0x90] sm:$0xff] %vm74, %v5113
  %5135 = vst.msk [vmem:[%s15 + $0x98] sm:$0xff] %vm74, %v5114
  %5136 = vst.msk [vmem:[%s15 + $0xa0] sm:$0xff] %vm74, %v5115
  // Predicated region
  $region62: #{bsnet_forward.1} parent=0 // pred_check
    _
  $region63: #{bsnet_forward.1} parent=0 // pred_check_branch
    %5138 = sbr.rel (0) target = $region65
  $region64: #{bsnet_forward.1} parent=0 // pred_region
    _
  $region65: #{bsnet_forward.1} parent=0 // pred_fallthru
    _
  // Predicated region
  $region66: #{bsnet_forward.1} parent=0 // pred_check
    _
  $region67: #{bsnet_forward.1} parent=0 // pred_check_branch
    %5140 = sbr.rel (0) target = $region69
  $region68: #{bsnet_forward.1} parent=0 // pred_region
    _
  $region69: #{bsnet_forward.1} parent=0 // pred_fallthru
    _

</llo_original>
